<compile_context>
chip_gen: v5e
topology: v5e:2x2
jax: 0.10.0
libtpu: 0.0.40
codegen_flags: <defaults>
</compile_context>

<pallas_src>
import functools

import jax
import jax.numpy as jnp
from jax import lax
from jax.experimental import pallas as pl
from jax.experimental.pallas import tpu as pltpu


# --------------------- shared math (kernel body + reference) ------------------

def _layernorm(x, gamma, beta, eps=1e-12):
    mu = jnp.mean(x, axis=-1, keepdims=True)
    xc = x - mu
    var = jnp.mean(xc * xc, axis=-1, keepdims=True)
    return xc * lax.rsqrt(var + eps) * gamma + beta


def _gelu(x):
    # tanh-approximation GELU (EUP tanh unit)
    c = 0.7978845608028654  # sqrt(2/pi)
    return 0.5 * x * (1.0 + jnp.tanh(c * (x + 0.044715 * x * x * x)))


def _forward_math(x2, bias, cnt,
                  w_qkv, b_qkv,
                  w_o, b_o, g1, b1,
                  w_ff1, b_ff1, w_ff2, b_ff2, g2, b2,
                  w_cls, b_cls, *, seq_len, approx_recip=False):
    """Encoder + CLS pool + classifier.  Pure jnp; used both inside the Pallas
    kernel (on loaded values, approx_recip=True) and as the plain-JAX
    reference (approx_recip=False).

      x2      (M, H)     f32   embedded tokens, M = n_docs * S (flattened by wrapper)
      bias    (n, 1, S)  f32   additive attention-mask bias ((m - 1) * 1e9)
      cnt     (n, 1)     f32   number of 1s per row of cls_index
      w_qkv   (H, 3H)    bf16  fused QKV weight, 1/sqrt(H) folded into the Q block
      other weights bf16 for MXU operands; f32 biases / layernorm / classifier row
      returns (n, 1)     f32   logits
    """
    M, H = x2.shape
    S = seq_len
    n = M // S
    bf16 = jnp.bfloat16

    # fused QKV projection -- one MXU stream, f32 accumulation
    qkv = jnp.dot(x2.astype(bf16), w_qkv,
                  preferred_element_type=jnp.float32) + b_qkv        # (M, 3H)
    q = qkv[:, 0 * H:1 * H]          # lane-aligned static slices (128-wide)
    k = qkv[:, 1 * H:2 * H]
    v = qkv[:, 2 * H:3 * H]

    q3 = q.reshape(n, S, H).astype(bf16)   # attention scale already in w_qkv
    k3 = k.reshape(n, S, H).astype(bf16)
    v3 = v.reshape(n, S, H).astype(bf16)

    # batched q @ k^T without materializing a transpose (contract feature dim)
    scores = lax.dot_general(
        q3, k3, dimension_numbers=(((2,), (2,)), ((0,), (0,))),
        preferred_element_type=jnp.float32)                          # (n, S, S)
    scores = scores + bias                                           # masked keys -> -1e9
    scores = scores - jnp.max(scores, axis=-1, keepdims=True)
    p = jnp.exp(scores)
    denom = jnp.sum(p, axis=-1, keepdims=True)
    if approx_recip:
        attn = p * pl.reciprocal(denom, approx=True)                 # EUP slot
    else:
        attn = p / denom

    ctx = lax.dot_general(
        attn.astype(bf16), v3, dimension_numbers=(((2,), (1,)), ((0,), (0,))),
        preferred_element_type=jnp.float32)                          # (n, S, H)
    proj = jnp.dot(ctx.reshape(M, H).astype(bf16), w_o,
                   preferred_element_type=jnp.float32) + b_o         # (M, H)

    h = _layernorm(x2 + proj, g1, b1)                                # f32 residual

    # feed-forward
    ff = jnp.dot(h.astype(bf16), w_ff1, preferred_element_type=jnp.float32) + b_ff1
    ff = _gelu(ff)
    ff = jnp.dot(ff.astype(bf16), w_ff2, preferred_element_type=jnp.float32) + b_ff2

    out = _layernorm(h + ff, g2, b2)                                 # (M, H) f32

    # CLS pooling.  The reference list-comprehension
    #   [i for i in cls_index[indx] if i == 1]
    # gathers the *values* that equal 1 (a list of ones), so it always indexes
    # token position 1; the mean of k identical rows is that row.  The
    # cnt/cnt factor reproduces the NaN torch.mean of an empty selection
    # would produce for a cls_index row with no 1s.
    pooled = out.reshape(n, S, H)[:, 1, :] * (cnt / cnt)             # (n, H)

    # classifier as VPU multiply + lane reduce (no N=1 MXU pass)
    logits = jnp.sum(pooled * w_cls, axis=-1, keepdims=True) + b_cls  # (n, 1)
    return logits


# ------------------------------ fused Pallas kernel ---------------------------

def fused_kernel(x_ref, bias_ref, cnt_ref,
                 wqkv_ref, bqkv_ref,
                 wo_ref, bo_ref, g1_ref, b1_ref,
                 wf1_ref, bf1_ref, wf2_ref, bf2_ref, g2_ref, b2_ref,
                 wcls_ref, bcls_ref, o_ref, *, seq_len):
    o_ref[...] = _forward_math(
        x_ref[...], bias_ref[...], cnt_ref[...],
        wqkv_ref[...], bqkv_ref[...],
        wo_ref[...], bo_ref[...], g1_ref[...], b1_ref[...],
        wf1_ref[...], bf1_ref[...], wf2_ref[...], bf2_ref[...],
        g2_ref[...], b2_ref[...],
        wcls_ref[...], bcls_ref[...],
        seq_len=seq_len, approx_recip=True).astype(o_ref.dtype)


def _prepare_inputs(seq, attn_masks, cls_index, params):
    # glue: data-dependent embedding gather stays in plain JAX
    B, S = seq.shape
    H = params["pos_emb"].shape[-1]
    x = (params["word_emb"][seq] + params["pos_emb"][None, :, :]).astype(jnp.float32)
    x2 = x.reshape(B * S, H)                       # flatten in the wrapper (layout work)
    # additive attention-mask bias, hoisted out of the kernel
    bias = (attn_masks.astype(jnp.float32).reshape(B, 1, S) - 1.0) * 1e9
    cnt = jnp.sum((cls_index == 1).astype(jnp.float32), axis=-1, keepdims=True)
    return (x2, bias, cnt,
            params["w_qkv"], params["b_qkv"],
            params["w_o"], params["b_o"], params["ln1_g"], params["ln1_b"],
            params["w_ff1"], params["b_ff1"], params["w_ff2"], params["b_ff2"],
            params["ln2_g"], params["ln2_b"],
            params["w_cls"], params["b_cls"])


def document_classifier_forward(seq, attn_masks, cls_index, params, *, batch_tile=None):
    args = _prepare_inputs(seq, attn_masks, cls_index, params)
    B, S = seq.shape
    H = params["pos_emb"].shape[-1]
    F = params["w_ff1"].shape[-1]

    if batch_tile is None:
        batch_tile = B
    assert B % batch_tile == 0
    BT = batch_tile
    nb = B // BT

    vmem = pltpu.MemorySpace.VMEM

    def full_spec(shape):
        zeros = (0,) * len(shape)
        # constant block index: weight stays VMEM-resident across grid steps
        return pl.BlockSpec(shape, lambda i, _z=None, __zeros=zeros: __zeros,
                            memory_space=vmem) if False else \
               pl.BlockSpec(shape, lambda i, __zeros=zeros: __zeros, memory_space=vmem)

    # (avoid default-arg lambdas for index maps: use plain closures instead)
    def const_spec(shape):
        zeros = (0,) * len(shape)

        def idx(i):
            return zeros
        return pl.BlockSpec(shape, idx, memory_space=vmem)

    in_specs = [
        pl.BlockSpec((BT * S, H), lambda i: (i, 0), memory_space=vmem),    # x2
        pl.BlockSpec((BT, 1, S), lambda i: (i, 0, 0), memory_space=vmem),  # bias
        pl.BlockSpec((BT, 1), lambda i: (i, 0), memory_space=vmem),        # cnt
        const_spec((H, 3 * H)), const_spec((1, 3 * H)),                    # w_qkv, b_qkv
        const_spec((H, H)), const_spec((1, H)),                            # w_o, b_o
        const_spec((1, H)), const_spec((1, H)),                            # ln1 g/b
        const_spec((H, F)), const_spec((1, F)),                            # w_ff1, b_ff1
        const_spec((F, H)), const_spec((1, H)),                            # w_ff2, b_ff2
        const_spec((1, H)), const_spec((1, H)),                            # ln2 g/b
        const_spec((1, H)), const_spec((1, 1)),                            # w_cls, b_cls
    ]
    out_spec = pl.BlockSpec((BT, 1), lambda i: (i, 0), memory_space=vmem)

    # advisory cost estimate for the XLA scheduler
    flops_per_doc = (2 * S * H * 3 * H        # fused QKV
                     + 2 * S * S * H * 2      # q@k^T and attn@v
                     + 2 * S * H * H          # out proj
                     + 2 * S * H * F * 2      # FFN
                     + 2 * H)                 # classifier reduce
    cost = pl.CostEstimate(
        flops=int(B * flops_per_doc),
        transcendentals=int(B * (S * S + S * F + 2 * S)),
        bytes_accessed=int(sum(int(a.size) * a.dtype.itemsize for a in args) + B * 4),
    )

    kernel = functools.partial(fused_kernel, seq_len=S)

    return pl.pallas_call(
        kernel,
        out_shape=jax.ShapeDtypeStruct((B, 1), jnp.float32),
        grid_spec=pltpu.PrefetchScalarGridSpec(
            num_scalar_prefetch=0,
            grid=(nb,),
            in_specs=in_specs,
            out_specs=out_spec,
        ),
        compiler_params=pltpu.CompilerParams(
            dimension_semantics=("parallel",)),   # v7x: shard docs across both TCs
        cost_estimate=cost,
    )(*args)


# ------------------------------- parameter init --------------------------------

def init_params(key, H, F, vocab, S):
    keys = jax.random.split(key, 9)
    bf16 = jnp.bfloat16

    def nrm(k, shape):
        return jax.random.normal(k, shape, jnp.float32) * 0.02

    # fuse QKV into one (H, 3H) weight; fold 1/sqrt(H) attention scale into the
    # Q block (static weight pre-scale, zero runtime cost)
    scale = 1.0 / (H ** 0.5)
    w_q = nrm(keys[2], (H, H)) * scale
    w_k = nrm(keys[3], (H, H))
    w_v = nrm(keys[4], (H, H))
    w_qkv = jnp.concatenate([w_q, w_k, w_v], axis=1).astype(bf16)      # (H, 3H)
    b_qkv = jnp.zeros((1, 3 * H), jnp.float32)                         # (Q part pre-scaled too)

    return dict(
        word_emb=nrm(keys[0], (vocab, H)),
        pos_emb=nrm(keys[1], (S, H)),
        w_qkv=w_qkv, b_qkv=b_qkv,
        w_o=nrm(keys[5], (H, H)).astype(bf16), b_o=jnp.zeros((1, H), jnp.float32),
        ln1_g=jnp.ones((1, H), jnp.float32), ln1_b=jnp.zeros((1, H), jnp.float32),
        w_ff1=nrm(keys[6], (H, F)).astype(bf16), b_ff1=jnp.zeros((1, F), jnp.float32),
        w_ff2=nrm(keys[7], (F, H)).astype(bf16), b_ff2=jnp.zeros((1, H), jnp.float32),
        ln2_g=jnp.ones((1, H), jnp.float32), ln2_b=jnp.zeros((1, H), jnp.float32),
        # classifier kept as an f32 row vector: VPU multiply + lane reduce
        w_cls=nrm(keys[8], (1, H)), b_cls=jnp.zeros((1, 1), jnp.float32),
    )


# ------------------------------------ main --------------------------------------

if __name__ == "__main__":
    # H = one full 128-lane vreg, F = two; S is a sublane multiple.  B is chosen
    # so each grid step processes BT*S = 128 matmul rows (fills the MXU height)
    # and the grid has 2 parallel steps (one per v7x TensorCore).
    B, S, H, F, V = 32, 8, 128, 256, 64
    BT = 16

    key = jax.random.PRNGKey(0)
    kp, ks = jax.random.split(key)
    params = init_params(kp, H, F, V, S)

    seq = jax.random.randint(ks, (B, S), 0, V, dtype=jnp.int32)
    attn_masks = (jnp.ones((B, S), jnp.int32)
                  .at[1, S - 1].set(0).at[5, S - 2].set(0))
    cls_index = (jnp.zeros((B, S), jnp.int32)
                 .at[:, 0].set(1).at[0, 4].set(1).at[3, 2].set(1))

    logits = document_classifier_forward(seq, attn_masks, cls_index, params,
                                         batch_tile=BT)
    logits = jax.block_until_ready(logits)

    # reference: identical math traced in plain JAX (exact softmax divide)
    ref = _forward_math(*_prepare_inputs(seq, attn_masks, cls_index, params),
                        seq_len=S, approx_recip=False)

    assert logits.shape == (B, 1)
    assert jnp.allclose(logits, ref, atol=1e-2, rtol=1e-2), (logits, ref)
    print("KERNEL_OK")
</pallas_src>

<mosaic_0001>
module attributes {stable_mosaic.version = 11 : i64} {
  func.func @fused_kernel(%arg0: i32, %arg1: memref<128x128xf32, #tpu.memory_space<vmem>>, %arg2: memref<16x1x8xf32, #tpu.memory_space<vmem>>, %arg3: memref<16x1xf32, #tpu.memory_space<vmem>>, %arg4: memref<128x384xbf16, #tpu.memory_space<vmem>>, %arg5: memref<1x384xf32, #tpu.memory_space<vmem>>, %arg6: memref<128x128xbf16, #tpu.memory_space<vmem>>, %arg7: memref<1x128xf32, #tpu.memory_space<vmem>>, %arg8: memref<1x128xf32, #tpu.memory_space<vmem>>, %arg9: memref<1x128xf32, #tpu.memory_space<vmem>>, %arg10: memref<128x256xbf16, #tpu.memory_space<vmem>>, %arg11: memref<1x256xf32, #tpu.memory_space<vmem>>, %arg12: memref<256x128xbf16, #tpu.memory_space<vmem>>, %arg13: memref<1x128xf32, #tpu.memory_space<vmem>>, %arg14: memref<1x128xf32, #tpu.memory_space<vmem>>, %arg15: memref<1x128xf32, #tpu.memory_space<vmem>>, %arg16: memref<1x128xf32, #tpu.memory_space<vmem>>, %arg17: memref<1x1xf32, #tpu.memory_space<vmem>>, %arg18: memref<16x1xf32, #tpu.memory_space<vmem>>) attributes {dimension_semantics = [#tpu.dimension_semantics<parallel>], iteration_bounds = array<i64: 2>, scalar_prefetch = 0 : i64, scratch_operands = 0 : i64, tpu.core_type = #tpu.core_type<tc>, window_params = [{transform_indices = @transform_0, window_bounds = array<i64: 128, 128>}, {transform_indices = @transform_1, window_bounds = array<i64: 16, 1, 8>}, {transform_indices = @transform_2, window_bounds = array<i64: 16, 1>}, {pipeline_mode = #tpu.pipeline_mode<synchronous>, transform_indices = @transform_3, window_bounds = array<i64: 128, 384>}, {pipeline_mode = #tpu.pipeline_mode<synchronous>, transform_indices = @transform_4, window_bounds = array<i64: 1, 384>}, {pipeline_mode = #tpu.pipeline_mode<synchronous>, transform_indices = @transform_5, window_bounds = array<i64: 128, 128>}, {pipeline_mode = #tpu.pipeline_mode<synchronous>, transform_indices = @transform_6, window_bounds = array<i64: 1, 128>}, {pipeline_mode = #tpu.pipeline_mode<synchronous>, transform_indices = @transform_7, window_bounds = array<i64: 1, 128>}, {pipeline_mode = #tpu.pipeline_mode<synchronous>, transform_indices = @transform_8, window_bounds = array<i64: 1, 128>}, {pipeline_mode = #tpu.pipeline_mode<synchronous>, transform_indices = @transform_9, window_bounds = array<i64: 128, 256>}, {pipeline_mode = #tpu.pipeline_mode<synchronous>, transform_indices = @transform_10, window_bounds = array<i64: 1, 256>}, {pipeline_mode = #tpu.pipeline_mode<synchronous>, transform_indices = @transform_11, window_bounds = array<i64: 256, 128>}, {pipeline_mode = #tpu.pipeline_mode<synchronous>, transform_indices = @transform_12, window_bounds = array<i64: 1, 128>}, {pipeline_mode = #tpu.pipeline_mode<synchronous>, transform_indices = @transform_13, window_bounds = array<i64: 1, 128>}, {pipeline_mode = #tpu.pipeline_mode<synchronous>, transform_indices = @transform_14, window_bounds = array<i64: 1, 128>}, {pipeline_mode = #tpu.pipeline_mode<synchronous>, transform_indices = @transform_15, window_bounds = array<i64: 1, 128>}, {pipeline_mode = #tpu.pipeline_mode<synchronous>, transform_indices = @transform_16, window_bounds = array<i64: 1, 1>}, {transform_indices = @transform_17, window_bounds = array<i64: 16, 1>}]} {
    %c0 = arith.constant 0 : index
    %c0_0 = arith.constant 0 : index
    %0 = vector.load %arg1[%c0, %c0_0] : memref<128x128xf32, #tpu.memory_space<vmem>>, vector<128x128xf32>
    %c0_1 = arith.constant 0 : index
    %c0_2 = arith.constant 0 : index
    %c0_3 = arith.constant 0 : index
    %1 = vector.load %arg2[%c0_1, %c0_2, %c0_3] : memref<16x1x8xf32, #tpu.memory_space<vmem>>, vector<16x1x8xf32>
    %c0_4 = arith.constant 0 : index
    %c0_5 = arith.constant 0 : index
    %2 = vector.load %arg3[%c0_4, %c0_5] : memref<16x1xf32, #tpu.memory_space<vmem>>, vector<16x1xf32>
    %c0_6 = arith.constant 0 : index
    %c0_7 = arith.constant 0 : index
    %3 = vector.load %arg4[%c0_6, %c0_7] : memref<128x384xbf16, #tpu.memory_space<vmem>>, vector<128x384xbf16>
    %c0_8 = arith.constant 0 : index
    %c0_9 = arith.constant 0 : index
    %4 = vector.load %arg5[%c0_8, %c0_9] : memref<1x384xf32, #tpu.memory_space<vmem>>, vector<1x384xf32>
    %c0_10 = arith.constant 0 : index
    %c0_11 = arith.constant 0 : index
    %5 = vector.load %arg6[%c0_10, %c0_11] : memref<128x128xbf16, #tpu.memory_space<vmem>>, vector<128x128xbf16>
    %c0_12 = arith.constant 0 : index
    %c0_13 = arith.constant 0 : index
    %6 = vector.load %arg7[%c0_12, %c0_13] : memref<1x128xf32, #tpu.memory_space<vmem>>, vector<1x128xf32>
    %c0_14 = arith.constant 0 : index
    %c0_15 = arith.constant 0 : index
    %7 = vector.load %arg8[%c0_14, %c0_15] : memref<1x128xf32, #tpu.memory_space<vmem>>, vector<1x128xf32>
    %c0_16 = arith.constant 0 : index
    %c0_17 = arith.constant 0 : index
    %8 = vector.load %arg9[%c0_16, %c0_17] : memref<1x128xf32, #tpu.memory_space<vmem>>, vector<1x128xf32>
    %c0_18 = arith.constant 0 : index
    %c0_19 = arith.constant 0 : index
    %9 = vector.load %arg10[%c0_18, %c0_19] : memref<128x256xbf16, #tpu.memory_space<vmem>>, vector<128x256xbf16>
    %c0_20 = arith.constant 0 : index
    %c0_21 = arith.constant 0 : index
    %10 = vector.load %arg11[%c0_20, %c0_21] : memref<1x256xf32, #tpu.memory_space<vmem>>, vector<1x256xf32>
    %c0_22 = arith.constant 0 : index
    %c0_23 = arith.constant 0 : index
    %11 = vector.load %arg12[%c0_22, %c0_23] : memref<256x128xbf16, #tpu.memory_space<vmem>>, vector<256x128xbf16>
    %c0_24 = arith.constant 0 : index
    %c0_25 = arith.constant 0 : index
    %12 = vector.load %arg13[%c0_24, %c0_25] : memref<1x128xf32, #tpu.memory_space<vmem>>, vector<1x128xf32>
    %c0_26 = arith.constant 0 : index
    %c0_27 = arith.constant 0 : index
    %13 = vector.load %arg14[%c0_26, %c0_27] : memref<1x128xf32, #tpu.memory_space<vmem>>, vector<1x128xf32>
    %c0_28 = arith.constant 0 : index
    %c0_29 = arith.constant 0 : index
    %14 = vector.load %arg15[%c0_28, %c0_29] : memref<1x128xf32, #tpu.memory_space<vmem>>, vector<1x128xf32>
    %c0_30 = arith.constant 0 : index
    %c0_31 = arith.constant 0 : index
    %15 = vector.load %arg16[%c0_30, %c0_31] : memref<1x128xf32, #tpu.memory_space<vmem>>, vector<1x128xf32>
    %c0_32 = arith.constant 0 : index
    %c0_33 = arith.constant 0 : index
    %16 = vector.load %arg17[%c0_32, %c0_33] : memref<1x1xf32, #tpu.memory_space<vmem>>, vector<1x1xf32>
    %17 = arith.truncf %0 : vector<128x128xf32> to vector<128x128xbf16>
    %cst = arith.constant dense<0.000000e+00> : vector<128x384xf32>
    %18 = tpu.matmul %17, %3, %cst {dimension_numbers = #tpu.dot_dimension_numbers<[1], [0], [0], [1], [0, 0, 1, 1], [], []>} : vector<128x128xbf16>, vector<128x384xbf16>, vector<128x384xf32> -> vector<128x384xf32>
    %19 = vector.broadcast %4 : vector<1x384xf32> to vector<128x384xf32>
    %20 = arith.addf %18, %19 : vector<128x384xf32>
    %21 = vector.extract_strided_slice %20 {offsets = [0, 0], sizes = [128, 128], strides = [1, 1]} : vector<128x384xf32> to vector<128x128xf32>
    %22 = vector.extract_strided_slice %20 {offsets = [0, 128], sizes = [128, 128], strides = [1, 1]} : vector<128x384xf32> to vector<128x128xf32>
    %23 = vector.extract_strided_slice %20 {offsets = [0, 256], sizes = [128, 128], strides = [1, 1]} : vector<128x384xf32> to vector<128x128xf32>
    %24 = vector.shape_cast %21 : vector<128x128xf32> to vector<16x8x128xf32>
    %25 = arith.truncf %24 : vector<16x8x128xf32> to vector<16x8x128xbf16>
    %26 = vector.shape_cast %22 : vector<128x128xf32> to vector<16x8x128xf32>
    %27 = arith.truncf %26 : vector<16x8x128xf32> to vector<16x8x128xbf16>
    %28 = vector.shape_cast %23 : vector<128x128xf32> to vector<16x8x128xf32>
    %29 = arith.truncf %28 : vector<16x8x128xf32> to vector<16x8x128xbf16>
    %cst_34 = arith.constant dense<0.000000e+00> : vector<16x8x8xf32>
    %30 = tpu.matmul %25, %27, %cst_34 {dimension_numbers = #tpu.dot_dimension_numbers<[2], [2], [1], [1], [0, 0, 0, 1, 1, 1], [0], [0]>} : vector<16x8x128xbf16>, vector<16x8x128xbf16>, vector<16x8x8xf32> -> vector<16x8x8xf32>
    %31 = vector.broadcast %1 : vector<16x1x8xf32> to vector<16x8x8xf32>
    %32 = arith.addf %30, %31 : vector<16x8x8xf32>
    %cst_35 = arith.constant dense<0xFF800000> : vector<16x8xf32>
    %33 = vector.multi_reduction <maximumf>, %32, %cst_35 [2] : vector<16x8x8xf32> to vector<16x8xf32>
    %34 = vector.shape_cast %33 : vector<16x8xf32> to vector<16x8x1xf32>
    %35 = vector.broadcast %34 : vector<16x8x1xf32> to vector<16x8x8xf32>
    %36 = arith.subf %32, %35 : vector<16x8x8xf32>
    %37 = math.exp %36 : vector<16x8x8xf32>
    %cst_36 = arith.constant dense<0.000000e+00> : vector<16x8xf32>
    %38 = vector.multi_reduction <add>, %37, %cst_36 [2] : vector<16x8x8xf32> to vector<16x8xf32>
    %39 = vector.shape_cast %38 : vector<16x8xf32> to vector<16x8x1xf32>
    %40 = tpu.reciprocal %39 {approx = true} : vector<16x8x1xf32> -> vector<16x8x1xf32>
    %41 = vector.broadcast %40 : vector<16x8x1xf32> to vector<16x8x8xf32>
    %42 = arith.mulf %37, %41 : vector<16x8x8xf32>
    %43 = arith.truncf %42 : vector<16x8x8xf32> to vector<16x8x8xbf16>
    %cst_37 = arith.constant dense<0.000000e+00> : vector<16x8x128xf32>
    %44 = tpu.matmul %43, %29, %cst_37 {dimension_numbers = #tpu.dot_dimension_numbers<[2], [1], [1], [2], [0, 0, 0, 1, 1, 2], [0], [0]>} : vector<16x8x8xbf16>, vector<16x8x128xbf16>, vector<16x8x128xf32> -> vector<16x8x128xf32>
    %45 = vector.shape_cast %44 : vector<16x8x128xf32> to vector<128x128xf32>
    %46 = arith.truncf %45 : vector<128x128xf32> to vector<128x128xbf16>
    %cst_38 = arith.constant dense<0.000000e+00> : vector<128x128xf32>
    %47 = tpu.matmul %46, %5, %cst_38 {dimension_numbers = #tpu.dot_dimension_numbers<[1], [0], [0], [1], [0, 0, 1, 1], [], []>} : vector<128x128xbf16>, vector<128x128xbf16>, vector<128x128xf32> -> vector<128x128xf32>
    %48 = vector.broadcast %6 : vector<1x128xf32> to vector<128x128xf32>
    %49 = arith.addf %47, %48 : vector<128x128xf32>
    %50 = arith.addf %0, %49 : vector<128x128xf32>
    %cst_39 = arith.constant dense<0.000000e+00> : vector<128xf32>
    %51 = vector.multi_reduction <add>, %50, %cst_39 [1] : vector<128x128xf32> to vector<128xf32>
    %52 = vector.shape_cast %51 : vector<128xf32> to vector<128x1xf32>
    %cst_40 = arith.constant 1.280000e+02 : f32
    %53 = vector.broadcast %cst_40 : f32 to vector<128x1xf32>
    %54 = arith.divf %52, %53 : vector<128x1xf32>
    %55 = vector.broadcast %54 : vector<128x1xf32> to vector<128x128xf32>
    %56 = arith.subf %50, %55 : vector<128x128xf32>
    %57 = arith.mulf %56, %56 : vector<128x128xf32>
    %cst_41 = arith.constant dense<0.000000e+00> : vector<128xf32>
    %58 = vector.multi_reduction <add>, %57, %cst_41 [1] : vector<128x128xf32> to vector<128xf32>
    %59 = vector.shape_cast %58 : vector<128xf32> to vector<128x1xf32>
    %cst_42 = arith.constant 1.280000e+02 : f32
    %60 = vector.broadcast %cst_42 : f32 to vector<128x1xf32>
    %61 = arith.divf %59, %60 : vector<128x1xf32>
    %cst_43 = arith.constant 9.99999996E-13 : f32
    %62 = vector.broadcast %cst_43 : f32 to vector<128x1xf32>
    %63 = arith.addf %61, %62 : vector<128x1xf32>
    %64 = math.rsqrt %63 : vector<128x1xf32>
    %65 = vector.broadcast %64 : vector<128x1xf32> to vector<128x128xf32>
    %66 = arith.mulf %56, %65 : vector<128x128xf32>
    %67 = vector.broadcast %7 : vector<1x128xf32> to vector<128x128xf32>
    %68 = arith.mulf %66, %67 : vector<128x128xf32>
    %69 = vector.broadcast %8 : vector<1x128xf32> to vector<128x128xf32>
    %70 = arith.addf %68, %69 : vector<128x128xf32>
    %71 = arith.truncf %70 : vector<128x128xf32> to vector<128x128xbf16>
    %cst_44 = arith.constant dense<0.000000e+00> : vector<128x256xf32>
    %72 = tpu.matmul %71, %9, %cst_44 {dimension_numbers = #tpu.dot_dimension_numbers<[1], [0], [0], [1], [0, 0, 1, 1], [], []>} : vector<128x128xbf16>, vector<128x256xbf16>, vector<128x256xf32> -> vector<128x256xf32>
    %73 = vector.broadcast %10 : vector<1x256xf32> to vector<128x256xf32>
    %74 = arith.addf %72, %73 : vector<128x256xf32>
    %cst_45 = arith.constant 5.000000e-01 : f32
    %75 = vector.broadcast %cst_45 : f32 to vector<128x256xf32>
    %76 = arith.mulf %75, %74 : vector<128x256xf32>
    %cst_46 = arith.constant 4.471500e-02 : f32
    %77 = vector.broadcast %cst_46 : f32 to vector<128x256xf32>
    %78 = arith.mulf %77, %74 : vector<128x256xf32>
    %79 = arith.mulf %78, %74 : vector<128x256xf32>
    %80 = arith.mulf %79, %74 : vector<128x256xf32>
    %81 = arith.addf %74, %80 : vector<128x256xf32>
    %cst_47 = arith.constant 0.797884583 : f32
    %82 = vector.broadcast %cst_47 : f32 to vector<128x256xf32>
    %83 = arith.mulf %82, %81 : vector<128x256xf32>
    %84 = math.tanh %83 : vector<128x256xf32>
    %cst_48 = arith.constant 1.000000e+00 : f32
    %85 = vector.broadcast %cst_48 : f32 to vector<128x256xf32>
    %86 = arith.addf %85, %84 : vector<128x256xf32>
    %87 = arith.mulf %76, %86 : vector<128x256xf32>
    %88 = arith.truncf %87 : vector<128x256xf32> to vector<128x256xbf16>
    %cst_49 = arith.constant dense<0.000000e+00> : vector<128x128xf32>
    %89 = tpu.matmul %88, %11, %cst_49 {dimension_numbers = #tpu.dot_dimension_numbers<[1], [0], [0], [1], [0, 0, 1, 1], [], []>} : vector<128x256xbf16>, vector<256x128xbf16>, vector<128x128xf32> -> vector<128x128xf32>
    %90 = vector.broadcast %12 : vector<1x128xf32> to vector<128x128xf32>
    %91 = arith.addf %89, %90 : vector<128x128xf32>
    %92 = arith.addf %70, %91 : vector<128x128xf32>
    %cst_50 = arith.constant dense<0.000000e+00> : vector<128xf32>
    %93 = vector.multi_reduction <add>, %92, %cst_50 [1] : vector<128x128xf32> to vector<128xf32>
    %94 = vector.shape_cast %93 : vector<128xf32> to vector<128x1xf32>
    %cst_51 = arith.constant 1.280000e+02 : f32
    %95 = vector.broadcast %cst_51 : f32 to vector<128x1xf32>
    %96 = arith.divf %94, %95 : vector<128x1xf32>
    %97 = vector.broadcast %96 : vector<128x1xf32> to vector<128x128xf32>
    %98 = arith.subf %92, %97 : vector<128x128xf32>
    %99 = arith.mulf %98, %98 : vector<128x128xf32>
    %cst_52 = arith.constant dense<0.000000e+00> : vector<128xf32>
    %100 = vector.multi_reduction <add>, %99, %cst_52 [1] : vector<128x128xf32> to vector<128xf32>
    %101 = vector.shape_cast %100 : vector<128xf32> to vector<128x1xf32>
    %cst_53 = arith.constant 1.280000e+02 : f32
    %102 = vector.broadcast %cst_53 : f32 to vector<128x1xf32>
    %103 = arith.divf %101, %102 : vector<128x1xf32>
    %cst_54 = arith.constant 9.99999996E-13 : f32
    %104 = vector.broadcast %cst_54 : f32 to vector<128x1xf32>
    %105 = arith.addf %103, %104 : vector<128x1xf32>
    %106 = math.rsqrt %105 : vector<128x1xf32>
    %107 = vector.broadcast %106 : vector<128x1xf32> to vector<128x128xf32>
    %108 = arith.mulf %98, %107 : vector<128x128xf32>
    %109 = vector.broadcast %13 : vector<1x128xf32> to vector<128x128xf32>
    %110 = arith.mulf %108, %109 : vector<128x128xf32>
    %111 = vector.broadcast %14 : vector<1x128xf32> to vector<128x128xf32>
    %112 = arith.addf %110, %111 : vector<128x128xf32>
    %113 = vector.shape_cast %112 : vector<128x128xf32> to vector<16x8x128xf32>
    %114 = vector.extract_strided_slice %113 {offsets = [0, 1, 0], sizes = [16, 1, 128], strides = [1, 1, 1]} : vector<16x8x128xf32> to vector<16x1x128xf32>
    %115 = vector.shape_cast %114 : vector<16x1x128xf32> to vector<16x128xf32>
    %116 = arith.divf %2, %2 : vector<16x1xf32>
    %117 = vector.broadcast %116 : vector<16x1xf32> to vector<16x128xf32>
    %118 = arith.mulf %115, %117 : vector<16x128xf32>
    %119 = vector.broadcast %15 : vector<1x128xf32> to vector<16x128xf32>
    %120 = arith.mulf %118, %119 : vector<16x128xf32>
    %cst_55 = arith.constant dense<0.000000e+00> : vector<16xf32>
    %121 = vector.multi_reduction <add>, %120, %cst_55 [1] : vector<16x128xf32> to vector<16xf32>
    %122 = vector.shape_cast %121 : vector<16xf32> to vector<16x1xf32>
    %123 = vector.broadcast %16 : vector<1x1xf32> to vector<16x1xf32>
    %124 = arith.addf %122, %123 : vector<16x1xf32>
    %c0_56 = arith.constant 0 : index
    %c0_57 = arith.constant 0 : index
    %125 = vector.load %arg18[%c0_56, %c0_57] : memref<16x1xf32, #tpu.memory_space<vmem>>, vector<16x1xf32>
    tpu.vector_store %arg18[%c0_56, %c0_57], %124 {strides = array<i32>} : memref<16x1xf32, #tpu.memory_space<vmem>>, vector<16x1xf32>,
    return
  }
  func.func @transform_0(%arg0: i32) -> (i32, i32) {
    %c0_i32 = arith.constant 0 : i32
    %c0_i32_0 = arith.constant 0 : i32
    return %arg0, %c0_i32 : i32, i32
  }
  func.func @transform_1(%arg0: i32) -> (i32, i32, i32) {
    %c0_i32 = arith.constant 0 : i32
    %c0_i32_0 = arith.constant 0 : i32
    %c0_i32_1 = arith.constant 0 : i32
    return %arg0, %c0_i32, %c0_i32_0 : i32, i32, i32
  }
  func.func @transform_2(%arg0: i32) -> (i32, i32) {
    %c0_i32 = arith.constant 0 : i32
    %c0_i32_0 = arith.constant 0 : i32
    return %arg0, %c0_i32 : i32, i32
  }
  func.func @transform_3(%arg0: i32) -> (i32, i32) {
    %c0_i32 = arith.constant 0 : i32
    %c0_i32_0 = arith.constant 0 : i32
    %c0_i32_1 = arith.constant 0 : i32
    return %c0_i32, %c0_i32_0 : i32, i32
  }
  func.func @transform_4(%arg0: i32) -> (i32, i32) {
    %c0_i32 = arith.constant 0 : i32
    %c0_i32_0 = arith.constant 0 : i32
    %c0_i32_1 = arith.constant 0 : i32
    return %c0_i32, %c0_i32_0 : i32, i32
  }
  func.func @transform_5(%arg0: i32) -> (i32, i32) {
    %c0_i32 = arith.constant 0 : i32
    %c0_i32_0 = arith.constant 0 : i32
    %c0_i32_1 = arith.constant 0 : i32
    return %c0_i32, %c0_i32_0 : i32, i32
  }
  func.func @transform_6(%arg0: i32) -> (i32, i32) {
    %c0_i32 = arith.constant 0 : i32
    %c0_i32_0 = arith.constant 0 : i32
    %c0_i32_1 = arith.constant 0 : i32
    return %c0_i32, %c0_i32_0 : i32, i32
  }
  func.func @transform_7(%arg0: i32) -> (i32, i32) {
    %c0_i32 = arith.constant 0 : i32
    %c0_i32_0 = arith.constant 0 : i32
    %c0_i32_1 = arith.constant 0 : i32
    return %c0_i32, %c0_i32_0 : i32, i32
  }
  func.func @transform_8(%arg0: i32) -> (i32, i32) {
    %c0_i32 = arith.constant 0 : i32
    %c0_i32_0 = arith.constant 0 : i32
    %c0_i32_1 = arith.constant 0 : i32
    return %c0_i32, %c0_i32_0 : i32, i32
  }
  func.func @transform_9(%arg0: i32) -> (i32, i32) {
    %c0_i32 = arith.constant 0 : i32
    %c0_i32_0 = arith.constant 0 : i32
    %c0_i32_1 = arith.constant 0 : i32
    return %c0_i32, %c0_i32_0 : i32, i32
  }
  func.func @transform_10(%arg0: i32) -> (i32, i32) {
    %c0_i32 = arith.constant 0 : i32
    %c0_i32_0 = arith.constant 0 : i32
    %c0_i32_1 = arith.constant 0 : i32
    return %c0_i32, %c0_i32_0 : i32, i32
  }
  func.func @transform_11(%arg0: i32) -> (i32, i32) {
    %c0_i32 = arith.constant 0 : i32
    %c0_i32_0 = arith.constant 0 : i32
    %c0_i32_1 = arith.constant 0 : i32
    return %c0_i32, %c0_i32_0 : i32, i32
  }
  func.func @transform_12(%arg0: i32) -> (i32, i32) {
    %c0_i32 = arith.constant 0 : i32
    %c0_i32_0 = arith.constant 0 : i32
    %c0_i32_1 = arith.constant 0 : i32
    return %c0_i32, %c0_i32_0 : i32, i32
  }
  func.func @transform_13(%arg0: i32) -> (i32, i32) {
    %c0_i32 = arith.constant 0 : i32
    %c0_i32_0 = arith.constant 0 : i32
    %c0_i32_1 = arith.constant 0 : i32
    return %c0_i32, %c0_i32_0 : i32, i32
  }
  func.func @transform_14(%arg0: i32) -> (i32, i32) {
    %c0_i32 = arith.constant 0 : i32
    %c0_i32_0 = arith.constant 0 : i32
    %c0_i32_1 = arith.constant 0 : i32
    return %c0_i32, %c0_i32_0 : i32, i32
  }
  func.func @transform_15(%arg0: i32) -> (i32, i32) {
    %c0_i32 = arith.constant 0 : i32
    %c0_i32_0 = arith.constant 0 : i32
    %c0_i32_1 = arith.constant 0 : i32
    return %c0_i32, %c0_i32_0 : i32, i32
  }
  func.func @transform_16(%arg0: i32) -> (i32, i32) {
    %c0_i32 = arith.constant 0 : i32
    %c0_i32_0 = arith.constant 0 : i32
    %c0_i32_1 = arith.constant 0 : i32
    return %c0_i32, %c0_i32_0 : i32, i32
  }
  func.func @transform_17(%arg0: i32) -> (i32, i32) {
    %c0_i32 = arith.constant 0 : i32
    %c0_i32_0 = arith.constant 0 : i32
    return %arg0, %c0_i32 : i32, i32
  }
}

</mosaic_0001>

<llo_original>
// kernel: tpu_custom_call.1
$region0: #{tpu_custom_call.1}
  #allocation0 [shape = 'u32[]', space=smem, size = 0x4, offset = 0x4, fixed_abs, tag = 'smem constant byte address 0x4 - core index']
  #allocation1 [shape = 'u32[72,128]{1,0:T(1,128)}', space=vmem, size = 0x9000, scoped, tag = 'internal scratch']
  #allocation2 [shape = 'f32[1,1]{1,0:T(1,128)S(1)}', space=vmem, size = 0x200, scoped, tag = 'scoped memory for tpu_custom_call.1']
  %s0 = inlined_call_operand.hbm [shape: f32[256,128], index: 0, kind: input, shape index: {}]
  %s1 = inlined_call_operand.vmem [shape: f32[32,1,8], index: 1, kind: input, shape index: {}]
  %s2 = inlined_call_operand.vmem [shape: f32[32,1], index: 2, kind: input, shape index: {}]
  %s3 = inlined_call_operand.hbm [shape: bf16[128,384], index: 3, kind: input, shape index: {}]
  %s4 = inlined_call_operand.vmem [shape: f32[1,384], index: 4, kind: input, shape index: {}]
  %s5 = inlined_call_operand.vmem [shape: bf16[128,128], index: 5, kind: input, shape index: {}]
  %s6 = inlined_call_operand.vmem [shape: f32[1,128], index: 6, kind: input, shape index: {}]
  %s7 = inlined_call_operand.vmem [shape: f32[1,128], index: 7, kind: input, shape index: {}]
  %s8 = inlined_call_operand.vmem [shape: f32[1,128], index: 8, kind: input, shape index: {}]
  %s9 = inlined_call_operand.hbm [shape: bf16[128,256], index: 9, kind: input, shape index: {}]
  %s10 = inlined_call_operand.vmem [shape: f32[1,256], index: 10, kind: input, shape index: {}]
  %s11 = inlined_call_operand.hbm [shape: bf16[256,128], index: 11, kind: input, shape index: {}]
  %s12 = inlined_call_operand.vmem [shape: f32[1,128], index: 12, kind: input, shape index: {}]
  %s13 = inlined_call_operand.vmem [shape: f32[1,128], index: 13, kind: input, shape index: {}]
  %s14 = inlined_call_operand.vmem [shape: f32[1,128], index: 14, kind: input, shape index: {}]
  %s15 = inlined_call_operand.vmem [shape: f32[1,128], index: 15, kind: input, shape index: {}]
  %s16 = inlined_call_operand.<no memory space> [shape: f32[1,1], index: 16, kind: input, shape index: {}]
  %s17 = inlined_call_operand.vmem [shape: f32[32,1], index: 17, kind: output, shape index: {}]
  %s18 = sld [smem:[#allocation0]]
  $region117: #{tpu_custom_call.1} parent=0
    _
  %s20 = ssub.s32 1, %s18
  %s21 = scalar_select 0, %s20, %s18
  %v22 = vstv %s16
  %23 = vst [vmem:[#allocation2] sm:$0x1] %v22
  $region1: #{tpu_custom_call.1} parent=0
    #allocation3 [shape = 'u8[131072]{0}', space=vmem, size = 0x20000, scoped, tag = 'input window, operand 0']
    #allocation4 [shape = 's32[2]{0}', space=sflag, size = 0x8, scoped, tag = 'scoped memory for tpu_custom_call.1']
    #allocation5 [shape = 'u8[98304]{0}', space=vmem, size = 0x18000, scoped, tag = 'input window, operand 3, single buffered']
    #allocation6 [shape = 's32[1]{0}', space=sflag, size = 0x4, scoped, tag = 'scoped memory for tpu_custom_call.1']
    #allocation7 [shape = 'u8[65536]{0}', space=vmem, size = 0x10000, scoped, tag = 'input window, operand 9, single buffered']
    #allocation8 [shape = 'u8[65536]{0}', space=vmem, size = 0x10000, scoped, tag = 'input window, operand 11, single buffered']
    #allocation9 [shape = 's32[1]{0}', space=sflag, size = 0x4, scoped, tag = 'scoped memory for tpu_custom_call.1']
    %24 = vsyncpa [#allocation4], 0
    %s25 = scalar_lea.sflag [#allocation4], 1
    %26 = vsyncpa %s25, 0
    %27 = vsyncpa [#allocation6], 0
    %28 = vsyncpa [#allocation9], 0
    loop: start=0, step=1, limit=4
    $region2: #{tpu_custom_call.1} parent=1 // loop_pre_header
      _
    $region3: #{tpu_custom_call.1} parent=1 // loop_header
      %s30 = sphi 0, %s34
      %p31 = scmp.ge.s32.totalorder %s30, 4
      %s40 = sphi 0, %s42
      %s43 = sphi 0, %s40
      %s44 = sphi 0, %s43
      %s60 = sphi 0, %s44
      %s66 = sphi 0, %s68
      %s69 = sphi 0, %s66
      %s70 = sphi 0, %s69
      %s86 = sphi 0, %s70
      %s92 = sphi 0, %s94
      %s95 = sphi 0, %s92
      %s96 = sphi 0, %s95
      %s112 = sphi 0, %s96
      %s116 = sphi 0, %s116
      %s118 = sphi 0, %s116
      %s119 = sphi 0, %s118
      %s133 = sphi 0, %s119
      %s137 = sphi 0, %s137
      %s139 = sphi 0, %s137
      %s140 = sphi 0, %s139
      %s154 = sphi 0, %s140
      %s158 = sphi 0, %s158
      %s160 = sphi 0, %s158
      %s161 = sphi 0, %s160
      %s175 = sphi 0, %s161
      %s179 = sphi 0, %s179
      %s181 = sphi 0, %s179
      %s182 = sphi 0, %s181
      %s196 = sphi 0, %s182
      %s200 = sphi 0, %s200
      %s202 = sphi 0, %s200
      %s203 = sphi 0, %s202
      %s217 = sphi 0, %s203
      %s221 = sphi 0, %s221
      %s223 = sphi 0, %s221
      %s224 = sphi 0, %s223
      %s238 = sphi 0, %s224
      %s242 = sphi 0, %s242
      %s244 = sphi 0, %s242
      %s245 = sphi 0, %s244
      %s259 = sphi 0, %s245
      %s263 = sphi 0, %s263
      %s265 = sphi 0, %s263
      %s266 = sphi 0, %s265
      %s280 = sphi 0, %s266
      %s284 = sphi 0, %s284
      %s286 = sphi 0, %s284
      %s287 = sphi 0, %s286
      %s301 = sphi 0, %s287
      %s305 = sphi 0, %s305
      %s307 = sphi 0, %s305
      %s308 = sphi 0, %s307
      %s322 = sphi 0, %s308
      %s326 = sphi 0, %s326
      %s328 = sphi 0, %s326
      %s329 = sphi 0, %s328
      %s343 = sphi 0, %s329
      %s347 = sphi 0, %s347
      %s349 = sphi 0, %s347
      %s350 = sphi 0, %s349
      %s364 = sphi 0, %s350
      %s368 = sphi 0, %s368
      %s370 = sphi 0, %s368
      %s371 = sphi 0, %s370
      %s385 = sphi 0, %s371
      %s389 = sphi 0, %s389
      %s391 = sphi 0, %s389
      %s392 = sphi 0, %s391
      %s406 = sphi 0, %s392
      %s412 = sphi 0, %s414
      %s415 = sphi 0, %s412
      %s416 = sphi 0, %s415
      %s432 = sphi 0, %s416
    $region4: #{tpu_custom_call.1} parent=1 // loop_header_branch
      %33 = sbr.rel (%p31) target = $region8
    $region5: #{tpu_custom_call.1} parent=1 // loop_body
      %s35 = ssub.s32 %s30, 1
      %s36 = ssub.s32 %s30, 2
      %s37 = sadd.s32 %s30, 1
      %s38 = ssub.s32 %s30, %s37
      %p39 = scmp.eq.s32.totalorder %s38, 0
      %s41 = sadd.s32 %s40, 1
      %s42 = scalar_select %p39, %s40, %s41
      %p45 = pneg %p39
      %p46 = scmp.eq.s32.totalorder %s30, 1
      %p47 = por %p45, %p46
      %p48 = scmp.ne.s32.totalorder %s40, %s43
      %p49 = scmp.eq.s32.totalorder %s30, 0
      %p50 = por %p48, %p49
      %p51 = scmp.ne.s32.totalorder %s40, %s43
      %p52 = scmp.eq.s32.totalorder %s35, 1
      %p53 = por %p51, %p52
      %p54 = scmp.ne.s32.totalorder %s43, %s44
      %p55 = scmp.eq.s32.totalorder %s35, 0
      %p56 = por %p54, %p55
      %p57 = scmp.ne.s32.totalorder %s43, %s44
      %p58 = scmp.eq.s32.totalorder %s36, 1
      %p59 = por %p57, %p58
      %p61 = scmp.ne.s32.totalorder %s44, %s60
      %p62 = scmp.eq.s32.totalorder %s36, 0
      %p63 = por %p61, %p62
      %s64 = ssub.s32 %s30, %s37
      %p65 = scmp.eq.s32.totalorder %s64, 0
      %s67 = sadd.s32 %s66, 1
      %s68 = scalar_select %p65, %s66, %s67
      %p71 = pneg %p65
      %p72 = scmp.eq.s32.totalorder %s30, 1
      %p73 = por %p71, %p72
      %p74 = scmp.ne.s32.totalorder %s66, %s69
      %p75 = scmp.eq.s32.totalorder %s30, 0
      %p76 = por %p74, %p75
      %p77 = scmp.ne.s32.totalorder %s66, %s69
      %p78 = scmp.eq.s32.totalorder %s35, 1
      %p79 = por %p77, %p78
      %p80 = scmp.ne.s32.totalorder %s69, %s70
      %p81 = scmp.eq.s32.totalorder %s35, 0
      %p82 = por %p80, %p81
      %p83 = scmp.ne.s32.totalorder %s69, %s70
      %p84 = scmp.eq.s32.totalorder %s36, 1
      %p85 = por %p83, %p84
      %p87 = scmp.ne.s32.totalorder %s70, %s86
      %p88 = scmp.eq.s32.totalorder %s36, 0
      %p89 = por %p87, %p88
      %s90 = ssub.s32 %s30, %s37
      %p91 = scmp.eq.s32.totalorder %s90, 0
      %s93 = sadd.s32 %s92, 1
      %s94 = scalar_select %p91, %s92, %s93
      %p97 = pneg %p91
      %p98 = scmp.eq.s32.totalorder %s30, 1
      %p99 = por %p97, %p98
      %p100 = scmp.ne.s32.totalorder %s92, %s95
      %p101 = scmp.eq.s32.totalorder %s30, 0
      %p102 = por %p100, %p101
      %p103 = scmp.ne.s32.totalorder %s92, %s95
      %p104 = scmp.eq.s32.totalorder %s35, 1
      %p105 = por %p103, %p104
      %p106 = scmp.ne.s32.totalorder %s95, %s96
      %p107 = scmp.eq.s32.totalorder %s35, 0
      %p108 = por %p106, %p107
      %p109 = scmp.ne.s32.totalorder %s95, %s96
      %p110 = scmp.eq.s32.totalorder %s36, 1
      %p111 = por %p109, %p110
      %p113 = scmp.ne.s32.totalorder %s96, %s112
      %p114 = scmp.eq.s32.totalorder %s36, 0
      %p115 = por %p113, %p114
      %s117 = sadd.s32 %s116, 1
      %p120 = scmp.eq.s32.totalorder %s30, 1
      %p121 = scmp.ne.s32.totalorder %s116, %s118
      %p122 = scmp.eq.s32.totalorder %s30, 0
      %p123 = por %p121, %p122
      %p124 = scmp.ne.s32.totalorder %s116, %s118
      %p125 = scmp.eq.s32.totalorder %s35, 1
      %p126 = por %p124, %p125
      %p127 = scmp.ne.s32.totalorder %s118, %s119
      %p128 = scmp.eq.s32.totalorder %s35, 0
      %p129 = por %p127, %p128
      %p130 = scmp.ne.s32.totalorder %s118, %s119
      %p131 = scmp.eq.s32.totalorder %s36, 1
      %p132 = por %p130, %p131
      %p134 = scmp.ne.s32.totalorder %s119, %s133
      %p135 = scmp.eq.s32.totalorder %s36, 0
      %p136 = por %p134, %p135
      %s138 = sadd.s32 %s137, 1
      %p141 = scmp.eq.s32.totalorder %s30, 1
      %p142 = scmp.ne.s32.totalorder %s137, %s139
      %p143 = scmp.eq.s32.totalorder %s30, 0
      %p144 = por %p142, %p143
      %p145 = scmp.ne.s32.totalorder %s137, %s139
      %p146 = scmp.eq.s32.totalorder %s35, 1
      %p147 = por %p145, %p146
      %p148 = scmp.ne.s32.totalorder %s139, %s140
      %p149 = scmp.eq.s32.totalorder %s35, 0
      %p150 = por %p148, %p149
      %p151 = scmp.ne.s32.totalorder %s139, %s140
      %p152 = scmp.eq.s32.totalorder %s36, 1
      %p153 = por %p151, %p152
      %p155 = scmp.ne.s32.totalorder %s140, %s154
      %p156 = scmp.eq.s32.totalorder %s36, 0
      %p157 = por %p155, %p156
      %s159 = sadd.s32 %s158, 1
      %p162 = scmp.eq.s32.totalorder %s30, 1
      %p163 = scmp.ne.s32.totalorder %s158, %s160
      %p164 = scmp.eq.s32.totalorder %s30, 0
      %p165 = por %p163, %p164
      %p166 = scmp.ne.s32.totalorder %s158, %s160
      %p167 = scmp.eq.s32.totalorder %s35, 1
      %p168 = por %p166, %p167
      %p169 = scmp.ne.s32.totalorder %s160, %s161
      %p170 = scmp.eq.s32.totalorder %s35, 0
      %p171 = por %p169, %p170
      %p172 = scmp.ne.s32.totalorder %s160, %s161
      %p173 = scmp.eq.s32.totalorder %s36, 1
      %p174 = por %p172, %p173
      %p176 = scmp.ne.s32.totalorder %s161, %s175
      %p177 = scmp.eq.s32.totalorder %s36, 0
      %p178 = por %p176, %p177
      %s180 = sadd.s32 %s179, 1
      %p183 = scmp.eq.s32.totalorder %s30, 1
      %p184 = scmp.ne.s32.totalorder %s179, %s181
      %p185 = scmp.eq.s32.totalorder %s30, 0
      %p186 = por %p184, %p185
      %p187 = scmp.ne.s32.totalorder %s179, %s181
      %p188 = scmp.eq.s32.totalorder %s35, 1
      %p189 = por %p187, %p188
      %p190 = scmp.ne.s32.totalorder %s181, %s182
      %p191 = scmp.eq.s32.totalorder %s35, 0
      %p192 = por %p190, %p191
      %p193 = scmp.ne.s32.totalorder %s181, %s182
      %p194 = scmp.eq.s32.totalorder %s36, 1
      %p195 = por %p193, %p194
      %p197 = scmp.ne.s32.totalorder %s182, %s196
      %p198 = scmp.eq.s32.totalorder %s36, 0
      %p199 = por %p197, %p198
      %s201 = sadd.s32 %s200, 1
      %p204 = scmp.eq.s32.totalorder %s30, 1
      %p205 = scmp.ne.s32.totalorder %s200, %s202
      %p206 = scmp.eq.s32.totalorder %s30, 0
      %p207 = por %p205, %p206
      %p208 = scmp.ne.s32.totalorder %s200, %s202
      %p209 = scmp.eq.s32.totalorder %s35, 1
      %p210 = por %p208, %p209
      %p211 = scmp.ne.s32.totalorder %s202, %s203
      %p212 = scmp.eq.s32.totalorder %s35, 0
      %p213 = por %p211, %p212
      %p214 = scmp.ne.s32.totalorder %s202, %s203
      %p215 = scmp.eq.s32.totalorder %s36, 1
      %p216 = por %p214, %p215
      %p218 = scmp.ne.s32.totalorder %s203, %s217
      %p219 = scmp.eq.s32.totalorder %s36, 0
      %p220 = por %p218, %p219
      %s222 = sadd.s32 %s221, 1
      %p225 = scmp.eq.s32.totalorder %s30, 1
      %p226 = scmp.ne.s32.totalorder %s221, %s223
      %p227 = scmp.eq.s32.totalorder %s30, 0
      %p228 = por %p226, %p227
      %p229 = scmp.ne.s32.totalorder %s221, %s223
      %p230 = scmp.eq.s32.totalorder %s35, 1
      %p231 = por %p229, %p230
      %p232 = scmp.ne.s32.totalorder %s223, %s224
      %p233 = scmp.eq.s32.totalorder %s35, 0
      %p234 = por %p232, %p233
      %p235 = scmp.ne.s32.totalorder %s223, %s224
      %p236 = scmp.eq.s32.totalorder %s36, 1
      %p237 = por %p235, %p236
      %p239 = scmp.ne.s32.totalorder %s224, %s238
      %p240 = scmp.eq.s32.totalorder %s36, 0
      %p241 = por %p239, %p240
      %s243 = sadd.s32 %s242, 1
      %p246 = scmp.eq.s32.totalorder %s30, 1
      %p247 = scmp.ne.s32.totalorder %s242, %s244
      %p248 = scmp.eq.s32.totalorder %s30, 0
      %p249 = por %p247, %p248
      %p250 = scmp.ne.s32.totalorder %s242, %s244
      %p251 = scmp.eq.s32.totalorder %s35, 1
      %p252 = por %p250, %p251
      %p253 = scmp.ne.s32.totalorder %s244, %s245
      %p254 = scmp.eq.s32.totalorder %s35, 0
      %p255 = por %p253, %p254
      %p256 = scmp.ne.s32.totalorder %s244, %s245
      %p257 = scmp.eq.s32.totalorder %s36, 1
      %p258 = por %p256, %p257
      %p260 = scmp.ne.s32.totalorder %s245, %s259
      %p261 = scmp.eq.s32.totalorder %s36, 0
      %p262 = por %p260, %p261
      %s264 = sadd.s32 %s263, 1
      %p267 = scmp.eq.s32.totalorder %s30, 1
      %p268 = scmp.ne.s32.totalorder %s263, %s265
      %p269 = scmp.eq.s32.totalorder %s30, 0
      %p270 = por %p268, %p269
      %p271 = scmp.ne.s32.totalorder %s263, %s265
      %p272 = scmp.eq.s32.totalorder %s35, 1
      %p273 = por %p271, %p272
      %p274 = scmp.ne.s32.totalorder %s265, %s266
      %p275 = scmp.eq.s32.totalorder %s35, 0
      %p276 = por %p274, %p275
      %p277 = scmp.ne.s32.totalorder %s265, %s266
      %p278 = scmp.eq.s32.totalorder %s36, 1
      %p279 = por %p277, %p278
      %p281 = scmp.ne.s32.totalorder %s266, %s280
      %p282 = scmp.eq.s32.totalorder %s36, 0
      %p283 = por %p281, %p282
      %s285 = sadd.s32 %s284, 1
      %p288 = scmp.eq.s32.totalorder %s30, 1
      %p289 = scmp.ne.s32.totalorder %s284, %s286
      %p290 = scmp.eq.s32.totalorder %s30, 0
      %p291 = por %p289, %p290
      %p292 = scmp.ne.s32.totalorder %s284, %s286
      %p293 = scmp.eq.s32.totalorder %s35, 1
      %p294 = por %p292, %p293
      %p295 = scmp.ne.s32.totalorder %s286, %s287
      %p296 = scmp.eq.s32.totalorder %s35, 0
      %p297 = por %p295, %p296
      %p298 = scmp.ne.s32.totalorder %s286, %s287
      %p299 = scmp.eq.s32.totalorder %s36, 1
      %p300 = por %p298, %p299
      %p302 = scmp.ne.s32.totalorder %s287, %s301
      %p303 = scmp.eq.s32.totalorder %s36, 0
      %p304 = por %p302, %p303
      %s306 = sadd.s32 %s305, 1
      %p309 = scmp.eq.s32.totalorder %s30, 1
      %p310 = scmp.ne.s32.totalorder %s305, %s307
      %p311 = scmp.eq.s32.totalorder %s30, 0
      %p312 = por %p310, %p311
      %p313 = scmp.ne.s32.totalorder %s305, %s307
      %p314 = scmp.eq.s32.totalorder %s35, 1
      %p315 = por %p313, %p314
      %p316 = scmp.ne.s32.totalorder %s307, %s308
      %p317 = scmp.eq.s32.totalorder %s35, 0
      %p318 = por %p316, %p317
      %p319 = scmp.ne.s32.totalorder %s307, %s308
      %p320 = scmp.eq.s32.totalorder %s36, 1
      %p321 = por %p319, %p320
      %p323 = scmp.ne.s32.totalorder %s308, %s322
      %p324 = scmp.eq.s32.totalorder %s36, 0
      %p325 = por %p323, %p324
      %s327 = sadd.s32 %s326, 1
      %p330 = scmp.eq.s32.totalorder %s30, 1
      %p331 = scmp.ne.s32.totalorder %s326, %s328
      %p332 = scmp.eq.s32.totalorder %s30, 0
      %p333 = por %p331, %p332
      %p334 = scmp.ne.s32.totalorder %s326, %s328
      %p335 = scmp.eq.s32.totalorder %s35, 1
      %p336 = por %p334, %p335
      %p337 = scmp.ne.s32.totalorder %s328, %s329
      %p338 = scmp.eq.s32.totalorder %s35, 0
      %p339 = por %p337, %p338
      %p340 = scmp.ne.s32.totalorder %s328, %s329
      %p341 = scmp.eq.s32.totalorder %s36, 1
      %p342 = por %p340, %p341
      %p344 = scmp.ne.s32.totalorder %s329, %s343
      %p345 = scmp.eq.s32.totalorder %s36, 0
      %p346 = por %p344, %p345
      %s348 = sadd.s32 %s347, 1
      %p351 = scmp.eq.s32.totalorder %s30, 1
      %p352 = scmp.ne.s32.totalorder %s347, %s349
      %p353 = scmp.eq.s32.totalorder %s30, 0
      %p354 = por %p352, %p353
      %p355 = scmp.ne.s32.totalorder %s347, %s349
      %p356 = scmp.eq.s32.totalorder %s35, 1
      %p357 = por %p355, %p356
      %p358 = scmp.ne.s32.totalorder %s349, %s350
      %p359 = scmp.eq.s32.totalorder %s35, 0
      %p360 = por %p358, %p359
      %p361 = scmp.ne.s32.totalorder %s349, %s350
      %p362 = scmp.eq.s32.totalorder %s36, 1
      %p363 = por %p361, %p362
      %p365 = scmp.ne.s32.totalorder %s350, %s364
      %p366 = scmp.eq.s32.totalorder %s36, 0
      %p367 = por %p365, %p366
      %s369 = sadd.s32 %s368, 1
      %p372 = scmp.eq.s32.totalorder %s30, 1
      %p373 = scmp.ne.s32.totalorder %s368, %s370
      %p374 = scmp.eq.s32.totalorder %s30, 0
      %p375 = por %p373, %p374
      %p376 = scmp.ne.s32.totalorder %s368, %s370
      %p377 = scmp.eq.s32.totalorder %s35, 1
      %p378 = por %p376, %p377
      %p379 = scmp.ne.s32.totalorder %s370, %s371
      %p380 = scmp.eq.s32.totalorder %s35, 0
      %p381 = por %p379, %p380
      %p382 = scmp.ne.s32.totalorder %s370, %s371
      %p383 = scmp.eq.s32.totalorder %s36, 1
      %p384 = por %p382, %p383
      %p386 = scmp.ne.s32.totalorder %s371, %s385
      %p387 = scmp.eq.s32.totalorder %s36, 0
      %p388 = por %p386, %p387
      %s390 = sadd.s32 %s389, 1
      %p393 = scmp.eq.s32.totalorder %s30, 1
      %p394 = scmp.ne.s32.totalorder %s389, %s391
      %p395 = scmp.eq.s32.totalorder %s30, 0
      %p396 = por %p394, %p395
      %p397 = scmp.ne.s32.totalorder %s389, %s391
      %p398 = scmp.eq.s32.totalorder %s35, 1
      %p399 = por %p397, %p398
      %p400 = scmp.ne.s32.totalorder %s391, %s392
      %p401 = scmp.eq.s32.totalorder %s35, 0
      %p402 = por %p400, %p401
      %p403 = scmp.ne.s32.totalorder %s391, %s392
      %p404 = scmp.eq.s32.totalorder %s36, 1
      %p405 = por %p403, %p404
      %p407 = scmp.ne.s32.totalorder %s392, %s406
      %p408 = scmp.eq.s32.totalorder %s36, 0
      %p409 = por %p407, %p408
      %s410 = ssub.s32 %s30, %s37
      %p411 = scmp.eq.s32.totalorder %s410, 0
      %s413 = sadd.s32 %s412, 1
      %s414 = scalar_select %p411, %s412, %s413
      %p417 = pneg %p411
      %p418 = scmp.eq.s32.totalorder %s30, 1
      %p419 = por %p417, %p418
      %p420 = scmp.ne.s32.totalorder %s412, %s415
      %p421 = scmp.eq.s32.totalorder %s30, 0
      %p422 = por %p420, %p421
      %p423 = scmp.ne.s32.totalorder %s412, %s415
      %p424 = scmp.eq.s32.totalorder %s35, 1
      %p425 = por %p423, %p424
      %p426 = scmp.ne.s32.totalorder %s415, %s416
      %p427 = scmp.eq.s32.totalorder %s35, 0
      %p428 = por %p426, %p427
      %p429 = scmp.ne.s32.totalorder %s415, %s416
      %p430 = scmp.eq.s32.totalorder %s36, 1
      %p431 = por %p429, %p430
      %p433 = scmp.ne.s32.totalorder %s416, %s432
      %p434 = scmp.eq.s32.totalorder %s36, 0
      %p435 = por %p433, %p434
      %p436 = scmp.le.s32.totalorder 1, %s30
      %p437 = scmp.lt.s32.totalorder %s30, 3
      %p438 = pnand %p436, %p437
      %p439 = pneg %p438
      // Predicated region
      $region9: #{tpu_custom_call.1} parent=5 // pred_check
        _
      $region10: #{tpu_custom_call.1} parent=5 // pred_check_branch
        %441 = sbr.rel (%p438) target = $region12
      $region11: #{tpu_custom_call.1} parent=5 // pred_region
        %s442 = ssub.s32 %s30, 1
        // Predicated region
        $region13: #{tpu_custom_call.1} parent=11 // pred_check
          %p443 = pneg %p129
        $region14: #{tpu_custom_call.1} parent=11 // pred_check_branch
          %445 = sbr.rel (%p443) target = $region16
        $region15: #{tpu_custom_call.1} parent=11 // pred_region
          %447 = vsyncadd [#allocation6], 0
          %s448 = sshll.u32 %s3, 4
          %s449 = int_to_ptr.hbm [resolvable:$true] %s448
          %s450 = sshll.u32 [#allocation5], 4
          %s451 = int_to_ptr.vmem [resolvable:$true] %s450
          %456 = dma.hbm_to_vmem [thread:$0]  %s449, 3072, %s451, [#allocation6], 192, 192, 12
        $region16: #{tpu_custom_call.1} parent=11 // pred_fallthru
          _
        // Predicated region
        $region17: #{tpu_custom_call.1} parent=11 // pred_check
          %p457 = pneg %p150
        $region18: #{tpu_custom_call.1} parent=11 // pred_check_branch
          %459 = sbr.rel (%p457) target = $region20
        $region19: #{tpu_custom_call.1} parent=11 // pred_region
          _
        $region20: #{tpu_custom_call.1} parent=11 // pred_fallthru
          _
        // Predicated region
        $region21: #{tpu_custom_call.1} parent=11 // pred_check
          %p460 = pneg %p171
        $region22: #{tpu_custom_call.1} parent=11 // pred_check_branch
          %462 = sbr.rel (%p460) target = $region24
        $region23: #{tpu_custom_call.1} parent=11 // pred_region
          _
        $region24: #{tpu_custom_call.1} parent=11 // pred_fallthru
          _
        // Predicated region
        $region25: #{tpu_custom_call.1} parent=11 // pred_check
          %p463 = pneg %p192
        $region26: #{tpu_custom_call.1} parent=11 // pred_check_branch
          %465 = sbr.rel (%p463) target = $region28
        $region27: #{tpu_custom_call.1} parent=11 // pred_region
          _
        $region28: #{tpu_custom_call.1} parent=11 // pred_fallthru
          _
        // Predicated region
        $region29: #{tpu_custom_call.1} parent=11 // pred_check
          %p466 = pneg %p213
        $region30: #{tpu_custom_call.1} parent=11 // pred_check_branch
          %468 = sbr.rel (%p466) target = $region32
        $region31: #{tpu_custom_call.1} parent=11 // pred_region
          _
        $region32: #{tpu_custom_call.1} parent=11 // pred_fallthru
          _
        // Predicated region
        $region33: #{tpu_custom_call.1} parent=11 // pred_check
          %p469 = pneg %p234
        $region34: #{tpu_custom_call.1} parent=11 // pred_check_branch
          %471 = sbr.rel (%p469) target = $region36
        $region35: #{tpu_custom_call.1} parent=11 // pred_region
          _
        $region36: #{tpu_custom_call.1} parent=11 // pred_fallthru
          _
        // Predicated region
        $region37: #{tpu_custom_call.1} parent=11 // pred_check
          %p472 = pneg %p255
        $region38: #{tpu_custom_call.1} parent=11 // pred_check_branch
          %474 = sbr.rel (%p472) target = $region40
        $region39: #{tpu_custom_call.1} parent=11 // pred_region
          %476 = vsyncadd [#allocation6], 0
          %s477 = sshll.u32 %s9, 4
          %s478 = int_to_ptr.hbm [resolvable:$true] %s477
          %s479 = sshll.u32 [#allocation7], 4
          %s480 = int_to_ptr.vmem [resolvable:$true] %s479
          %485 = dma.hbm_to_vmem [thread:$0]  %s478, 2048, %s480, [#allocation6], 128, 128, 8
        $region40: #{tpu_custom_call.1} parent=11 // pred_fallthru
          _
        // Predicated region
        $region41: #{tpu_custom_call.1} parent=11 // pred_check
          %p486 = pneg %p276
        $region42: #{tpu_custom_call.1} parent=11 // pred_check_branch
          %488 = sbr.rel (%p486) target = $region44
        $region43: #{tpu_custom_call.1} parent=11 // pred_region
          _
        $region44: #{tpu_custom_call.1} parent=11 // pred_fallthru
          _
        // Predicated region
        $region45: #{tpu_custom_call.1} parent=11 // pred_check
          %p489 = pneg %p297
        $region46: #{tpu_custom_call.1} parent=11 // pred_check_branch
          %491 = sbr.rel (%p489) target = $region48
        $region47: #{tpu_custom_call.1} parent=11 // pred_region
          %493 = vsyncadd [#allocation9], 0
          %s494 = sshll.u32 %s11, 4
          %s495 = int_to_ptr.hbm [resolvable:$true] %s494
          %s496 = sshll.u32 [#allocation8], 4
          %s497 = int_to_ptr.vmem [resolvable:$true] %s496
          %502 = dma.hbm_to_vmem [thread:$0]  %s495, 2048, %s497, [#allocation9], 64, 64, 4
        $region48: #{tpu_custom_call.1} parent=11 // pred_fallthru
          _
        // Predicated region
        $region49: #{tpu_custom_call.1} parent=11 // pred_check
          %p503 = pneg %p318
        $region50: #{tpu_custom_call.1} parent=11 // pred_check_branch
          %505 = sbr.rel (%p503) target = $region52
        $region51: #{tpu_custom_call.1} parent=11 // pred_region
          _
        $region52: #{tpu_custom_call.1} parent=11 // pred_fallthru
          _
        // Predicated region
        $region53: #{tpu_custom_call.1} parent=11 // pred_check
          %p506 = pneg %p339
        $region54: #{tpu_custom_call.1} parent=11 // pred_check_branch
          %508 = sbr.rel (%p506) target = $region56
        $region55: #{tpu_custom_call.1} parent=11 // pred_region
          _
        $region56: #{tpu_custom_call.1} parent=11 // pred_fallthru
          _
        // Predicated region
        $region57: #{tpu_custom_call.1} parent=11 // pred_check
          %p509 = pneg %p360
        $region58: #{tpu_custom_call.1} parent=11 // pred_check_branch
          %511 = sbr.rel (%p509) target = $region60
        $region59: #{tpu_custom_call.1} parent=11 // pred_region
          _
        $region60: #{tpu_custom_call.1} parent=11 // pred_fallthru
          _
        // Predicated region
        $region61: #{tpu_custom_call.1} parent=11 // pred_check
          %p512 = pneg %p381
        $region62: #{tpu_custom_call.1} parent=11 // pred_check_branch
          %514 = sbr.rel (%p512) target = $region64
        $region63: #{tpu_custom_call.1} parent=11 // pred_region
          _
        $region64: #{tpu_custom_call.1} parent=11 // pred_fallthru
          _
        // Predicated region
        $region65: #{tpu_custom_call.1} parent=11 // pred_check
          %p515 = pneg %p402
        $region66: #{tpu_custom_call.1} parent=11 // pred_check_branch
          %517 = sbr.rel (%p515) target = $region68
        $region67: #{tpu_custom_call.1} parent=11 // pred_region
          _
        $region68: #{tpu_custom_call.1} parent=11 // pred_fallthru
          _
      $region12: #{tpu_custom_call.1} parent=5 // pred_fallthru
        _
      %p518 = scmp.lt.s32.totalorder %s30, 2
      // Predicated region
      $region69: #{tpu_custom_call.1} parent=5 // pred_check
        %p519 = pneg %p518
      $region70: #{tpu_custom_call.1} parent=5 // pred_check_branch
        %521 = sbr.rel (%p519) target = $region72
      $region71: #{tpu_custom_call.1} parent=5 // pred_region
        // Predicated region
        $region73: #{tpu_custom_call.1} parent=71 // pred_check
          %p522 = pneg %p50
        $region74: #{tpu_custom_call.1} parent=71 // pred_check_branch
          %524 = sbr.rel (%p522) target = $region76
        $region75: #{tpu_custom_call.1} parent=71 // pred_region
          %s525 = sand.u32 %s40, 1
          %s526 = scalar_lea.sflag [#allocation4], %s525
          %s527 = sand.u32 %s40, 1
          %s528 = smul.addr %s527, 128
          %s529 = scalar_lea.vmem [#allocation3], %s528
          %s530 = smul.u32 16, %s30
          %532 = vsyncadd %s526, 0
          %s533 = smul.addr %s530, 8
          %s534 = scalar_lea.hbm %s0, %s533
          %s535 = sshll.u32 %s534, 4
          %s536 = int_to_ptr.hbm [resolvable:$true] %s535
          %s537 = sshll.u32 %s529, 4
          %s538 = int_to_ptr.vmem [resolvable:$true] %s537
          %543 = dma.hbm_to_vmem [thread:$0]  %s536, 2048, %s538, %s526, 128, 128, 8
        $region76: #{tpu_custom_call.1} parent=71 // pred_fallthru
          _
        // Predicated region
        $region77: #{tpu_custom_call.1} parent=71 // pred_check
          %p544 = pneg %p76
        $region78: #{tpu_custom_call.1} parent=71 // pred_check_branch
          %546 = sbr.rel (%p544) target = $region80
        $region79: #{tpu_custom_call.1} parent=71 // pred_region
          %s547 = smul.u32 16, %s30
          %p548 = scmp.lt.s32.totalorder %s547, 31
          %s549 = scalar_select %p548, %s547, 31
          %s550 = scalar_lea.vmem %s1, %s549
          %s551 = smul.u32 16, %s30
        $region80: #{tpu_custom_call.1} parent=71 // pred_fallthru
          _
        // Predicated region
        $region81: #{tpu_custom_call.1} parent=71 // pred_check
          %p552 = pneg %p102
        $region82: #{tpu_custom_call.1} parent=71 // pred_check_branch
          %554 = sbr.rel (%p552) target = $region84
        $region83: #{tpu_custom_call.1} parent=71 // pred_region
          %s555 = smul.u32 2, %s30
          %p556 = scmp.lt.s32.totalorder %s555, 3
          %s557 = scalar_select %p556, %s555, 3
          %s558 = smul.addr %s557, 8
          %s559 = scalar_lea.vmem %s2, %s558
          %s560 = smul.u32 2, %s30
        $region84: #{tpu_custom_call.1} parent=71 // pred_fallthru
          _
      $region72: #{tpu_custom_call.1} parent=5 // pred_fallthru
        _
      %p561 = scmp.le.s32.totalorder 1, %s30
      %p562 = scmp.lt.s32.totalorder %s30, 3
      %p563 = pnand %p561, %p562
      %p564 = pneg %p563
      // Predicated region
      $region85: #{tpu_custom_call.1} parent=5 // pred_check
        _
      $region86: #{tpu_custom_call.1} parent=5 // pred_check_branch
        %566 = sbr.rel (%p563) target = $region88
      $region87: #{tpu_custom_call.1} parent=5 // pred_region
        %s567 = ssub.s32 %s30, 1
        %s568 = sand.u32 %s43, 1
        %s569 = scalar_lea.sflag [#allocation4], %s568
        %s570 = sand.u32 %s43, 1
        %s571 = smul.addr %s570, 128
        %s572 = scalar_lea.vmem [#allocation3], %s571
        // Predicated region
        $region89: #{tpu_custom_call.1} parent=87 // pred_check
          %p573 = pneg %p56
        $region90: #{tpu_custom_call.1} parent=87 // pred_check_branch
          %575 = sbr.rel (%p573) target = $region92
        $region91: #{tpu_custom_call.1} parent=87 // pred_region
          %577 = dma.done %s569, 2048
        $region92: #{tpu_custom_call.1} parent=87 // pred_fallthru
          _
        // Predicated region
        $region93: #{tpu_custom_call.1} parent=87 // pred_check
          %p578 = pneg %p129
        $region94: #{tpu_custom_call.1} parent=87 // pred_check_branch
          %580 = sbr.rel (%p578) target = $region96
        $region95: #{tpu_custom_call.1} parent=87 // pred_region
          %582 = dma.done [#allocation6], 3072
        $region96: #{tpu_custom_call.1} parent=87 // pred_fallthru
          _
        // Predicated region
        $region97: #{tpu_custom_call.1} parent=87 // pred_check
          %p583 = pneg %p255
        $region98: #{tpu_custom_call.1} parent=87 // pred_check_branch
          %585 = sbr.rel (%p583) target = $region100
        $region99: #{tpu_custom_call.1} parent=87 // pred_region
          %587 = dma.done [#allocation6], 2048
        $region100: #{tpu_custom_call.1} parent=87 // pred_fallthru
          _
        // Predicated region
        $region101: #{tpu_custom_call.1} parent=87 // pred_check
          %p588 = pneg %p297
        $region102: #{tpu_custom_call.1} parent=87 // pred_check_branch
          %590 = sbr.rel (%p588) target = $region104
        $region103: #{tpu_custom_call.1} parent=87 // pred_region
          %592 = dma.done [#allocation9], 2048
        $region104: #{tpu_custom_call.1} parent=87 // pred_fallthru
          _
        %s593 = sand.u32 %s43, 1
        %s594 = scalar_lea.sflag [#allocation4], %s593
        %s595 = sand.u32 %s43, 1
        %s596 = smul.addr %s595, 128
        %s597 = scalar_lea.vmem [#allocation3], %s596
        %p598 = pneg %p56
        %p599 = pneg %p53
        %s600 = smul.u32 16, %s35
        %p601 = scmp.lt.s32.totalorder %s600, 31
        %s602 = scalar_select %p601, %s600, 31
        %s603 = scalar_lea.vmem %s1, %s602
        %p604 = pneg %p82
        %p605 = pneg %p79
        %s606 = smul.u32 2, %s35
        %p607 = scmp.lt.s32.totalorder %s606, 3
        %s608 = scalar_select %p607, %s606, 3
        %s609 = smul.addr %s608, 8
        %s610 = scalar_lea.vmem %s2, %s609
        %p611 = pneg %p108
        %p612 = pneg %p105
        %p613 = pneg %p129
        %p614 = pneg %p126
        %p615 = pneg %p150
        %p616 = pneg %p147
        %p617 = pneg %p171
        %p618 = pneg %p168
        %p619 = pneg %p192
        %p620 = pneg %p189
        %p621 = pneg %p213
        %p622 = pneg %p210
        %p623 = pneg %p234
        %p624 = pneg %p231
        %p625 = pneg %p255
        %p626 = pneg %p252
        %p627 = pneg %p276
        %p628 = pneg %p273
        %p629 = pneg %p297
        %p630 = pneg %p294
        %p631 = pneg %p318
        %p632 = pneg %p315
        %p633 = pneg %p339
        %p634 = pneg %p336
        %p635 = pneg %p360
        %p636 = pneg %p357
        %p637 = pneg %p381
        %p638 = pneg %p378
        %p639 = pneg %p402
        %p640 = pneg %p399
        %p641 = pneg %p428
        %p642 = pneg %p425
        %s643 = smul.u32 2, %s35
        %p644 = scmp.lt.s32.totalorder %s643, 3
        %s645 = scalar_select %p644, %s643, 3
        %s646 = smul.addr %s645, 8
        %s647 = scalar_lea.vmem %s17, %s646
        %s648 = smul.u32 16, %s35
        %s649 = smul.u32 16, %s35
        %p650 = scmp.lt.s32.totalorder %s649, 31
        %s651 = scalar_select %p650, %s649, 31
        %s652 = scalar_lea.vmem %s1, %s651
        %s653 = smul.u32 16, %s35
        %s654 = smul.u32 2, %s35
        %p655 = scmp.lt.s32.totalorder %s654, 3
        %s656 = scalar_select %p655, %s654, 3
        %s657 = smul.addr %s656, 8
        %s658 = scalar_lea.vmem %s2, %s657
        %s659 = smul.u32 2, %s35
        %s660 = smul.u32 2, %s35
        %p661 = scmp.lt.s32.totalorder %s660, 3
        %s662 = scalar_select %p661, %s660, 3
        %s663 = smul.addr %s662, 8
        %s664 = scalar_lea.vmem %s17, %s663
        %s665 = smul.u32 2, %s35
        %v667 = vld [vmem:[%s572] sm:$0xff]
        %v668 = vld [vmem:[%s572 + $0x8] sm:$0xff]
        %v669 = vld [vmem:[%s572 + $0x10] sm:$0xff]
        %v670 = vld [vmem:[%s572 + $0x18] sm:$0xff]
        %v671 = vld [vmem:[%s572 + $0x20] sm:$0xff]
        %v672 = vld [vmem:[%s572 + $0x28] sm:$0xff]
        %v673 = vld [vmem:[%s572 + $0x30] sm:$0xff]
        %v674 = vld [vmem:[%s572 + $0x38] sm:$0xff]
        %v675 = vld [vmem:[%s572 + $0x40] sm:$0xff]
        %v676 = vld [vmem:[%s572 + $0x48] sm:$0xff]
        %v677 = vld [vmem:[%s572 + $0x50] sm:$0xff]
        %v678 = vld [vmem:[%s572 + $0x58] sm:$0xff]
        %v679 = vld [vmem:[%s572 + $0x60] sm:$0xff]
        %v680 = vld [vmem:[%s572 + $0x68] sm:$0xff]
        %v681 = vld [vmem:[%s572 + $0x70] sm:$0xff]
        %v682 = vld [vmem:[%s572 + $0x78] sm:$0xff]
        %v683 = vld [vmem:[%s652] sm:$0x1]
        %v684 = vld [vmem:[%s652 + $0x1] sm:$0x1]
        %v685 = vld [vmem:[%s652 + $0x2] sm:$0x1]
        %v686 = vld [vmem:[%s652 + $0x3] sm:$0x1]
        %v687 = vld [vmem:[%s652 + $0x4] sm:$0x1]
        %v688 = vld [vmem:[%s652 + $0x5] sm:$0x1]
        %v689 = vld [vmem:[%s652 + $0x6] sm:$0x1]
        %v690 = vld [vmem:[%s652 + $0x7] sm:$0x1]
        %v691 = vld [vmem:[%s652 + $0x8] sm:$0x1]
        %v692 = vld [vmem:[%s652 + $0x9] sm:$0x1]
        %v693 = vld [vmem:[%s652 + $0xa] sm:$0x1]
        %v694 = vld [vmem:[%s652 + $0xb] sm:$0x1]
        %v695 = vld [vmem:[%s652 + $0xc] sm:$0x1]
        %v696 = vld [vmem:[%s652 + $0xd] sm:$0x1]
        %v697 = vld [vmem:[%s652 + $0xe] sm:$0x1]
        %v698 = vld [vmem:[%s652 + $0xf] sm:$0x1]
        %v699 = vld [vmem:[%s658] sm:$0xff]
        %v700 = vld [vmem:[%s658 + $0x8] sm:$0xff]
        %v701 = vld [vmem:[#allocation5] sm:$0xff]
        %v702 = vld [vmem:[#allocation5 + $0x8] sm:$0xf]
        %v703 = vld [vmem:[#allocation5 + $0xc] sm:$0xff]
        %v704 = vld [vmem:[#allocation5 + $0x14] sm:$0xf]
        %v705 = vld [vmem:[#allocation5 + $0x18] sm:$0xff]
        %v706 = vld [vmem:[#allocation5 + $0x20] sm:$0xf]
        %v707 = vld [vmem:[#allocation5 + $0x24] sm:$0xff]
        %v708 = vld [vmem:[#allocation5 + $0x2c] sm:$0xf]
        %v709 = vld [vmem:[#allocation5 + $0x30] sm:$0xff]
        %v710 = vld [vmem:[#allocation5 + $0x38] sm:$0xf]
        %v711 = vld [vmem:[#allocation5 + $0x3c] sm:$0xff]
        %v712 = vld [vmem:[#allocation5 + $0x44] sm:$0xf]
        %v713 = vld [vmem:[#allocation5 + $0x48] sm:$0xff]
        %v714 = vld [vmem:[#allocation5 + $0x50] sm:$0xf]
        %v715 = vld [vmem:[#allocation5 + $0x54] sm:$0xff]
        %v716 = vld [vmem:[#allocation5 + $0x5c] sm:$0xf]
        %v717 = vld [vmem:[#allocation5 + $0x60] sm:$0xff]
        %v718 = vld [vmem:[#allocation5 + $0x68] sm:$0xf]
        %v719 = vld [vmem:[#allocation5 + $0x6c] sm:$0xff]
        %v720 = vld [vmem:[#allocation5 + $0x74] sm:$0xf]
        %v721 = vld [vmem:[#allocation5 + $0x78] sm:$0xff]
        %v722 = vld [vmem:[#allocation5 + $0x80] sm:$0xf]
        %v723 = vld [vmem:[#allocation5 + $0x84] sm:$0xff]
        %v724 = vld [vmem:[#allocation5 + $0x8c] sm:$0xf]
        %v725 = vld [vmem:[#allocation5 + $0x90] sm:$0xff]
        %v726 = vld [vmem:[#allocation5 + $0x98] sm:$0xf]
        %v727 = vld [vmem:[#allocation5 + $0x9c] sm:$0xff]
        %v728 = vld [vmem:[#allocation5 + $0xa4] sm:$0xf]
        %v729 = vld [vmem:[#allocation5 + $0xa8] sm:$0xff]
        %v730 = vld [vmem:[#allocation5 + $0xb0] sm:$0xf]
        %v731 = vld [vmem:[#allocation5 + $0xb4] sm:$0xff]
        %v732 = vld [vmem:[#allocation5 + $0xbc] sm:$0xf]
        %v733 = vld [vmem:[%s4] sm:$0x7]
        %v734 = vld [vmem:[%s5] sm:$0xf]
        %v735 = vld [vmem:[%s5 + $0x4] sm:$0xf]
        %v736 = vld [vmem:[%s5 + $0x8] sm:$0xf]
        %v737 = vld [vmem:[%s5 + $0xc] sm:$0xf]
        %v738 = vld [vmem:[%s5 + $0x10] sm:$0xf]
        %v739 = vld [vmem:[%s5 + $0x14] sm:$0xf]
        %v740 = vld [vmem:[%s5 + $0x18] sm:$0xf]
        %v741 = vld [vmem:[%s5 + $0x1c] sm:$0xf]
        %v742 = vld [vmem:[%s5 + $0x20] sm:$0xf]
        %v743 = vld [vmem:[%s5 + $0x24] sm:$0xf]
        %v744 = vld [vmem:[%s5 + $0x28] sm:$0xf]
        %v745 = vld [vmem:[%s5 + $0x2c] sm:$0xf]
        %v746 = vld [vmem:[%s5 + $0x30] sm:$0xf]
        %v747 = vld [vmem:[%s5 + $0x34] sm:$0xf]
        %v748 = vld [vmem:[%s5 + $0x38] sm:$0xf]
        %v749 = vld [vmem:[%s5 + $0x3c] sm:$0xf]
        %v750 = vld [vmem:[%s6] sm:$0x1]
        %v751 = vld [vmem:[%s7] sm:$0x1]
        %v752 = vld [vmem:[%s8] sm:$0x1]
        %v753 = vld [vmem:[#allocation7] sm:$0xff]
        %v754 = vld [vmem:[#allocation7 + $0x8] sm:$0xff]
        %v755 = vld [vmem:[#allocation7 + $0x10] sm:$0xff]
        %v756 = vld [vmem:[#allocation7 + $0x18] sm:$0xff]
        %v757 = vld [vmem:[#allocation7 + $0x20] sm:$0xff]
        %v758 = vld [vmem:[#allocation7 + $0x28] sm:$0xff]
        %v759 = vld [vmem:[#allocation7 + $0x30] sm:$0xff]
        %v760 = vld [vmem:[#allocation7 + $0x38] sm:$0xff]
        %v761 = vld [vmem:[#allocation7 + $0x40] sm:$0xff]
        %v762 = vld [vmem:[#allocation7 + $0x48] sm:$0xff]
        %v763 = vld [vmem:[#allocation7 + $0x50] sm:$0xff]
        %v764 = vld [vmem:[#allocation7 + $0x58] sm:$0xff]
        %v765 = vld [vmem:[#allocation7 + $0x60] sm:$0xff]
        %v766 = vld [vmem:[#allocation7 + $0x68] sm:$0xff]
        %v767 = vld [vmem:[#allocation7 + $0x70] sm:$0xff]
        %v768 = vld [vmem:[#allocation7 + $0x78] sm:$0xff]
        %v769 = vld [vmem:[%s10] sm:$0x3]
        %v770 = vld [vmem:[#allocation8] sm:$0xf]
        %v771 = vld [vmem:[#allocation8 + $0x4] sm:$0xf]
        %v772 = vld [vmem:[#allocation8 + $0x8] sm:$0xf]
        %v773 = vld [vmem:[#allocation8 + $0xc] sm:$0xf]
        %v774 = vld [vmem:[#allocation8 + $0x10] sm:$0xf]
        %v775 = vld [vmem:[#allocation8 + $0x14] sm:$0xf]
        %v776 = vld [vmem:[#allocation8 + $0x18] sm:$0xf]
        %v777 = vld [vmem:[#allocation8 + $0x1c] sm:$0xf]
        %v778 = vld [vmem:[#allocation8 + $0x20] sm:$0xf]
        %v779 = vld [vmem:[#allocation8 + $0x24] sm:$0xf]
        %v780 = vld [vmem:[#allocation8 + $0x28] sm:$0xf]
        %v781 = vld [vmem:[#allocation8 + $0x2c] sm:$0xf]
        %v782 = vld [vmem:[#allocation8 + $0x30] sm:$0xf]
        %v783 = vld [vmem:[#allocation8 + $0x34] sm:$0xf]
        %v784 = vld [vmem:[#allocation8 + $0x38] sm:$0xf]
        %v785 = vld [vmem:[#allocation8 + $0x3c] sm:$0xf]
        %v786 = vld [vmem:[#allocation8 + $0x40] sm:$0xf]
        %v787 = vld [vmem:[#allocation8 + $0x44] sm:$0xf]
        %v788 = vld [vmem:[#allocation8 + $0x48] sm:$0xf]
        %v789 = vld [vmem:[#allocation8 + $0x4c] sm:$0xf]
        %v790 = vld [vmem:[#allocation8 + $0x50] sm:$0xf]
        %v791 = vld [vmem:[#allocation8 + $0x54] sm:$0xf]
        %v792 = vld [vmem:[#allocation8 + $0x58] sm:$0xf]
        %v793 = vld [vmem:[#allocation8 + $0x5c] sm:$0xf]
        %v794 = vld [vmem:[#allocation8 + $0x60] sm:$0xf]
        %v795 = vld [vmem:[#allocation8 + $0x64] sm:$0xf]
        %v796 = vld [vmem:[#allocation8 + $0x68] sm:$0xf]
        %v797 = vld [vmem:[#allocation8 + $0x6c] sm:$0xf]
        %v798 = vld [vmem:[#allocation8 + $0x70] sm:$0xf]
        %v799 = vld [vmem:[#allocation8 + $0x74] sm:$0xf]
        %v800 = vld [vmem:[#allocation8 + $0x78] sm:$0xf]
        %v801 = vld [vmem:[#allocation8 + $0x7c] sm:$0xf]
        %v802 = vld [vmem:[%s12] sm:$0x1]
        %v803 = vld [vmem:[%s13] sm:$0x1]
        %v804 = vld [vmem:[%s14] sm:$0x1]
        %v805 = vld [vmem:[%s15] sm:$0x1]
        %v806 = vld [vmem:[#allocation2] sm:$0x1]
        %v807 = vpack.c.bf16 %v668, %v667
        %v808 = vpack.c.bf16 %v670, %v669
        %v809 = vpack.c.bf16 %v672, %v671
        %v810 = vpack.c.bf16 %v674, %v673
        %v811 = vpack.c.bf16 %v676, %v675
        %v812 = vpack.c.bf16 %v678, %v677
        %v813 = vpack.c.bf16 %v680, %v679
        %v814 = vpack.c.bf16 %v682, %v681
        %v816 = vperm.slane %v733, 0
        %v817 = vperm.slane %v733, 1
        %v818 = vperm.slane %v733, 2
        %v854 = vunpack.c.l.b16 %v701
        %v855 = vunpack.c.h.b16 %v701
        %v856 = vunpack.c.l.b16 %v702
        %v857 = vunpack.c.l.b16 %v703
        %v858 = vunpack.c.h.b16 %v703
        %v859 = vunpack.c.l.b16 %v704
        %v860 = vunpack.c.l.b16 %v705
        %v861 = vunpack.c.h.b16 %v705
        %v862 = vunpack.c.l.b16 %v706
        %v863 = vunpack.c.l.b16 %v707
        %v864 = vunpack.c.h.b16 %v707
        %v865 = vunpack.c.l.b16 %v708
        %v866 = vunpack.c.l.b16 %v709
        %v867 = vunpack.c.h.b16 %v709
        %v868 = vunpack.c.l.b16 %v710
        %v869 = vunpack.c.l.b16 %v711
        %v870 = vunpack.c.h.b16 %v711
        %v871 = vunpack.c.l.b16 %v712
        %v872 = vunpack.c.l.b16 %v713
        %v873 = vunpack.c.h.b16 %v713
        %v874 = vunpack.c.l.b16 %v714
        %v875 = vunpack.c.l.b16 %v715
        %v876 = vunpack.c.h.b16 %v715
        %v877 = vunpack.c.l.b16 %v716
        %v878 = vunpack.c.l.b16 %v717
        %v879 = vunpack.c.h.b16 %v717
        %v880 = vunpack.c.l.b16 %v718
        %v881 = vunpack.c.l.b16 %v719
        %v882 = vunpack.c.h.b16 %v719
        %v883 = vunpack.c.l.b16 %v720
        %v884 = vunpack.c.l.b16 %v721
        %v885 = vunpack.c.h.b16 %v721
        %v886 = vunpack.c.l.b16 %v722
        %v887 = vunpack.c.l.b16 %v723
        %v888 = vunpack.c.h.b16 %v723
        %v889 = vunpack.c.l.b16 %v724
        %v890 = vunpack.c.l.b16 %v725
        %v891 = vunpack.c.h.b16 %v725
        %v892 = vunpack.c.l.b16 %v726
        %v893 = vunpack.c.l.b16 %v727
        %v894 = vunpack.c.h.b16 %v727
        %v895 = vunpack.c.l.b16 %v728
        %v896 = vunpack.c.l.b16 %v729
        %v897 = vunpack.c.h.b16 %v729
        %v898 = vunpack.c.l.b16 %v730
        %v899 = vunpack.c.l.b16 %v731
        %v900 = vunpack.c.h.b16 %v731
        %v901 = vunpack.c.l.b16 %v732
        %v902 = vpack.c.b16 %v857, %v854
        %v903 = vpack.c.b16 %v858, %v855
        %v904 = vpack.c.b16 %v859, %v856
        %v905 = vpack.c.b16 %v863, %v860
        %v906 = vpack.c.b16 %v864, %v861
        %v907 = vpack.c.b16 %v865, %v862
        %v908 = vpack.c.b16 %v869, %v866
        %v909 = vpack.c.b16 %v870, %v867
        %v910 = vpack.c.b16 %v871, %v868
        %v911 = vpack.c.b16 %v875, %v872
        %v912 = vpack.c.b16 %v876, %v873
        %v913 = vpack.c.b16 %v877, %v874
        %v914 = vpack.c.b16 %v881, %v878
        %v915 = vpack.c.b16 %v882, %v879
        %v916 = vpack.c.b16 %v883, %v880
        %v917 = vpack.c.b16 %v887, %v884
        %v918 = vpack.c.b16 %v888, %v885
        %v919 = vpack.c.b16 %v889, %v886
        %v920 = vpack.c.b16 %v893, %v890
        %v921 = vpack.c.b16 %v894, %v891
        %v922 = vpack.c.b16 %v895, %v892
        %v923 = vpack.c.b16 %v899, %v896
        %v924 = vpack.c.b16 %v900, %v897
        %v925 = vpack.c.b16 %v901, %v898
        %950 = vmatpush.bf16.msra.mxu0 %v923
        %951 = vmatpush.bf16.msra.mxu0 %v920
        %952 = vmatpush.bf16.msra.mxu0 %v917
        %953 = vmatpush.bf16.msra.mxu0 %v914
        %954 = vmatpush.bf16.msra.mxu0 %v911
        %955 = vmatpush.bf16.msra.mxu0 %v908
        %956 = vmatpush.bf16.msra.mxu0 %v905
        %957 = vmatpush.bf16.msra.mxu0 %v902
        %958 = vmatmul.bf16.gmra.mxu0 %v807
        %v959 = vpop.f32.mrf.mxu0
        %v960 = vadd.f32 %v816, %v959
        %v961 = vpop.f32.mrf.mxu0
        %v962 = vadd.f32 %v816, %v961
        %963 = vmatmul.bf16.gmra.mxu0 %v808
        %v964 = vpop.f32.mrf.mxu0
        %v965 = vadd.f32 %v816, %v964
        %v966 = vpop.f32.mrf.mxu0
        %v967 = vadd.f32 %v816, %v966
        %968 = vmatmul.bf16.gmra.mxu0 %v809
        %v969 = vpop.f32.mrf.mxu0
        %v970 = vadd.f32 %v816, %v969
        %v971 = vpop.f32.mrf.mxu0
        %v972 = vadd.f32 %v816, %v971
        %973 = vmatmul.bf16.gmra.mxu0 %v810
        %v974 = vpop.f32.mrf.mxu0
        %v975 = vadd.f32 %v816, %v974
        %v976 = vpop.f32.mrf.mxu0
        %v977 = vadd.f32 %v816, %v976
        %978 = vmatmul.bf16.gmra.mxu0 %v811
        %v979 = vpop.f32.mrf.mxu0
        %v980 = vadd.f32 %v816, %v979
        %v981 = vpop.f32.mrf.mxu0
        %v982 = vadd.f32 %v816, %v981
        %983 = vmatmul.bf16.gmra.mxu0 %v812
        %v984 = vpop.f32.mrf.mxu0
        %v985 = vadd.f32 %v816, %v984
        %v986 = vpop.f32.mrf.mxu0
        %v987 = vadd.f32 %v816, %v986
        %988 = vmatmul.bf16.gmra.mxu0 %v813
        %v989 = vpop.f32.mrf.mxu0
        %v990 = vadd.f32 %v816, %v989
        %v991 = vpop.f32.mrf.mxu0
        %v992 = vadd.f32 %v816, %v991
        %993 = vmatmul.bf16.gmra.mxu0 %v814
        %v994 = vpop.f32.mrf.mxu0
        %v995 = vadd.f32 %v816, %v994
        %v996 = vpop.f32.mrf.mxu0
        %v997 = vadd.f32 %v816, %v996
        %998 = vdwg.mxu0
        %999 = vmatpush.bf16.msra.mxu0 %v924
        %1000 = vmatpush.bf16.msra.mxu0 %v921
        %1001 = vmatpush.bf16.msra.mxu0 %v918
        %1002 = vmatpush.bf16.msra.mxu0 %v915
        %1003 = vmatpush.bf16.msra.mxu0 %v912
        %1004 = vmatpush.bf16.msra.mxu0 %v909
        %1005 = vmatpush.bf16.msra.mxu0 %v906
        %1006 = vmatpush.bf16.msra.mxu0 %v903
        %1007 = vmatmul.bf16.gmra.mxu0 %v807
        %v1008 = vpop.f32.mrf.mxu0
        %v1009 = vadd.f32 %v817, %v1008
        %v1010 = vpop.f32.mrf.mxu0
        %v1011 = vadd.f32 %v817, %v1010
        %1012 = vmatmul.bf16.gmra.mxu0 %v808
        %v1013 = vpop.f32.mrf.mxu0
        %v1014 = vadd.f32 %v817, %v1013
        %v1015 = vpop.f32.mrf.mxu0
        %v1016 = vadd.f32 %v817, %v1015
        %1017 = vmatmul.bf16.gmra.mxu0 %v809
        %v1018 = vpop.f32.mrf.mxu0
        %v1019 = vadd.f32 %v817, %v1018
        %v1020 = vpop.f32.mrf.mxu0
        %v1021 = vadd.f32 %v817, %v1020
        %1022 = vmatmul.bf16.gmra.mxu0 %v810
        %v1023 = vpop.f32.mrf.mxu0
        %v1024 = vadd.f32 %v817, %v1023
        %v1025 = vpop.f32.mrf.mxu0
        %v1026 = vadd.f32 %v817, %v1025
        %1027 = vmatmul.bf16.gmra.mxu0 %v811
        %v1028 = vpop.f32.mrf.mxu0
        %v1029 = vadd.f32 %v817, %v1028
        %v1030 = vpop.f32.mrf.mxu0
        %v1031 = vadd.f32 %v817, %v1030
        %1032 = vmatmul.bf16.gmra.mxu0 %v812
        %v1033 = vpop.f32.mrf.mxu0
        %v1034 = vadd.f32 %v817, %v1033
        %v1035 = vpop.f32.mrf.mxu0
        %v1036 = vadd.f32 %v817, %v1035
        %1037 = vmatmul.bf16.gmra.mxu0 %v813
        %v1038 = vpop.f32.mrf.mxu0
        %v1039 = vadd.f32 %v817, %v1038
        %v1040 = vpop.f32.mrf.mxu0
        %v1041 = vadd.f32 %v817, %v1040
        %1042 = vmatmul.bf16.gmra.mxu0 %v814
        %v1043 = vpop.f32.mrf.mxu0
        %v1044 = vadd.f32 %v817, %v1043
        %v1045 = vpop.f32.mrf.mxu0
        %v1046 = vadd.f32 %v817, %v1045
        %1047 = vdwg.mxu0
        %1048 = vmatpush.bf16.msra.mxu0 %v925
        %1049 = vmatpush.bf16.msra.mxu0 %v922
        %1050 = vmatpush.bf16.msra.mxu0 %v919
        %1051 = vmatpush.bf16.msra.mxu0 %v916
        %1052 = vmatpush.bf16.msra.mxu0 %v913
        %1053 = vmatpush.bf16.msra.mxu0 %v910
        %1054 = vmatpush.bf16.msra.mxu0 %v907
        %1055 = vmatpush.bf16.msra.mxu0 %v904
        %1056 = vmatmul.bf16.gmra.mxu0 %v807
        %v1057 = vpop.f32.mrf.mxu0
        %v1058 = vadd.f32 %v818, %v1057
        %v1059 = vpop.f32.mrf.mxu0
        %v1060 = vadd.f32 %v818, %v1059
        %1061 = vmatmul.bf16.gmra.mxu0 %v808
        %v1062 = vpop.f32.mrf.mxu0
        %v1063 = vadd.f32 %v818, %v1062
        %v1064 = vpop.f32.mrf.mxu0
        %v1065 = vadd.f32 %v818, %v1064
        %1066 = vmatmul.bf16.gmra.mxu0 %v809
        %v1067 = vpop.f32.mrf.mxu0
        %v1068 = vadd.f32 %v818, %v1067
        %v1069 = vpop.f32.mrf.mxu0
        %v1070 = vadd.f32 %v818, %v1069
        %1071 = vmatmul.bf16.gmra.mxu0 %v810
        %v1072 = vpop.f32.mrf.mxu0
        %v1073 = vadd.f32 %v818, %v1072
        %v1074 = vpop.f32.mrf.mxu0
        %v1075 = vadd.f32 %v818, %v1074
        %1076 = vmatmul.bf16.gmra.mxu0 %v811
        %v1077 = vpop.f32.mrf.mxu0
        %v1078 = vadd.f32 %v818, %v1077
        %v1079 = vpop.f32.mrf.mxu0
        %v1080 = vadd.f32 %v818, %v1079
        %1081 = vmatmul.bf16.gmra.mxu0 %v812
        %v1082 = vpop.f32.mrf.mxu0
        %v1083 = vadd.f32 %v818, %v1082
        %v1084 = vpop.f32.mrf.mxu0
        %v1085 = vadd.f32 %v818, %v1084
        %1086 = vmatmul.bf16.gmra.mxu0 %v813
        %v1087 = vpop.f32.mrf.mxu0
        %v1088 = vadd.f32 %v818, %v1087
        %v1089 = vpop.f32.mrf.mxu0
        %v1090 = vadd.f32 %v818, %v1089
        %1091 = vmatmul.bf16.gmra.mxu0 %v814
        %v1092 = vpop.f32.mrf.mxu0
        %v1093 = vadd.f32 %v818, %v1092
        %v1094 = vpop.f32.mrf.mxu0
        %v1095 = vadd.f32 %v818, %v1094
        %1096 = vdwg.mxu0
        %v1097 = vpack.c.bf16 %v960, %v960
        %v1098 = vpack.c.bf16 %v962, %v962
        %v1099 = vpack.c.bf16 %v965, %v965
        %v1100 = vpack.c.bf16 %v967, %v967
        %v1101 = vpack.c.bf16 %v970, %v970
        %v1102 = vpack.c.bf16 %v972, %v972
        %v1103 = vpack.c.bf16 %v975, %v975
        %v1104 = vpack.c.bf16 %v977, %v977
        %v1105 = vpack.c.bf16 %v980, %v980
        %v1106 = vpack.c.bf16 %v982, %v982
        %v1107 = vpack.c.bf16 %v985, %v985
        %v1108 = vpack.c.bf16 %v987, %v987
        %v1109 = vpack.c.bf16 %v990, %v990
        %v1110 = vpack.c.bf16 %v992, %v992
        %v1111 = vpack.c.bf16 %v995, %v995
        %v1112 = vpack.c.bf16 %v997, %v997
        %v1113 = vpack.c.bf16 %v1009, %v1009
        %v1114 = vpack.c.bf16 %v1011, %v1011
        %v1115 = vpack.c.bf16 %v1014, %v1014
        %v1116 = vpack.c.bf16 %v1016, %v1016
        %v1117 = vpack.c.bf16 %v1019, %v1019
        %v1118 = vpack.c.bf16 %v1021, %v1021
        %v1119 = vpack.c.bf16 %v1024, %v1024
        %v1120 = vpack.c.bf16 %v1026, %v1026
        %v1121 = vpack.c.bf16 %v1029, %v1029
        %v1122 = vpack.c.bf16 %v1031, %v1031
        %v1123 = vpack.c.bf16 %v1034, %v1034
        %v1124 = vpack.c.bf16 %v1036, %v1036
        %v1125 = vpack.c.bf16 %v1039, %v1039
        %v1126 = vpack.c.bf16 %v1041, %v1041
        %v1127 = vpack.c.bf16 %v1044, %v1044
        %v1128 = vpack.c.bf16 %v1046, %v1046
        %v1129 = vpack.c.bf16 %v1058, %v1058
        %v1130 = vpack.c.bf16 %v1060, %v1060
        %v1131 = vpack.c.bf16 %v1063, %v1063
        %v1132 = vpack.c.bf16 %v1065, %v1065
        %v1133 = vpack.c.bf16 %v1068, %v1068
        %v1134 = vpack.c.bf16 %v1070, %v1070
        %v1135 = vpack.c.bf16 %v1073, %v1073
        %v1136 = vpack.c.bf16 %v1075, %v1075
        %v1137 = vpack.c.bf16 %v1078, %v1078
        %v1138 = vpack.c.bf16 %v1080, %v1080
        %v1139 = vpack.c.bf16 %v1083, %v1083
        %v1140 = vpack.c.bf16 %v1085, %v1085
        %v1141 = vpack.c.bf16 %v1088, %v1088
        %v1142 = vpack.c.bf16 %v1090, %v1090
        %v1143 = vpack.c.bf16 %v1093, %v1093
        %v1144 = vpack.c.bf16 %v1095, %v1095
        %v1161 = vperm.slane %v683, 0
        %v1162 = vperm.slane %v684, 0
        %v1163 = vperm.slane %v685, 0
        %v1164 = vperm.slane %v686, 0
        %v1165 = vperm.slane %v687, 0
        %v1166 = vperm.slane %v688, 0
        %v1167 = vperm.slane %v689, 0
        %v1168 = vperm.slane %v690, 0
        %v1169 = vperm.slane %v691, 0
        %v1170 = vperm.slane %v692, 0
        %v1171 = vperm.slane %v693, 0
        %v1172 = vperm.slane %v694, 0
        %v1173 = vperm.slane %v695, 0
        %v1174 = vperm.slane %v696, 0
        %v1175 = vperm.slane %v697, 0
        %v1176 = vperm.slane %v698, 0
        %1193 = vmatpush.bf16.xpose.msra.mxu0 0
        %1194 = vmatpush.bf16.xpose.msra.mxu0 0
        %1195 = vmatpush.bf16.xpose.msra.mxu0 0
        %1196 = vmatpush.bf16.xpose.msra.mxu0 0
        %1197 = vmatpush.bf16.xpose.msra.mxu0 0
        %1198 = vmatpush.bf16.xpose.msra.mxu0 0
        %1199 = vmatpush.bf16.xpose.msra.mxu0 0
        %1200 = vmatpush.bf16.xpose.msra.mxu0 %v1113
        %1201 = vmatmul.bf16.gmra.mxu0 %v1097
        %v1202 = vpop.f32.mrf.mxu0
        %v1203 = vadd.f32 %v1161, %v1202
        %v1204 = vpop.f32.mrf.mxu0
        %1205 = vdwg.mxu0
        %1206 = vmatpush.bf16.xpose.msra.mxu0 0
        %1207 = vmatpush.bf16.xpose.msra.mxu0 0
        %1208 = vmatpush.bf16.xpose.msra.mxu0 0
        %1209 = vmatpush.bf16.xpose.msra.mxu0 0
        %1210 = vmatpush.bf16.xpose.msra.mxu0 0
        %1211 = vmatpush.bf16.xpose.msra.mxu0 0
        %1212 = vmatpush.bf16.xpose.msra.mxu0 0
        %1213 = vmatpush.bf16.xpose.msra.mxu0 %v1114
        %1214 = vmatmul.bf16.gmra.mxu0 %v1098
        %v1215 = vpop.f32.mrf.mxu0
        %v1216 = vadd.f32 %v1162, %v1215
        %v1217 = vpop.f32.mrf.mxu0
        %1218 = vdwg.mxu0
        %1219 = vmatpush.bf16.xpose.msra.mxu0 0
        %1220 = vmatpush.bf16.xpose.msra.mxu0 0
        %1221 = vmatpush.bf16.xpose.msra.mxu0 0
        %1222 = vmatpush.bf16.xpose.msra.mxu0 0
        %1223 = vmatpush.bf16.xpose.msra.mxu0 0
        %1224 = vmatpush.bf16.xpose.msra.mxu0 0
        %1225 = vmatpush.bf16.xpose.msra.mxu0 0
        %1226 = vmatpush.bf16.xpose.msra.mxu0 %v1115
        %1227 = vmatmul.bf16.gmra.mxu0 %v1099
        %v1228 = vpop.f32.mrf.mxu0
        %v1229 = vadd.f32 %v1163, %v1228
        %v1230 = vpop.f32.mrf.mxu0
        %1231 = vdwg.mxu0
        %1232 = vmatpush.bf16.xpose.msra.mxu0 0
        %1233 = vmatpush.bf16.xpose.msra.mxu0 0
        %1234 = vmatpush.bf16.xpose.msra.mxu0 0
        %1235 = vmatpush.bf16.xpose.msra.mxu0 0
        %1236 = vmatpush.bf16.xpose.msra.mxu0 0
        %1237 = vmatpush.bf16.xpose.msra.mxu0 0
        %1238 = vmatpush.bf16.xpose.msra.mxu0 0
        %1239 = vmatpush.bf16.xpose.msra.mxu0 %v1116
        %1240 = vmatmul.bf16.gmra.mxu0 %v1100
        %v1241 = vpop.f32.mrf.mxu0
        %v1242 = vadd.f32 %v1164, %v1241
        %v1243 = vpop.f32.mrf.mxu0
        %1244 = vdwg.mxu0
        %1245 = vmatpush.bf16.xpose.msra.mxu0 0
        %1246 = vmatpush.bf16.xpose.msra.mxu0 0
        %1247 = vmatpush.bf16.xpose.msra.mxu0 0
        %1248 = vmatpush.bf16.xpose.msra.mxu0 0
        %1249 = vmatpush.bf16.xpose.msra.mxu0 0
        %1250 = vmatpush.bf16.xpose.msra.mxu0 0
        %1251 = vmatpush.bf16.xpose.msra.mxu0 0
        %1252 = vmatpush.bf16.xpose.msra.mxu0 %v1117
        %1253 = vmatmul.bf16.gmra.mxu0 %v1101
        %v1254 = vpop.f32.mrf.mxu0
        %v1255 = vadd.f32 %v1165, %v1254
        %v1256 = vpop.f32.mrf.mxu0
        %1257 = vdwg.mxu0
        %1258 = vmatpush.bf16.xpose.msra.mxu0 0
        %1259 = vmatpush.bf16.xpose.msra.mxu0 0
        %1260 = vmatpush.bf16.xpose.msra.mxu0 0
        %1261 = vmatpush.bf16.xpose.msra.mxu0 0
        %1262 = vmatpush.bf16.xpose.msra.mxu0 0
        %1263 = vmatpush.bf16.xpose.msra.mxu0 0
        %1264 = vmatpush.bf16.xpose.msra.mxu0 0
        %1265 = vmatpush.bf16.xpose.msra.mxu0 %v1118
        %1266 = vmatmul.bf16.gmra.mxu0 %v1102
        %v1267 = vpop.f32.mrf.mxu0
        %v1268 = vadd.f32 %v1166, %v1267
        %v1269 = vpop.f32.mrf.mxu0
        %1270 = vdwg.mxu0
        %1271 = vmatpush.bf16.xpose.msra.mxu0 0
        %1272 = vmatpush.bf16.xpose.msra.mxu0 0
        %1273 = vmatpush.bf16.xpose.msra.mxu0 0
        %1274 = vmatpush.bf16.xpose.msra.mxu0 0
        %1275 = vmatpush.bf16.xpose.msra.mxu0 0
        %1276 = vmatpush.bf16.xpose.msra.mxu0 0
        %1277 = vmatpush.bf16.xpose.msra.mxu0 0
        %1278 = vmatpush.bf16.xpose.msra.mxu0 %v1119
        %1279 = vmatmul.bf16.gmra.mxu0 %v1103
        %v1280 = vpop.f32.mrf.mxu0
        %v1281 = vadd.f32 %v1167, %v1280
        %v1282 = vpop.f32.mrf.mxu0
        %1283 = vdwg.mxu0
        %1284 = vmatpush.bf16.xpose.msra.mxu0 0
        %1285 = vmatpush.bf16.xpose.msra.mxu0 0
        %1286 = vmatpush.bf16.xpose.msra.mxu0 0
        %1287 = vmatpush.bf16.xpose.msra.mxu0 0
        %1288 = vmatpush.bf16.xpose.msra.mxu0 0
        %1289 = vmatpush.bf16.xpose.msra.mxu0 0
        %1290 = vmatpush.bf16.xpose.msra.mxu0 0
        %1291 = vmatpush.bf16.xpose.msra.mxu0 %v1120
        %1292 = vmatmul.bf16.gmra.mxu0 %v1104
        %v1293 = vpop.f32.mrf.mxu0
        %v1294 = vadd.f32 %v1168, %v1293
        %v1295 = vpop.f32.mrf.mxu0
        %1296 = vdwg.mxu0
        %1297 = vmatpush.bf16.xpose.msra.mxu0 0
        %1298 = vmatpush.bf16.xpose.msra.mxu0 0
        %1299 = vmatpush.bf16.xpose.msra.mxu0 0
        %1300 = vmatpush.bf16.xpose.msra.mxu0 0
        %1301 = vmatpush.bf16.xpose.msra.mxu0 0
        %1302 = vmatpush.bf16.xpose.msra.mxu0 0
        %1303 = vmatpush.bf16.xpose.msra.mxu0 0
        %1304 = vmatpush.bf16.xpose.msra.mxu0 %v1121
        %1305 = vmatmul.bf16.gmra.mxu0 %v1105
        %v1306 = vpop.f32.mrf.mxu0
        %v1307 = vadd.f32 %v1169, %v1306
        %v1308 = vpop.f32.mrf.mxu0
        %1309 = vdwg.mxu0
        %1310 = vmatpush.bf16.xpose.msra.mxu0 0
        %1311 = vmatpush.bf16.xpose.msra.mxu0 0
        %1312 = vmatpush.bf16.xpose.msra.mxu0 0
        %1313 = vmatpush.bf16.xpose.msra.mxu0 0
        %1314 = vmatpush.bf16.xpose.msra.mxu0 0
        %1315 = vmatpush.bf16.xpose.msra.mxu0 0
        %1316 = vmatpush.bf16.xpose.msra.mxu0 0
        %1317 = vmatpush.bf16.xpose.msra.mxu0 %v1122
        %1318 = vmatmul.bf16.gmra.mxu0 %v1106
        %v1319 = vpop.f32.mrf.mxu0
        %v1320 = vadd.f32 %v1170, %v1319
        %v1321 = vpop.f32.mrf.mxu0
        %1322 = vdwg.mxu0
        %1323 = vmatpush.bf16.xpose.msra.mxu0 0
        %1324 = vmatpush.bf16.xpose.msra.mxu0 0
        %1325 = vmatpush.bf16.xpose.msra.mxu0 0
        %1326 = vmatpush.bf16.xpose.msra.mxu0 0
        %1327 = vmatpush.bf16.xpose.msra.mxu0 0
        %1328 = vmatpush.bf16.xpose.msra.mxu0 0
        %1329 = vmatpush.bf16.xpose.msra.mxu0 0
        %1330 = vmatpush.bf16.xpose.msra.mxu0 %v1123
        %1331 = vmatmul.bf16.gmra.mxu0 %v1107
        %v1332 = vpop.f32.mrf.mxu0
        %v1333 = vadd.f32 %v1171, %v1332
        %v1334 = vpop.f32.mrf.mxu0
        %1335 = vdwg.mxu0
        %1336 = vmatpush.bf16.xpose.msra.mxu0 0
        %1337 = vmatpush.bf16.xpose.msra.mxu0 0
        %1338 = vmatpush.bf16.xpose.msra.mxu0 0
        %1339 = vmatpush.bf16.xpose.msra.mxu0 0
        %1340 = vmatpush.bf16.xpose.msra.mxu0 0
        %1341 = vmatpush.bf16.xpose.msra.mxu0 0
        %1342 = vmatpush.bf16.xpose.msra.mxu0 0
        %1343 = vmatpush.bf16.xpose.msra.mxu0 %v1124
        %1344 = vmatmul.bf16.gmra.mxu0 %v1108
        %v1345 = vpop.f32.mrf.mxu0
        %v1346 = vadd.f32 %v1172, %v1345
        %v1347 = vpop.f32.mrf.mxu0
        %1348 = vdwg.mxu0
        %1349 = vmatpush.bf16.xpose.msra.mxu0 0
        %1350 = vmatpush.bf16.xpose.msra.mxu0 0
        %1351 = vmatpush.bf16.xpose.msra.mxu0 0
        %1352 = vmatpush.bf16.xpose.msra.mxu0 0
        %1353 = vmatpush.bf16.xpose.msra.mxu0 0
        %1354 = vmatpush.bf16.xpose.msra.mxu0 0
        %1355 = vmatpush.bf16.xpose.msra.mxu0 0
        %1356 = vmatpush.bf16.xpose.msra.mxu0 %v1125
        %1357 = vmatmul.bf16.gmra.mxu0 %v1109
        %v1358 = vpop.f32.mrf.mxu0
        %v1359 = vadd.f32 %v1173, %v1358
        %v1360 = vpop.f32.mrf.mxu0
        %1361 = vdwg.mxu0
        %1362 = vmatpush.bf16.xpose.msra.mxu0 0
        %1363 = vmatpush.bf16.xpose.msra.mxu0 0
        %1364 = vmatpush.bf16.xpose.msra.mxu0 0
        %1365 = vmatpush.bf16.xpose.msra.mxu0 0
        %1366 = vmatpush.bf16.xpose.msra.mxu0 0
        %1367 = vmatpush.bf16.xpose.msra.mxu0 0
        %1368 = vmatpush.bf16.xpose.msra.mxu0 0
        %1369 = vmatpush.bf16.xpose.msra.mxu0 %v1126
        %1370 = vmatmul.bf16.gmra.mxu0 %v1110
        %v1371 = vpop.f32.mrf.mxu0
        %v1372 = vadd.f32 %v1174, %v1371
        %v1373 = vpop.f32.mrf.mxu0
        %1374 = vdwg.mxu0
        %1375 = vmatpush.bf16.xpose.msra.mxu0 0
        %1376 = vmatpush.bf16.xpose.msra.mxu0 0
        %1377 = vmatpush.bf16.xpose.msra.mxu0 0
        %1378 = vmatpush.bf16.xpose.msra.mxu0 0
        %1379 = vmatpush.bf16.xpose.msra.mxu0 0
        %1380 = vmatpush.bf16.xpose.msra.mxu0 0
        %1381 = vmatpush.bf16.xpose.msra.mxu0 0
        %1382 = vmatpush.bf16.xpose.msra.mxu0 %v1127
        %1383 = vmatmul.bf16.gmra.mxu0 %v1111
        %v1384 = vpop.f32.mrf.mxu0
        %v1385 = vadd.f32 %v1175, %v1384
        %v1386 = vpop.f32.mrf.mxu0
        %1387 = vdwg.mxu0
        %1388 = vmatpush.bf16.xpose.msra.mxu0 0
        %1389 = vmatpush.bf16.xpose.msra.mxu0 0
        %1390 = vmatpush.bf16.xpose.msra.mxu0 0
        %1391 = vmatpush.bf16.xpose.msra.mxu0 0
        %1392 = vmatpush.bf16.xpose.msra.mxu0 0
        %1393 = vmatpush.bf16.xpose.msra.mxu0 0
        %1394 = vmatpush.bf16.xpose.msra.mxu0 0
        %1395 = vmatpush.bf16.xpose.msra.mxu0 %v1128
        %1396 = vmatmul.bf16.gmra.mxu0 %v1112
        %v1397 = vpop.f32.mrf.mxu0
        %v1398 = vadd.f32 %v1176, %v1397
        %v1399 = vpop.f32.mrf.mxu0
        %1400 = vdwg.mxu0
        %vm1401 = vcmask 64512
        %v1402 = vsel %vm1401, %v1203, -inf
        %1403 = vmax.xlane.f32.xlu0 %v1402
        %v1404 = vpop.xlane.xlu0 %1403
        %v1405 = vsel %vm1401, %v1216, -inf
        %1406 = vmax.xlane.f32.xlu0 %v1405
        %v1407 = vpop.xlane.xlu0 %1406
        %v1408 = vsel %vm1401, %v1229, -inf
        %1409 = vmax.xlane.f32.xlu0 %v1408
        %v1410 = vpop.xlane.xlu0 %1409
        %v1411 = vsel %vm1401, %v1242, -inf
        %1412 = vmax.xlane.f32.xlu0 %v1411
        %v1413 = vpop.xlane.xlu0 %1412
        %v1414 = vsel %vm1401, %v1255, -inf
        %1415 = vmax.xlane.f32.xlu0 %v1414
        %v1416 = vpop.xlane.xlu0 %1415
        %v1417 = vsel %vm1401, %v1268, -inf
        %1418 = vmax.xlane.f32.xlu0 %v1417
        %v1419 = vpop.xlane.xlu0 %1418
        %v1420 = vsel %vm1401, %v1281, -inf
        %1421 = vmax.xlane.f32.xlu0 %v1420
        %v1422 = vpop.xlane.xlu0 %1421
        %v1423 = vsel %vm1401, %v1294, -inf
        %1424 = vmax.xlane.f32.xlu0 %v1423
        %v1425 = vpop.xlane.xlu0 %1424
        %v1426 = vsel %vm1401, %v1307, -inf
        %1427 = vmax.xlane.f32.xlu0 %v1426
        %v1428 = vpop.xlane.xlu0 %1427
        %v1429 = vsel %vm1401, %v1320, -inf
        %1430 = vmax.xlane.f32.xlu0 %v1429
        %v1431 = vpop.xlane.xlu0 %1430
        %v1432 = vsel %vm1401, %v1333, -inf
        %1433 = vmax.xlane.f32.xlu0 %v1432
        %v1434 = vpop.xlane.xlu0 %1433
        %v1435 = vsel %vm1401, %v1346, -inf
        %1436 = vmax.xlane.f32.xlu0 %v1435
        %v1437 = vpop.xlane.xlu0 %1436
        %v1438 = vsel %vm1401, %v1359, -inf
        %1439 = vmax.xlane.f32.xlu0 %v1438
        %v1440 = vpop.xlane.xlu0 %1439
        %v1441 = vsel %vm1401, %v1372, -inf
        %1442 = vmax.xlane.f32.xlu0 %v1441
        %v1443 = vpop.xlane.xlu0 %1442
        %v1444 = vsel %vm1401, %v1385, -inf
        %1445 = vmax.xlane.f32.xlu0 %v1444
        %v1446 = vpop.xlane.xlu0 %1445
        %v1447 = vsel %vm1401, %v1398, -inf
        %1448 = vmax.xlane.f32.xlu0 %v1447
        %v1449 = vpop.xlane.xlu0 %1448
        %v1450 = vsub.f32 %v1203, %v1404
        %v1451 = vsub.f32 %v1216, %v1407
        %v1452 = vsub.f32 %v1229, %v1410
        %v1453 = vsub.f32 %v1242, %v1413
        %v1454 = vsub.f32 %v1255, %v1416
        %v1455 = vsub.f32 %v1268, %v1419
        %v1456 = vsub.f32 %v1281, %v1422
        %v1457 = vsub.f32 %v1294, %v1425
        %v1458 = vsub.f32 %v1307, %v1428
        %v1459 = vsub.f32 %v1320, %v1431
        %v1460 = vsub.f32 %v1333, %v1434
        %v1461 = vsub.f32 %v1346, %v1437
        %v1462 = vsub.f32 %v1359, %v1440
        %v1463 = vsub.f32 %v1372, %v1443
        %v1464 = vsub.f32 %v1385, %v1446
        %v1465 = vsub.f32 %v1398, %v1449
        %v1466 = vmul.f32 %v1450, 1.442695
        %v1467 = vpow.pop %v1466
        %v1468 = vmul.f32 %v1451, 1.442695
        %v1469 = vpow.pop %v1468
        %v1470 = vmul.f32 %v1452, 1.442695
        %v1471 = vpow.pop %v1470
        %v1472 = vmul.f32 %v1453, 1.442695
        %v1473 = vpow.pop %v1472
        %v1474 = vmul.f32 %v1454, 1.442695
        %v1475 = vpow.pop %v1474
        %v1476 = vmul.f32 %v1455, 1.442695
        %v1477 = vpow.pop %v1476
        %v1478 = vmul.f32 %v1456, 1.442695
        %v1479 = vpow.pop %v1478
        %v1480 = vmul.f32 %v1457, 1.442695
        %v1481 = vpow.pop %v1480
        %v1482 = vmul.f32 %v1458, 1.442695
        %v1483 = vpow.pop %v1482
        %v1484 = vmul.f32 %v1459, 1.442695
        %v1485 = vpow.pop %v1484
        %v1486 = vmul.f32 %v1460, 1.442695
        %v1487 = vpow.pop %v1486
        %v1488 = vmul.f32 %v1461, 1.442695
        %v1489 = vpow.pop %v1488
        %v1490 = vmul.f32 %v1462, 1.442695
        %v1491 = vpow.pop %v1490
        %v1492 = vmul.f32 %v1463, 1.442695
        %v1493 = vpow.pop %v1492
        %v1494 = vmul.f32 %v1464, 1.442695
        %v1495 = vpow.pop %v1494
        %v1496 = vmul.f32 %v1465, 1.442695
        %v1497 = vpow.pop %v1496
        %v1498 = vsel %vm1401, %v1467, 0.0
        %1499 = vadd.xlane.f32.xlu0 %v1498
        %v1500 = vpop.xlane.xlu0 %1499
        %v1501 = vsel %vm1401, %v1469, 0.0
        %1502 = vadd.xlane.f32.xlu0 %v1501
        %v1503 = vpop.xlane.xlu0 %1502
        %v1504 = vsel %vm1401, %v1471, 0.0
        %1505 = vadd.xlane.f32.xlu0 %v1504
        %v1506 = vpop.xlane.xlu0 %1505
        %v1507 = vsel %vm1401, %v1473, 0.0
        %1508 = vadd.xlane.f32.xlu0 %v1507
        %v1509 = vpop.xlane.xlu0 %1508
        %v1510 = vsel %vm1401, %v1475, 0.0
        %1511 = vadd.xlane.f32.xlu0 %v1510
        %v1512 = vpop.xlane.xlu0 %1511
        %v1513 = vsel %vm1401, %v1477, 0.0
        %1514 = vadd.xlane.f32.xlu0 %v1513
        %v1515 = vpop.xlane.xlu0 %1514
        %v1516 = vsel %vm1401, %v1479, 0.0
        %1517 = vadd.xlane.f32.xlu0 %v1516
        %v1518 = vpop.xlane.xlu0 %1517
        %v1519 = vsel %vm1401, %v1481, 0.0
        %1520 = vadd.xlane.f32.xlu0 %v1519
        %v1521 = vpop.xlane.xlu0 %1520
        %v1522 = vsel %vm1401, %v1483, 0.0
        %1523 = vadd.xlane.f32.xlu0 %v1522
        %v1524 = vpop.xlane.xlu0 %1523
        %v1525 = vsel %vm1401, %v1485, 0.0
        %1526 = vadd.xlane.f32.xlu0 %v1525
        %v1527 = vpop.xlane.xlu0 %1526
        %v1528 = vsel %vm1401, %v1487, 0.0
        %1529 = vadd.xlane.f32.xlu0 %v1528
        %v1530 = vpop.xlane.xlu0 %1529
        %v1531 = vsel %vm1401, %v1489, 0.0
        %1532 = vadd.xlane.f32.xlu0 %v1531
        %v1533 = vpop.xlane.xlu0 %1532
        %v1534 = vsel %vm1401, %v1491, 0.0
        %1535 = vadd.xlane.f32.xlu0 %v1534
        %v1536 = vpop.xlane.xlu0 %1535
        %v1537 = vsel %vm1401, %v1493, 0.0
        %1538 = vadd.xlane.f32.xlu0 %v1537
        %v1539 = vpop.xlane.xlu0 %1538
        %v1540 = vsel %vm1401, %v1495, 0.0
        %1541 = vadd.xlane.f32.xlu0 %v1540
        %v1542 = vpop.xlane.xlu0 %1541
        %v1543 = vsel %vm1401, %v1497, 0.0
        %1544 = vadd.xlane.f32.xlu0 %v1543
        %v1545 = vpop.xlane.xlu0 %1544
        %v1546 = vrcp.pop %v1500
        %v1547 = vrcp.pop %v1503
        %v1548 = vrcp.pop %v1506
        %v1549 = vrcp.pop %v1509
        %v1550 = vrcp.pop %v1512
        %v1551 = vrcp.pop %v1515
        %v1552 = vrcp.pop %v1518
        %v1553 = vrcp.pop %v1521
        %v1554 = vrcp.pop %v1524
        %v1555 = vrcp.pop %v1527
        %v1556 = vrcp.pop %v1530
        %v1557 = vrcp.pop %v1533
        %v1558 = vrcp.pop %v1536
        %v1559 = vrcp.pop %v1539
        %v1560 = vrcp.pop %v1542
        %v1561 = vrcp.pop %v1545
        %v1562 = vmul.f32 %v1467, %v1546
        %v1563 = vmul.f32 %v1469, %v1547
        %v1564 = vmul.f32 %v1471, %v1548
        %v1565 = vmul.f32 %v1473, %v1549
        %v1566 = vmul.f32 %v1475, %v1550
        %v1567 = vmul.f32 %v1477, %v1551
        %v1568 = vmul.f32 %v1479, %v1552
        %v1569 = vmul.f32 %v1481, %v1553
        %v1570 = vmul.f32 %v1483, %v1554
        %v1571 = vmul.f32 %v1485, %v1555
        %v1572 = vmul.f32 %v1487, %v1556
        %v1573 = vmul.f32 %v1489, %v1557
        %v1574 = vmul.f32 %v1491, %v1558
        %v1575 = vmul.f32 %v1493, %v1559
        %v1576 = vmul.f32 %v1495, %v1560
        %v1577 = vmul.f32 %v1497, %v1561
        %v1578 = vpack.c.bf16 %v1562, %v1562
        %v1579 = vpack.c.bf16 %v1563, %v1563
        %v1580 = vpack.c.bf16 %v1564, %v1564
        %v1581 = vpack.c.bf16 %v1565, %v1565
        %v1582 = vpack.c.bf16 %v1566, %v1566
        %v1583 = vpack.c.bf16 %v1567, %v1567
        %v1584 = vpack.c.bf16 %v1568, %v1568
        %v1585 = vpack.c.bf16 %v1569, %v1569
        %v1586 = vpack.c.bf16 %v1570, %v1570
        %v1587 = vpack.c.bf16 %v1571, %v1571
        %v1588 = vpack.c.bf16 %v1572, %v1572
        %v1589 = vpack.c.bf16 %v1573, %v1573
        %v1590 = vpack.c.bf16 %v1574, %v1574
        %v1591 = vpack.c.bf16 %v1575, %v1575
        %v1592 = vpack.c.bf16 %v1576, %v1576
        %v1593 = vpack.c.bf16 %v1577, %v1577
        %v1595 = vsel %vm1401, %v1578, 0
        %vm1597 = vcmask 1043456
        %v1599 = vsel %vm1597, %v1129, 0
        %1601 = vmatpush.bf16.msra.mxu0 0
        %1602 = vmatpush.bf16.msra.mxu0 0
        %1603 = vmatpush.bf16.msra.mxu0 0
        %1604 = vmatpush.bf16.msra.mxu0 0
        %1605 = vmatpush.bf16.msra.mxu0 0
        %1606 = vmatpush.bf16.msra.mxu0 0
        %1607 = vmatpush.bf16.msra.mxu0 0
        %1608 = vmatpush.bf16.msra.mxu0 %v1599
        %1609 = vmatmul.bf16.gmra.mxu0 %v1595
        %v1610 = vpop.f32.mrf.mxu0
        %v1611 = vadd.f32 0.0, %v1610
        %v1612 = vpop.f32.mrf.mxu0
        %1613 = vdwg.mxu0
        %v1615 = vsel %vm1401, %v1579, 0
        %v1618 = vsel %vm1597, %v1130, 0
        %1620 = vmatpush.bf16.msra.mxu0 0
        %1621 = vmatpush.bf16.msra.mxu0 0
        %1622 = vmatpush.bf16.msra.mxu0 0
        %1623 = vmatpush.bf16.msra.mxu0 0
        %1624 = vmatpush.bf16.msra.mxu0 0
        %1625 = vmatpush.bf16.msra.mxu0 0
        %1626 = vmatpush.bf16.msra.mxu0 0
        %1627 = vmatpush.bf16.msra.mxu0 %v1618
        %1628 = vmatmul.bf16.gmra.mxu0 %v1615
        %v1629 = vpop.f32.mrf.mxu0
        %v1630 = vadd.f32 0.0, %v1629
        %v1631 = vpop.f32.mrf.mxu0
        %1632 = vdwg.mxu0
        %v1634 = vsel %vm1401, %v1580, 0
        %v1637 = vsel %vm1597, %v1131, 0
        %1639 = vmatpush.bf16.msra.mxu0 0
        %1640 = vmatpush.bf16.msra.mxu0 0
        %1641 = vmatpush.bf16.msra.mxu0 0
        %1642 = vmatpush.bf16.msra.mxu0 0
        %1643 = vmatpush.bf16.msra.mxu0 0
        %1644 = vmatpush.bf16.msra.mxu0 0
        %1645 = vmatpush.bf16.msra.mxu0 0
        %1646 = vmatpush.bf16.msra.mxu0 %v1637
        %1647 = vmatmul.bf16.gmra.mxu0 %v1634
        %v1648 = vpop.f32.mrf.mxu0
        %v1649 = vadd.f32 0.0, %v1648
        %v1650 = vpop.f32.mrf.mxu0
        %1651 = vdwg.mxu0
        %v1653 = vsel %vm1401, %v1581, 0
        %v1656 = vsel %vm1597, %v1132, 0
        %1658 = vmatpush.bf16.msra.mxu0 0
        %1659 = vmatpush.bf16.msra.mxu0 0
        %1660 = vmatpush.bf16.msra.mxu0 0
        %1661 = vmatpush.bf16.msra.mxu0 0
        %1662 = vmatpush.bf16.msra.mxu0 0
        %1663 = vmatpush.bf16.msra.mxu0 0
        %1664 = vmatpush.bf16.msra.mxu0 0
        %1665 = vmatpush.bf16.msra.mxu0 %v1656
        %1666 = vmatmul.bf16.gmra.mxu0 %v1653
        %v1667 = vpop.f32.mrf.mxu0
        %v1668 = vadd.f32 0.0, %v1667
        %v1669 = vpop.f32.mrf.mxu0
        %1670 = vdwg.mxu0
        %v1672 = vsel %vm1401, %v1582, 0
        %v1675 = vsel %vm1597, %v1133, 0
        %1677 = vmatpush.bf16.msra.mxu0 0
        %1678 = vmatpush.bf16.msra.mxu0 0
        %1679 = vmatpush.bf16.msra.mxu0 0
        %1680 = vmatpush.bf16.msra.mxu0 0
        %1681 = vmatpush.bf16.msra.mxu0 0
        %1682 = vmatpush.bf16.msra.mxu0 0
        %1683 = vmatpush.bf16.msra.mxu0 0
        %1684 = vmatpush.bf16.msra.mxu0 %v1675
        %1685 = vmatmul.bf16.gmra.mxu0 %v1672
        %v1686 = vpop.f32.mrf.mxu0
        %v1687 = vadd.f32 0.0, %v1686
        %v1688 = vpop.f32.mrf.mxu0
        %1689 = vdwg.mxu0
        %v1691 = vsel %vm1401, %v1583, 0
        %v1694 = vsel %vm1597, %v1134, 0
        %1696 = vmatpush.bf16.msra.mxu0 0
        %1697 = vmatpush.bf16.msra.mxu0 0
        %1698 = vmatpush.bf16.msra.mxu0 0
        %1699 = vmatpush.bf16.msra.mxu0 0
        %1700 = vmatpush.bf16.msra.mxu0 0
        %1701 = vmatpush.bf16.msra.mxu0 0
        %1702 = vmatpush.bf16.msra.mxu0 0
        %1703 = vmatpush.bf16.msra.mxu0 %v1694
        %1704 = vmatmul.bf16.gmra.mxu0 %v1691
        %v1705 = vpop.f32.mrf.mxu0
        %v1706 = vadd.f32 0.0, %v1705
        %v1707 = vpop.f32.mrf.mxu0
        %1708 = vdwg.mxu0
        %v1710 = vsel %vm1401, %v1584, 0
        %v1713 = vsel %vm1597, %v1135, 0
        %1715 = vmatpush.bf16.msra.mxu0 0
        %1716 = vmatpush.bf16.msra.mxu0 0
        %1717 = vmatpush.bf16.msra.mxu0 0
        %1718 = vmatpush.bf16.msra.mxu0 0
        %1719 = vmatpush.bf16.msra.mxu0 0
        %1720 = vmatpush.bf16.msra.mxu0 0
        %1721 = vmatpush.bf16.msra.mxu0 0
        %1722 = vmatpush.bf16.msra.mxu0 %v1713
        %1723 = vmatmul.bf16.gmra.mxu0 %v1710
        %v1724 = vpop.f32.mrf.mxu0
        %v1725 = vadd.f32 0.0, %v1724
        %v1726 = vpop.f32.mrf.mxu0
        %1727 = vdwg.mxu0
        %v1729 = vsel %vm1401, %v1585, 0
        %v1732 = vsel %vm1597, %v1136, 0
        %1734 = vmatpush.bf16.msra.mxu0 0
        %1735 = vmatpush.bf16.msra.mxu0 0
        %1736 = vmatpush.bf16.msra.mxu0 0
        %1737 = vmatpush.bf16.msra.mxu0 0
        %1738 = vmatpush.bf16.msra.mxu0 0
        %1739 = vmatpush.bf16.msra.mxu0 0
        %1740 = vmatpush.bf16.msra.mxu0 0
        %1741 = vmatpush.bf16.msra.mxu0 %v1732
        %1742 = vmatmul.bf16.gmra.mxu0 %v1729
        %v1743 = vpop.f32.mrf.mxu0
        %v1744 = vadd.f32 0.0, %v1743
        %v1745 = vpop.f32.mrf.mxu0
        %1746 = vdwg.mxu0
        %v1748 = vsel %vm1401, %v1586, 0
        %v1751 = vsel %vm1597, %v1137, 0
        %1753 = vmatpush.bf16.msra.mxu0 0
        %1754 = vmatpush.bf16.msra.mxu0 0
        %1755 = vmatpush.bf16.msra.mxu0 0
        %1756 = vmatpush.bf16.msra.mxu0 0
        %1757 = vmatpush.bf16.msra.mxu0 0
        %1758 = vmatpush.bf16.msra.mxu0 0
        %1759 = vmatpush.bf16.msra.mxu0 0
        %1760 = vmatpush.bf16.msra.mxu0 %v1751
        %1761 = vmatmul.bf16.gmra.mxu0 %v1748
        %v1762 = vpop.f32.mrf.mxu0
        %v1763 = vadd.f32 0.0, %v1762
        %v1764 = vpop.f32.mrf.mxu0
        %1765 = vdwg.mxu0
        %v1767 = vsel %vm1401, %v1587, 0
        %v1770 = vsel %vm1597, %v1138, 0
        %1772 = vmatpush.bf16.msra.mxu0 0
        %1773 = vmatpush.bf16.msra.mxu0 0
        %1774 = vmatpush.bf16.msra.mxu0 0
        %1775 = vmatpush.bf16.msra.mxu0 0
        %1776 = vmatpush.bf16.msra.mxu0 0
        %1777 = vmatpush.bf16.msra.mxu0 0
        %1778 = vmatpush.bf16.msra.mxu0 0
        %1779 = vmatpush.bf16.msra.mxu0 %v1770
        %1780 = vmatmul.bf16.gmra.mxu0 %v1767
        %v1781 = vpop.f32.mrf.mxu0
        %v1782 = vadd.f32 0.0, %v1781
        %v1783 = vpop.f32.mrf.mxu0
        %1784 = vdwg.mxu0
        %v1786 = vsel %vm1401, %v1588, 0
        %v1789 = vsel %vm1597, %v1139, 0
        %1791 = vmatpush.bf16.msra.mxu0 0
        %1792 = vmatpush.bf16.msra.mxu0 0
        %1793 = vmatpush.bf16.msra.mxu0 0
        %1794 = vmatpush.bf16.msra.mxu0 0
        %1795 = vmatpush.bf16.msra.mxu0 0
        %1796 = vmatpush.bf16.msra.mxu0 0
        %1797 = vmatpush.bf16.msra.mxu0 0
        %1798 = vmatpush.bf16.msra.mxu0 %v1789
        %1799 = vmatmul.bf16.gmra.mxu0 %v1786
        %v1800 = vpop.f32.mrf.mxu0
        %v1801 = vadd.f32 0.0, %v1800
        %v1802 = vpop.f32.mrf.mxu0
        %1803 = vdwg.mxu0
        %v1805 = vsel %vm1401, %v1589, 0
        %v1808 = vsel %vm1597, %v1140, 0
        %1810 = vmatpush.bf16.msra.mxu0 0
        %1811 = vmatpush.bf16.msra.mxu0 0
        %1812 = vmatpush.bf16.msra.mxu0 0
        %1813 = vmatpush.bf16.msra.mxu0 0
        %1814 = vmatpush.bf16.msra.mxu0 0
        %1815 = vmatpush.bf16.msra.mxu0 0
        %1816 = vmatpush.bf16.msra.mxu0 0
        %1817 = vmatpush.bf16.msra.mxu0 %v1808
        %1818 = vmatmul.bf16.gmra.mxu0 %v1805
        %v1819 = vpop.f32.mrf.mxu0
        %v1820 = vadd.f32 0.0, %v1819
        %v1821 = vpop.f32.mrf.mxu0
        %1822 = vdwg.mxu0
        %v1824 = vsel %vm1401, %v1590, 0
        %v1827 = vsel %vm1597, %v1141, 0
        %1829 = vmatpush.bf16.msra.mxu0 0
        %1830 = vmatpush.bf16.msra.mxu0 0
        %1831 = vmatpush.bf16.msra.mxu0 0
        %1832 = vmatpush.bf16.msra.mxu0 0
        %1833 = vmatpush.bf16.msra.mxu0 0
        %1834 = vmatpush.bf16.msra.mxu0 0
        %1835 = vmatpush.bf16.msra.mxu0 0
        %1836 = vmatpush.bf16.msra.mxu0 %v1827
        %1837 = vmatmul.bf16.gmra.mxu0 %v1824
        %v1838 = vpop.f32.mrf.mxu0
        %v1839 = vadd.f32 0.0, %v1838
        %v1840 = vpop.f32.mrf.mxu0
        %1841 = vdwg.mxu0
        %v1843 = vsel %vm1401, %v1591, 0
        %v1846 = vsel %vm1597, %v1142, 0
        %1848 = vmatpush.bf16.msra.mxu0 0
        %1849 = vmatpush.bf16.msra.mxu0 0
        %1850 = vmatpush.bf16.msra.mxu0 0
        %1851 = vmatpush.bf16.msra.mxu0 0
        %1852 = vmatpush.bf16.msra.mxu0 0
        %1853 = vmatpush.bf16.msra.mxu0 0
        %1854 = vmatpush.bf16.msra.mxu0 0
        %1855 = vmatpush.bf16.msra.mxu0 %v1846
        %1856 = vmatmul.bf16.gmra.mxu0 %v1843
        %v1857 = vpop.f32.mrf.mxu0
        %v1858 = vadd.f32 0.0, %v1857
        %v1859 = vpop.f32.mrf.mxu0
        %1860 = vdwg.mxu0
        %v1862 = vsel %vm1401, %v1592, 0
        %v1865 = vsel %vm1597, %v1143, 0
        %1867 = vmatpush.bf16.msra.mxu0 0
        %1868 = vmatpush.bf16.msra.mxu0 0
        %1869 = vmatpush.bf16.msra.mxu0 0
        %1870 = vmatpush.bf16.msra.mxu0 0
        %1871 = vmatpush.bf16.msra.mxu0 0
        %1872 = vmatpush.bf16.msra.mxu0 0
        %1873 = vmatpush.bf16.msra.mxu0 0
        %1874 = vmatpush.bf16.msra.mxu0 %v1865
        %1875 = vmatmul.bf16.gmra.mxu0 %v1862
        %v1876 = vpop.f32.mrf.mxu0
        %v1877 = vadd.f32 0.0, %v1876
        %v1878 = vpop.f32.mrf.mxu0
        %1879 = vdwg.mxu0
        %v1881 = vsel %vm1401, %v1593, 0
        %v1884 = vsel %vm1597, %v1144, 0
        %1886 = vmatpush.bf16.msra.mxu0 0
        %1887 = vmatpush.bf16.msra.mxu0 0
        %1888 = vmatpush.bf16.msra.mxu0 0
        %1889 = vmatpush.bf16.msra.mxu0 0
        %1890 = vmatpush.bf16.msra.mxu0 0
        %1891 = vmatpush.bf16.msra.mxu0 0
        %1892 = vmatpush.bf16.msra.mxu0 0
        %1893 = vmatpush.bf16.msra.mxu0 %v1884
        %1894 = vmatmul.bf16.gmra.mxu0 %v1881
        %v1895 = vpop.f32.mrf.mxu0
        %v1896 = vadd.f32 0.0, %v1895
        %v1897 = vpop.f32.mrf.mxu0
        %1898 = vdwg.mxu0
        %v1899 = vpack.c.bf16 %v1630, %v1611
        %v1900 = vpack.c.bf16 %v1668, %v1649
        %v1901 = vpack.c.bf16 %v1706, %v1687
        %v1902 = vpack.c.bf16 %v1744, %v1725
        %v1903 = vpack.c.bf16 %v1782, %v1763
        %v1904 = vpack.c.bf16 %v1820, %v1801
        %v1905 = vpack.c.bf16 %v1858, %v1839
        %v1906 = vpack.c.bf16 %v1896, %v1877
        %v1908 = vperm.slane %v750, 0
        %v1926 = vunpack.c.l.b16 %v734
        %v1927 = vunpack.c.l.b16 %v735
        %v1928 = vunpack.c.l.b16 %v736
        %v1929 = vunpack.c.l.b16 %v737
        %v1930 = vunpack.c.l.b16 %v738
        %v1931 = vunpack.c.l.b16 %v739
        %v1932 = vunpack.c.l.b16 %v740
        %v1933 = vunpack.c.l.b16 %v741
        %v1934 = vunpack.c.l.b16 %v742
        %v1935 = vunpack.c.l.b16 %v743
        %v1936 = vunpack.c.l.b16 %v744
        %v1937 = vunpack.c.l.b16 %v745
        %v1938 = vunpack.c.l.b16 %v746
        %v1939 = vunpack.c.l.b16 %v747
        %v1940 = vunpack.c.l.b16 %v748
        %v1941 = vunpack.c.l.b16 %v749
        %v1942 = vpack.c.b16 %v1927, %v1926
        %v1943 = vpack.c.b16 %v1929, %v1928
        %v1944 = vpack.c.b16 %v1931, %v1930
        %v1945 = vpack.c.b16 %v1933, %v1932
        %v1946 = vpack.c.b16 %v1935, %v1934
        %v1947 = vpack.c.b16 %v1937, %v1936
        %v1948 = vpack.c.b16 %v1939, %v1938
        %v1949 = vpack.c.b16 %v1941, %v1940
        %1958 = vmatpush.bf16.msra.mxu0 %v1949
        %1959 = vmatpush.bf16.msra.mxu0 %v1948
        %1960 = vmatpush.bf16.msra.mxu0 %v1947
        %1961 = vmatpush.bf16.msra.mxu0 %v1946
        %1962 = vmatpush.bf16.msra.mxu0 %v1945
        %1963 = vmatpush.bf16.msra.mxu0 %v1944
        %1964 = vmatpush.bf16.msra.mxu0 %v1943
        %1965 = vmatpush.bf16.msra.mxu0 %v1942
        %1966 = vmatmul.bf16.gmra.mxu0 %v1899
        %v1967 = vpop.f32.mrf.mxu0
        %v1968 = vadd.f32 %v1908, %v1967
        %v1969 = vpop.f32.mrf.mxu0
        %v1970 = vadd.f32 %v1908, %v1969
        %1971 = vmatmul.bf16.gmra.mxu0 %v1900
        %v1972 = vpop.f32.mrf.mxu0
        %v1973 = vadd.f32 %v1908, %v1972
        %v1974 = vpop.f32.mrf.mxu0
        %v1975 = vadd.f32 %v1908, %v1974
        %1976 = vmatmul.bf16.gmra.mxu0 %v1901
        %v1977 = vpop.f32.mrf.mxu0
        %v1978 = vadd.f32 %v1908, %v1977
        %v1979 = vpop.f32.mrf.mxu0
        %v1980 = vadd.f32 %v1908, %v1979
        %1981 = vmatmul.bf16.gmra.mxu0 %v1902
        %v1982 = vpop.f32.mrf.mxu0
        %v1983 = vadd.f32 %v1908, %v1982
        %v1984 = vpop.f32.mrf.mxu0
        %v1985 = vadd.f32 %v1908, %v1984
        %1986 = vmatmul.bf16.gmra.mxu0 %v1903
        %v1987 = vpop.f32.mrf.mxu0
        %v1988 = vadd.f32 %v1908, %v1987
        %v1989 = vpop.f32.mrf.mxu0
        %v1990 = vadd.f32 %v1908, %v1989
        %1991 = vmatmul.bf16.gmra.mxu0 %v1904
        %v1992 = vpop.f32.mrf.mxu0
        %v1993 = vadd.f32 %v1908, %v1992
        %v1994 = vpop.f32.mrf.mxu0
        %v1995 = vadd.f32 %v1908, %v1994
        %1996 = vmatmul.bf16.gmra.mxu0 %v1905
        %v1997 = vpop.f32.mrf.mxu0
        %v1998 = vadd.f32 %v1908, %v1997
        %v1999 = vpop.f32.mrf.mxu0
        %v2000 = vadd.f32 %v1908, %v1999
        %2001 = vmatmul.bf16.gmra.mxu0 %v1906
        %v2002 = vpop.f32.mrf.mxu0
        %v2003 = vadd.f32 %v1908, %v2002
        %v2004 = vpop.f32.mrf.mxu0
        %v2005 = vadd.f32 %v1908, %v2004
        %2006 = vdwg.mxu0
        %v2007 = vadd.f32 %v667, %v1968
        %v2008 = vadd.f32 %v668, %v1970
        %v2009 = vadd.f32 %v669, %v1973
        %v2010 = vadd.f32 %v670, %v1975
        %v2011 = vadd.f32 %v671, %v1978
        %v2012 = vadd.f32 %v672, %v1980
        %v2013 = vadd.f32 %v673, %v1983
        %v2014 = vadd.f32 %v674, %v1985
        %v2015 = vadd.f32 %v675, %v1988
        %v2016 = vadd.f32 %v676, %v1990
        %v2017 = vadd.f32 %v677, %v1993
        %v2018 = vadd.f32 %v678, %v1995
        %v2019 = vadd.f32 %v679, %v1998
        %v2020 = vadd.f32 %v680, %v2000
        %v2021 = vadd.f32 %v681, %v2003
        %v2022 = vadd.f32 %v682, %v2005
        %2023 = vadd.xlane.f32.xlu0 %v2007
        %v2024 = vpop.xlane.xlu0 %2023
        %2025 = vadd.xlane.f32.xlu0 %v2008
        %v2026 = vpop.xlane.xlu0 %2025
        %2027 = vadd.xlane.f32.xlu0 %v2009
        %v2028 = vpop.xlane.xlu0 %2027
        %2029 = vadd.xlane.f32.xlu0 %v2010
        %v2030 = vpop.xlane.xlu0 %2029
        %2031 = vadd.xlane.f32.xlu0 %v2011
        %v2032 = vpop.xlane.xlu0 %2031
        %2033 = vadd.xlane.f32.xlu0 %v2012
        %v2034 = vpop.xlane.xlu0 %2033
        %2035 = vadd.xlane.f32.xlu0 %v2013
        %v2036 = vpop.xlane.xlu0 %2035
        %2037 = vadd.xlane.f32.xlu0 %v2014
        %v2038 = vpop.xlane.xlu0 %2037
        %2039 = vadd.xlane.f32.xlu0 %v2015
        %v2040 = vpop.xlane.xlu0 %2039
        %2041 = vadd.xlane.f32.xlu0 %v2016
        %v2042 = vpop.xlane.xlu0 %2041
        %2043 = vadd.xlane.f32.xlu0 %v2017
        %v2044 = vpop.xlane.xlu0 %2043
        %2045 = vadd.xlane.f32.xlu0 %v2018
        %v2046 = vpop.xlane.xlu0 %2045
        %2047 = vadd.xlane.f32.xlu0 %v2019
        %v2048 = vpop.xlane.xlu0 %2047
        %2049 = vadd.xlane.f32.xlu0 %v2020
        %v2050 = vpop.xlane.xlu0 %2049
        %2051 = vadd.xlane.f32.xlu0 %v2021
        %v2052 = vpop.xlane.xlu0 %2051
        %2053 = vadd.xlane.f32.xlu0 %v2022
        %v2054 = vpop.xlane.xlu0 %2053
        %v2055 = vrcp.pop 128.0
        %v2056 = vmul.f32 128.0, %v2055
        %v2057 = vsub.f32 1.0, %v2056
        %v2058 = vmul.f32 %v2055, %v2057
        %v2059 = vadd.f32 %v2055, %v2058
        %vm2060 = vweird.f32 %v2055
        %v2061 = vsel %vm2060, %v2055, %v2059
        %v2062 = vmul.f32 %v2024, %v2061
        %v2063 = vmul.f32 %v2026, %v2061
        %v2064 = vmul.f32 %v2028, %v2061
        %v2065 = vmul.f32 %v2030, %v2061
        %v2066 = vmul.f32 %v2032, %v2061
        %v2067 = vmul.f32 %v2034, %v2061
        %v2068 = vmul.f32 %v2036, %v2061
        %v2069 = vmul.f32 %v2038, %v2061
        %v2070 = vmul.f32 %v2040, %v2061
        %v2071 = vmul.f32 %v2042, %v2061
        %v2072 = vmul.f32 %v2044, %v2061
        %v2073 = vmul.f32 %v2046, %v2061
        %v2074 = vmul.f32 %v2048, %v2061
        %v2075 = vmul.f32 %v2050, %v2061
        %v2076 = vmul.f32 %v2052, %v2061
        %v2077 = vmul.f32 %v2054, %v2061
        %v2078 = vsub.f32 %v2007, %v2062
        %v2079 = vsub.f32 %v2008, %v2063
        %v2080 = vsub.f32 %v2009, %v2064
        %v2081 = vsub.f32 %v2010, %v2065
        %v2082 = vsub.f32 %v2011, %v2066
        %v2083 = vsub.f32 %v2012, %v2067
        %v2084 = vsub.f32 %v2013, %v2068
        %v2085 = vsub.f32 %v2014, %v2069
        %v2086 = vsub.f32 %v2015, %v2070
        %v2087 = vsub.f32 %v2016, %v2071
        %v2088 = vsub.f32 %v2017, %v2072
        %v2089 = vsub.f32 %v2018, %v2073
        %v2090 = vsub.f32 %v2019, %v2074
        %v2091 = vsub.f32 %v2020, %v2075
        %v2092 = vsub.f32 %v2021, %v2076
        %v2093 = vsub.f32 %v2022, %v2077
        %v2094 = vmul.f32 %v2078, %v2078
        %v2095 = vmul.f32 %v2079, %v2079
        %v2096 = vmul.f32 %v2080, %v2080
        %v2097 = vmul.f32 %v2081, %v2081
        %v2098 = vmul.f32 %v2082, %v2082
        %v2099 = vmul.f32 %v2083, %v2083
        %v2100 = vmul.f32 %v2084, %v2084
        %v2101 = vmul.f32 %v2085, %v2085
        %v2102 = vmul.f32 %v2086, %v2086
        %v2103 = vmul.f32 %v2087, %v2087
        %v2104 = vmul.f32 %v2088, %v2088
        %v2105 = vmul.f32 %v2089, %v2089
        %v2106 = vmul.f32 %v2090, %v2090
        %v2107 = vmul.f32 %v2091, %v2091
        %v2108 = vmul.f32 %v2092, %v2092
        %v2109 = vmul.f32 %v2093, %v2093
        %2110 = vadd.xlane.f32.xlu0 %v2094
        %v2111 = vpop.xlane.xlu0 %2110
        %2112 = vadd.xlane.f32.xlu0 %v2095
        %v2113 = vpop.xlane.xlu0 %2112
        %2114 = vadd.xlane.f32.xlu0 %v2096
        %v2115 = vpop.xlane.xlu0 %2114
        %2116 = vadd.xlane.f32.xlu0 %v2097
        %v2117 = vpop.xlane.xlu0 %2116
        %2118 = vadd.xlane.f32.xlu0 %v2098
        %v2119 = vpop.xlane.xlu0 %2118
        %2120 = vadd.xlane.f32.xlu0 %v2099
        %v2121 = vpop.xlane.xlu0 %2120
        %2122 = vadd.xlane.f32.xlu0 %v2100
        %v2123 = vpop.xlane.xlu0 %2122
        %2124 = vadd.xlane.f32.xlu0 %v2101
        %v2125 = vpop.xlane.xlu0 %2124
        %2126 = vadd.xlane.f32.xlu0 %v2102
        %v2127 = vpop.xlane.xlu0 %2126
        %2128 = vadd.xlane.f32.xlu0 %v2103
        %v2129 = vpop.xlane.xlu0 %2128
        %2130 = vadd.xlane.f32.xlu0 %v2104
        %v2131 = vpop.xlane.xlu0 %2130
        %2132 = vadd.xlane.f32.xlu0 %v2105
        %v2133 = vpop.xlane.xlu0 %2132
        %2134 = vadd.xlane.f32.xlu0 %v2106
        %v2135 = vpop.xlane.xlu0 %2134
        %2136 = vadd.xlane.f32.xlu0 %v2107
        %v2137 = vpop.xlane.xlu0 %2136
        %2138 = vadd.xlane.f32.xlu0 %v2108
        %v2139 = vpop.xlane.xlu0 %2138
        %2140 = vadd.xlane.f32.xlu0 %v2109
        %v2141 = vpop.xlane.xlu0 %2140
        %v2142 = vmul.f32 %v2111, %v2061
        %v2143 = vmul.f32 %v2113, %v2061
        %v2144 = vmul.f32 %v2115, %v2061
        %v2145 = vmul.f32 %v2117, %v2061
        %v2146 = vmul.f32 %v2119, %v2061
        %v2147 = vmul.f32 %v2121, %v2061
        %v2148 = vmul.f32 %v2123, %v2061
        %v2149 = vmul.f32 %v2125, %v2061
        %v2150 = vmul.f32 %v2127, %v2061
        %v2151 = vmul.f32 %v2129, %v2061
        %v2152 = vmul.f32 %v2131, %v2061
        %v2153 = vmul.f32 %v2133, %v2061
        %v2154 = vmul.f32 %v2135, %v2061
        %v2155 = vmul.f32 %v2137, %v2061
        %v2156 = vmul.f32 %v2139, %v2061
        %v2157 = vmul.f32 %v2141, %v2061
        %v2158 = vadd.f32 %v2142, 1e-12
        %v2159 = vadd.f32 %v2143, 1e-12
        %v2160 = vadd.f32 %v2144, 1e-12
        %v2161 = vadd.f32 %v2145, 1e-12
        %v2162 = vadd.f32 %v2146, 1e-12
        %v2163 = vadd.f32 %v2147, 1e-12
        %v2164 = vadd.f32 %v2148, 1e-12
        %v2165 = vadd.f32 %v2149, 1e-12
        %v2166 = vadd.f32 %v2150, 1e-12
        %v2167 = vadd.f32 %v2151, 1e-12
        %v2168 = vadd.f32 %v2152, 1e-12
        %v2169 = vadd.f32 %v2153, 1e-12
        %v2170 = vadd.f32 %v2154, 1e-12
        %v2171 = vadd.f32 %v2155, 1e-12
        %v2172 = vadd.f32 %v2156, 1e-12
        %v2173 = vadd.f32 %v2157, 1e-12
        %v2174 = vrsqrt.pop %v2158
        %v2175 = vmul.f32 %v2174, %v2158
        %v2176 = vmul.f32 %v2175, %v2174
        %v2177 = vmul.f32 0.5, %v2176
        %v2178 = vsub.f32 1.5, %v2177
        %v2179 = vmul.f32 %v2174, %v2178
        %vm2180 = vweird.f32 %v2158
        %vm2181 = vweird.f32 %v2174
        %vm2182 = vmor %vm2180, %vm2181
        %v2183 = vsel %vm2182, %v2174, %v2179
        %v2184 = vrsqrt.pop %v2159
        %v2185 = vmul.f32 %v2184, %v2159
        %v2186 = vmul.f32 %v2185, %v2184
        %v2187 = vmul.f32 0.5, %v2186
        %v2188 = vsub.f32 1.5, %v2187
        %v2189 = vmul.f32 %v2184, %v2188
        %vm2190 = vweird.f32 %v2159
        %vm2191 = vweird.f32 %v2184
        %vm2192 = vmor %vm2190, %vm2191
        %v2193 = vsel %vm2192, %v2184, %v2189
        %v2194 = vrsqrt.pop %v2160
        %v2195 = vmul.f32 %v2194, %v2160
        %v2196 = vmul.f32 %v2195, %v2194
        %v2197 = vmul.f32 0.5, %v2196
        %v2198 = vsub.f32 1.5, %v2197
        %v2199 = vmul.f32 %v2194, %v2198
        %vm2200 = vweird.f32 %v2160
        %vm2201 = vweird.f32 %v2194
        %vm2202 = vmor %vm2200, %vm2201
        %v2203 = vsel %vm2202, %v2194, %v2199
        %v2204 = vrsqrt.pop %v2161
        %v2205 = vmul.f32 %v2204, %v2161
        %v2206 = vmul.f32 %v2205, %v2204
        %v2207 = vmul.f32 0.5, %v2206
        %v2208 = vsub.f32 1.5, %v2207
        %v2209 = vmul.f32 %v2204, %v2208
        %vm2210 = vweird.f32 %v2161
        %vm2211 = vweird.f32 %v2204
        %vm2212 = vmor %vm2210, %vm2211
        %v2213 = vsel %vm2212, %v2204, %v2209
        %v2214 = vrsqrt.pop %v2162
        %v2215 = vmul.f32 %v2214, %v2162
        %v2216 = vmul.f32 %v2215, %v2214
        %v2217 = vmul.f32 0.5, %v2216
        %v2218 = vsub.f32 1.5, %v2217
        %v2219 = vmul.f32 %v2214, %v2218
        %vm2220 = vweird.f32 %v2162
        %vm2221 = vweird.f32 %v2214
        %vm2222 = vmor %vm2220, %vm2221
        %v2223 = vsel %vm2222, %v2214, %v2219
        %v2224 = vrsqrt.pop %v2163
        %v2225 = vmul.f32 %v2224, %v2163
        %v2226 = vmul.f32 %v2225, %v2224
        %v2227 = vmul.f32 0.5, %v2226
        %v2228 = vsub.f32 1.5, %v2227
        %v2229 = vmul.f32 %v2224, %v2228
        %vm2230 = vweird.f32 %v2163
        %vm2231 = vweird.f32 %v2224
        %vm2232 = vmor %vm2230, %vm2231
        %v2233 = vsel %vm2232, %v2224, %v2229
        %v2234 = vrsqrt.pop %v2164
        %v2235 = vmul.f32 %v2234, %v2164
        %v2236 = vmul.f32 %v2235, %v2234
        %v2237 = vmul.f32 0.5, %v2236
        %v2238 = vsub.f32 1.5, %v2237
        %v2239 = vmul.f32 %v2234, %v2238
        %vm2240 = vweird.f32 %v2164
        %vm2241 = vweird.f32 %v2234
        %vm2242 = vmor %vm2240, %vm2241
        %v2243 = vsel %vm2242, %v2234, %v2239
        %v2244 = vrsqrt.pop %v2165
        %v2245 = vmul.f32 %v2244, %v2165
        %v2246 = vmul.f32 %v2245, %v2244
        %v2247 = vmul.f32 0.5, %v2246
        %v2248 = vsub.f32 1.5, %v2247
        %v2249 = vmul.f32 %v2244, %v2248
        %vm2250 = vweird.f32 %v2165
        %vm2251 = vweird.f32 %v2244
        %vm2252 = vmor %vm2250, %vm2251
        %v2253 = vsel %vm2252, %v2244, %v2249
        %v2254 = vrsqrt.pop %v2166
        %v2255 = vmul.f32 %v2254, %v2166
        %v2256 = vmul.f32 %v2255, %v2254
        %v2257 = vmul.f32 0.5, %v2256
        %v2258 = vsub.f32 1.5, %v2257
        %v2259 = vmul.f32 %v2254, %v2258
        %vm2260 = vweird.f32 %v2166
        %vm2261 = vweird.f32 %v2254
        %vm2262 = vmor %vm2260, %vm2261
        %v2263 = vsel %vm2262, %v2254, %v2259
        %v2264 = vrsqrt.pop %v2167
        %v2265 = vmul.f32 %v2264, %v2167
        %v2266 = vmul.f32 %v2265, %v2264
        %v2267 = vmul.f32 0.5, %v2266
        %v2268 = vsub.f32 1.5, %v2267
        %v2269 = vmul.f32 %v2264, %v2268
        %vm2270 = vweird.f32 %v2167
        %vm2271 = vweird.f32 %v2264
        %vm2272 = vmor %vm2270, %vm2271
        %v2273 = vsel %vm2272, %v2264, %v2269
        %v2274 = vrsqrt.pop %v2168
        %v2275 = vmul.f32 %v2274, %v2168
        %v2276 = vmul.f32 %v2275, %v2274
        %v2277 = vmul.f32 0.5, %v2276
        %v2278 = vsub.f32 1.5, %v2277
        %v2279 = vmul.f32 %v2274, %v2278
        %vm2280 = vweird.f32 %v2168
        %vm2281 = vweird.f32 %v2274
        %vm2282 = vmor %vm2280, %vm2281
        %v2283 = vsel %vm2282, %v2274, %v2279
        %v2284 = vrsqrt.pop %v2169
        %v2285 = vmul.f32 %v2284, %v2169
        %v2286 = vmul.f32 %v2285, %v2284
        %v2287 = vmul.f32 0.5, %v2286
        %v2288 = vsub.f32 1.5, %v2287
        %v2289 = vmul.f32 %v2284, %v2288
        %vm2290 = vweird.f32 %v2169
        %vm2291 = vweird.f32 %v2284
        %vm2292 = vmor %vm2290, %vm2291
        %v2293 = vsel %vm2292, %v2284, %v2289
        %v2294 = vrsqrt.pop %v2170
        %v2295 = vmul.f32 %v2294, %v2170
        %v2296 = vmul.f32 %v2295, %v2294
        %v2297 = vmul.f32 0.5, %v2296
        %v2298 = vsub.f32 1.5, %v2297
        %v2299 = vmul.f32 %v2294, %v2298
        %vm2300 = vweird.f32 %v2170
        %vm2301 = vweird.f32 %v2294
        %vm2302 = vmor %vm2300, %vm2301
        %v2303 = vsel %vm2302, %v2294, %v2299
        %v2304 = vrsqrt.pop %v2171
        %v2305 = vmul.f32 %v2304, %v2171
        %v2306 = vmul.f32 %v2305, %v2304
        %v2307 = vmul.f32 0.5, %v2306
        %v2308 = vsub.f32 1.5, %v2307
        %v2309 = vmul.f32 %v2304, %v2308
        %vm2310 = vweird.f32 %v2171
        %vm2311 = vweird.f32 %v2304
        %vm2312 = vmor %vm2310, %vm2311
        %v2313 = vsel %vm2312, %v2304, %v2309
        %v2314 = vrsqrt.pop %v2172
        %v2315 = vmul.f32 %v2314, %v2172
        %v2316 = vmul.f32 %v2315, %v2314
        %v2317 = vmul.f32 0.5, %v2316
        %v2318 = vsub.f32 1.5, %v2317
        %v2319 = vmul.f32 %v2314, %v2318
        %vm2320 = vweird.f32 %v2172
        %vm2321 = vweird.f32 %v2314
        %vm2322 = vmor %vm2320, %vm2321
        %v2323 = vsel %vm2322, %v2314, %v2319
        %v2324 = vrsqrt.pop %v2173
        %v2325 = vmul.f32 %v2324, %v2173
        %v2326 = vmul.f32 %v2325, %v2324
        %v2327 = vmul.f32 0.5, %v2326
        %v2328 = vsub.f32 1.5, %v2327
        %v2329 = vmul.f32 %v2324, %v2328
        %vm2330 = vweird.f32 %v2173
        %vm2331 = vweird.f32 %v2324
        %vm2332 = vmor %vm2330, %vm2331
        %v2333 = vsel %vm2332, %v2324, %v2329
        %v2334 = vmul.f32 %v2078, %v2183
        %v2335 = vmul.f32 %v2079, %v2193
        %v2336 = vmul.f32 %v2080, %v2203
        %v2337 = vmul.f32 %v2081, %v2213
        %v2338 = vmul.f32 %v2082, %v2223
        %v2339 = vmul.f32 %v2083, %v2233
        %v2340 = vmul.f32 %v2084, %v2243
        %v2341 = vmul.f32 %v2085, %v2253
        %v2342 = vmul.f32 %v2086, %v2263
        %v2343 = vmul.f32 %v2087, %v2273
        %v2344 = vmul.f32 %v2088, %v2283
        %v2345 = vmul.f32 %v2089, %v2293
        %v2346 = vmul.f32 %v2090, %v2303
        %v2347 = vmul.f32 %v2091, %v2313
        %v2348 = vmul.f32 %v2092, %v2323
        %v2349 = vmul.f32 %v2093, %v2333
        %v2351 = vperm.slane %v751, 0
        %v2353 = vmul.f32 %v2334, %v2351
        %v2354 = vmul.f32 %v2335, %v2351
        %v2355 = vmul.f32 %v2336, %v2351
        %v2356 = vmul.f32 %v2337, %v2351
        %v2357 = vmul.f32 %v2338, %v2351
        %v2358 = vmul.f32 %v2339, %v2351
        %v2359 = vmul.f32 %v2340, %v2351
        %v2360 = vmul.f32 %v2341, %v2351
        %v2361 = vmul.f32 %v2342, %v2351
        %v2362 = vmul.f32 %v2343, %v2351
        %v2363 = vmul.f32 %v2344, %v2351
        %v2364 = vmul.f32 %v2345, %v2351
        %v2365 = vmul.f32 %v2346, %v2351
        %v2366 = vmul.f32 %v2347, %v2351
        %v2367 = vmul.f32 %v2348, %v2351
        %v2368 = vmul.f32 %v2349, %v2351
        %v2370 = vperm.slane %v752, 0
        %v2372 = vadd.f32 %v2353, %v2370
        %v2373 = vadd.f32 %v2354, %v2370
        %v2374 = vadd.f32 %v2355, %v2370
        %v2375 = vadd.f32 %v2356, %v2370
        %v2376 = vadd.f32 %v2357, %v2370
        %v2377 = vadd.f32 %v2358, %v2370
        %v2378 = vadd.f32 %v2359, %v2370
        %v2379 = vadd.f32 %v2360, %v2370
        %v2380 = vadd.f32 %v2361, %v2370
        %v2381 = vadd.f32 %v2362, %v2370
        %v2382 = vadd.f32 %v2363, %v2370
        %v2383 = vadd.f32 %v2364, %v2370
        %v2384 = vadd.f32 %v2365, %v2370
        %v2385 = vadd.f32 %v2366, %v2370
        %v2386 = vadd.f32 %v2367, %v2370
        %v2387 = vadd.f32 %v2368, %v2370
        %v2388 = vpack.c.bf16 %v2373, %v2372
        %v2389 = vpack.c.bf16 %v2375, %v2374
        %v2390 = vpack.c.bf16 %v2377, %v2376
        %v2391 = vpack.c.bf16 %v2379, %v2378
        %v2392 = vpack.c.bf16 %v2381, %v2380
        %v2393 = vpack.c.bf16 %v2383, %v2382
        %v2394 = vpack.c.bf16 %v2385, %v2384
        %v2395 = vpack.c.bf16 %v2387, %v2386
        %v2397 = vperm.slane %v769, 0
        %v2398 = vperm.slane %v769, 1
        %v2417 = vunpack.c.l.b16 %v753
        %v2418 = vunpack.c.h.b16 %v753
        %v2419 = vunpack.c.l.b16 %v754
        %v2420 = vunpack.c.h.b16 %v754
        %v2421 = vunpack.c.l.b16 %v755
        %v2422 = vunpack.c.h.b16 %v755
        %v2423 = vunpack.c.l.b16 %v756
        %v2424 = vunpack.c.h.b16 %v756
        %v2425 = vunpack.c.l.b16 %v757
        %v2426 = vunpack.c.h.b16 %v757
        %v2427 = vunpack.c.l.b16 %v758
        %v2428 = vunpack.c.h.b16 %v758
        %v2429 = vunpack.c.l.b16 %v759
        %v2430 = vunpack.c.h.b16 %v759
        %v2431 = vunpack.c.l.b16 %v760
        %v2432 = vunpack.c.h.b16 %v760
        %v2433 = vunpack.c.l.b16 %v761
        %v2434 = vunpack.c.h.b16 %v761
        %v2435 = vunpack.c.l.b16 %v762
        %v2436 = vunpack.c.h.b16 %v762
        %v2437 = vunpack.c.l.b16 %v763
        %v2438 = vunpack.c.h.b16 %v763
        %v2439 = vunpack.c.l.b16 %v764
        %v2440 = vunpack.c.h.b16 %v764
        %v2441 = vunpack.c.l.b16 %v765
        %v2442 = vunpack.c.h.b16 %v765
        %v2443 = vunpack.c.l.b16 %v766
        %v2444 = vunpack.c.h.b16 %v766
        %v2445 = vunpack.c.l.b16 %v767
        %v2446 = vunpack.c.h.b16 %v767
        %v2447 = vunpack.c.l.b16 %v768
        %v2448 = vunpack.c.h.b16 %v768
        %v2449 = vpack.c.b16 %v2419, %v2417
        %v2450 = vpack.c.b16 %v2420, %v2418
        %v2451 = vpack.c.b16 %v2423, %v2421
        %v2452 = vpack.c.b16 %v2424, %v2422
        %v2453 = vpack.c.b16 %v2427, %v2425
        %v2454 = vpack.c.b16 %v2428, %v2426
        %v2455 = vpack.c.b16 %v2431, %v2429
        %v2456 = vpack.c.b16 %v2432, %v2430
        %v2457 = vpack.c.b16 %v2435, %v2433
        %v2458 = vpack.c.b16 %v2436, %v2434
        %v2459 = vpack.c.b16 %v2439, %v2437
        %v2460 = vpack.c.b16 %v2440, %v2438
        %v2461 = vpack.c.b16 %v2443, %v2441
        %v2462 = vpack.c.b16 %v2444, %v2442
        %v2463 = vpack.c.b16 %v2447, %v2445
        %v2464 = vpack.c.b16 %v2448, %v2446
        %2481 = vmatpush.bf16.msra.mxu0 %v2463
        %2482 = vmatpush.bf16.msra.mxu0 %v2461
        %2483 = vmatpush.bf16.msra.mxu0 %v2459
        %2484 = vmatpush.bf16.msra.mxu0 %v2457
        %2485 = vmatpush.bf16.msra.mxu0 %v2455
        %2486 = vmatpush.bf16.msra.mxu0 %v2453
        %2487 = vmatpush.bf16.msra.mxu0 %v2451
        %2488 = vmatpush.bf16.msra.mxu0 %v2449
        %2489 = vmatmul.bf16.gmra.mxu0 %v2388
        %v2490 = vpop.f32.mrf.mxu0
        %v2491 = vadd.f32 %v2397, %v2490
        %v2492 = vpop.f32.mrf.mxu0
        %v2493 = vadd.f32 %v2397, %v2492
        %2494 = vmatmul.bf16.gmra.mxu0 %v2389
        %v2495 = vpop.f32.mrf.mxu0
        %v2496 = vadd.f32 %v2397, %v2495
        %v2497 = vpop.f32.mrf.mxu0
        %v2498 = vadd.f32 %v2397, %v2497
        %2499 = vmatmul.bf16.gmra.mxu0 %v2390
        %v2500 = vpop.f32.mrf.mxu0
        %v2501 = vadd.f32 %v2397, %v2500
        %v2502 = vpop.f32.mrf.mxu0
        %v2503 = vadd.f32 %v2397, %v2502
        %2504 = vmatmul.bf16.gmra.mxu0 %v2391
        %v2505 = vpop.f32.mrf.mxu0
        %v2506 = vadd.f32 %v2397, %v2505
        %v2507 = vpop.f32.mrf.mxu0
        %v2508 = vadd.f32 %v2397, %v2507
        %2509 = vmatmul.bf16.gmra.mxu0 %v2392
        %v2510 = vpop.f32.mrf.mxu0
        %v2511 = vadd.f32 %v2397, %v2510
        %v2512 = vpop.f32.mrf.mxu0
        %v2513 = vadd.f32 %v2397, %v2512
        %2514 = vmatmul.bf16.gmra.mxu0 %v2393
        %v2515 = vpop.f32.mrf.mxu0
        %v2516 = vadd.f32 %v2397, %v2515
        %v2517 = vpop.f32.mrf.mxu0
        %v2518 = vadd.f32 %v2397, %v2517
        %2519 = vmatmul.bf16.gmra.mxu0 %v2394
        %v2520 = vpop.f32.mrf.mxu0
        %v2521 = vadd.f32 %v2397, %v2520
        %v2522 = vpop.f32.mrf.mxu0
        %v2523 = vadd.f32 %v2397, %v2522
        %2524 = vmatmul.bf16.gmra.mxu0 %v2395
        %v2525 = vpop.f32.mrf.mxu0
        %v2526 = vadd.f32 %v2397, %v2525
        %v2527 = vpop.f32.mrf.mxu0
        %v2528 = vadd.f32 %v2397, %v2527
        %2529 = vdwg.mxu0
        %2530 = vmatpush.bf16.msra.mxu0 %v2464
        %2531 = vmatpush.bf16.msra.mxu0 %v2462
        %2532 = vmatpush.bf16.msra.mxu0 %v2460
        %2533 = vmatpush.bf16.msra.mxu0 %v2458
        %2534 = vmatpush.bf16.msra.mxu0 %v2456
        %2535 = vmatpush.bf16.msra.mxu0 %v2454
        %2536 = vmatpush.bf16.msra.mxu0 %v2452
        %2537 = vmatpush.bf16.msra.mxu0 %v2450
        %2538 = vmatmul.bf16.gmra.mxu0 %v2388
        %v2539 = vpop.f32.mrf.mxu0
        %v2540 = vadd.f32 %v2398, %v2539
        %v2541 = vpop.f32.mrf.mxu0
        %v2542 = vadd.f32 %v2398, %v2541
        %2543 = vmatmul.bf16.gmra.mxu0 %v2389
        %v2544 = vpop.f32.mrf.mxu0
        %v2545 = vadd.f32 %v2398, %v2544
        %v2546 = vpop.f32.mrf.mxu0
        %v2547 = vadd.f32 %v2398, %v2546
        %2548 = vmatmul.bf16.gmra.mxu0 %v2390
        %v2549 = vpop.f32.mrf.mxu0
        %v2550 = vadd.f32 %v2398, %v2549
        %v2551 = vpop.f32.mrf.mxu0
        %v2552 = vadd.f32 %v2398, %v2551
        %2553 = vmatmul.bf16.gmra.mxu0 %v2391
        %v2554 = vpop.f32.mrf.mxu0
        %v2555 = vadd.f32 %v2398, %v2554
        %v2556 = vpop.f32.mrf.mxu0
        %v2557 = vadd.f32 %v2398, %v2556
        %2558 = vmatmul.bf16.gmra.mxu0 %v2392
        %v2559 = vpop.f32.mrf.mxu0
        %v2560 = vadd.f32 %v2398, %v2559
        %v2561 = vpop.f32.mrf.mxu0
        %v2562 = vadd.f32 %v2398, %v2561
        %2563 = vmatmul.bf16.gmra.mxu0 %v2393
        %v2564 = vpop.f32.mrf.mxu0
        %v2565 = vadd.f32 %v2398, %v2564
        %v2566 = vpop.f32.mrf.mxu0
        %v2567 = vadd.f32 %v2398, %v2566
        %2568 = vmatmul.bf16.gmra.mxu0 %v2394
        %v2569 = vpop.f32.mrf.mxu0
        %v2570 = vadd.f32 %v2398, %v2569
        %v2571 = vpop.f32.mrf.mxu0
        %v2572 = vadd.f32 %v2398, %v2571
        %2573 = vmatmul.bf16.gmra.mxu0 %v2395
        %v2574 = vpop.f32.mrf.mxu0
        %v2575 = vadd.f32 %v2398, %v2574
        %v2576 = vpop.f32.mrf.mxu0
        %v2577 = vadd.f32 %v2398, %v2576
        %2578 = vdwg.mxu0
        %v2579 = vmul.f32 %v2491, 0.5
        %v2580 = vmul.f32 %v2540, 0.5
        %v2581 = vmul.f32 %v2493, 0.5
        %v2582 = vmul.f32 %v2542, 0.5
        %v2583 = vmul.f32 %v2496, 0.5
        %v2584 = vmul.f32 %v2545, 0.5
        %v2585 = vmul.f32 %v2498, 0.5
        %v2586 = vmul.f32 %v2547, 0.5
        %v2587 = vmul.f32 %v2501, 0.5
        %v2588 = vmul.f32 %v2550, 0.5
        %v2589 = vmul.f32 %v2503, 0.5
        %v2590 = vmul.f32 %v2552, 0.5
        %v2591 = vmul.f32 %v2506, 0.5
        %v2592 = vmul.f32 %v2555, 0.5
        %v2593 = vmul.f32 %v2508, 0.5
        %v2594 = vmul.f32 %v2557, 0.5
        %v2595 = vmul.f32 %v2511, 0.5
        %v2596 = vmul.f32 %v2560, 0.5
        %v2597 = vmul.f32 %v2513, 0.5
        %v2598 = vmul.f32 %v2562, 0.5
        %v2599 = vmul.f32 %v2516, 0.5
        %v2600 = vmul.f32 %v2565, 0.5
        %v2601 = vmul.f32 %v2518, 0.5
        %v2602 = vmul.f32 %v2567, 0.5
        %v2603 = vmul.f32 %v2521, 0.5
        %v2604 = vmul.f32 %v2570, 0.5
        %v2605 = vmul.f32 %v2523, 0.5
        %v2606 = vmul.f32 %v2572, 0.5
        %v2607 = vmul.f32 %v2526, 0.5
        %v2608 = vmul.f32 %v2575, 0.5
        %v2609 = vmul.f32 %v2528, 0.5
        %v2610 = vmul.f32 %v2577, 0.5
        %v2611 = vmul.f32 %v2491, 0.044715
        %v2612 = vmul.f32 %v2540, 0.044715
        %v2613 = vmul.f32 %v2493, 0.044715
        %v2614 = vmul.f32 %v2542, 0.044715
        %v2615 = vmul.f32 %v2496, 0.044715
        %v2616 = vmul.f32 %v2545, 0.044715
        %v2617 = vmul.f32 %v2498, 0.044715
        %v2618 = vmul.f32 %v2547, 0.044715
        %v2619 = vmul.f32 %v2501, 0.044715
        %v2620 = vmul.f32 %v2550, 0.044715
        %v2621 = vmul.f32 %v2503, 0.044715
        %v2622 = vmul.f32 %v2552, 0.044715
        %v2623 = vmul.f32 %v2506, 0.044715
        %v2624 = vmul.f32 %v2555, 0.044715
        %v2625 = vmul.f32 %v2508, 0.044715
        %v2626 = vmul.f32 %v2557, 0.044715
        %v2627 = vmul.f32 %v2511, 0.044715
        %v2628 = vmul.f32 %v2560, 0.044715
        %v2629 = vmul.f32 %v2513, 0.044715
        %v2630 = vmul.f32 %v2562, 0.044715
        %v2631 = vmul.f32 %v2516, 0.044715
        %v2632 = vmul.f32 %v2565, 0.044715
        %v2633 = vmul.f32 %v2518, 0.044715
        %v2634 = vmul.f32 %v2567, 0.044715
        %v2635 = vmul.f32 %v2521, 0.044715
        %v2636 = vmul.f32 %v2570, 0.044715
        %v2637 = vmul.f32 %v2523, 0.044715
        %v2638 = vmul.f32 %v2572, 0.044715
        %v2639 = vmul.f32 %v2526, 0.044715
        %v2640 = vmul.f32 %v2575, 0.044715
        %v2641 = vmul.f32 %v2528, 0.044715
        %v2642 = vmul.f32 %v2577, 0.044715
        %v2643 = vmul.f32 %v2611, %v2491
        %v2644 = vmul.f32 %v2612, %v2540
        %v2645 = vmul.f32 %v2613, %v2493
        %v2646 = vmul.f32 %v2614, %v2542
        %v2647 = vmul.f32 %v2615, %v2496
        %v2648 = vmul.f32 %v2616, %v2545
        %v2649 = vmul.f32 %v2617, %v2498
        %v2650 = vmul.f32 %v2618, %v2547
        %v2651 = vmul.f32 %v2619, %v2501
        %v2652 = vmul.f32 %v2620, %v2550
        %v2653 = vmul.f32 %v2621, %v2503
        %v2654 = vmul.f32 %v2622, %v2552
        %v2655 = vmul.f32 %v2623, %v2506
        %v2656 = vmul.f32 %v2624, %v2555
        %v2657 = vmul.f32 %v2625, %v2508
        %v2658 = vmul.f32 %v2626, %v2557
        %v2659 = vmul.f32 %v2627, %v2511
        %v2660 = vmul.f32 %v2628, %v2560
        %v2661 = vmul.f32 %v2629, %v2513
        %v2662 = vmul.f32 %v2630, %v2562
        %v2663 = vmul.f32 %v2631, %v2516
        %v2664 = vmul.f32 %v2632, %v2565
        %v2665 = vmul.f32 %v2633, %v2518
        %v2666 = vmul.f32 %v2634, %v2567
        %v2667 = vmul.f32 %v2635, %v2521
        %v2668 = vmul.f32 %v2636, %v2570
        %v2669 = vmul.f32 %v2637, %v2523
        %v2670 = vmul.f32 %v2638, %v2572
        %v2671 = vmul.f32 %v2639, %v2526
        %v2672 = vmul.f32 %v2640, %v2575
        %v2673 = vmul.f32 %v2641, %v2528
        %v2674 = vmul.f32 %v2642, %v2577
        %v2675 = vmul.f32 %v2643, %v2491
        %v2676 = vmul.f32 %v2644, %v2540
        %v2677 = vmul.f32 %v2645, %v2493
        %v2678 = vmul.f32 %v2646, %v2542
        %v2679 = vmul.f32 %v2647, %v2496
        %v2680 = vmul.f32 %v2648, %v2545
        %v2681 = vmul.f32 %v2649, %v2498
        %v2682 = vmul.f32 %v2650, %v2547
        %v2683 = vmul.f32 %v2651, %v2501
        %v2684 = vmul.f32 %v2652, %v2550
        %v2685 = vmul.f32 %v2653, %v2503
        %v2686 = vmul.f32 %v2654, %v2552
        %v2687 = vmul.f32 %v2655, %v2506
        %v2688 = vmul.f32 %v2656, %v2555
        %v2689 = vmul.f32 %v2657, %v2508
        %v2690 = vmul.f32 %v2658, %v2557
        %v2691 = vmul.f32 %v2659, %v2511
        %v2692 = vmul.f32 %v2660, %v2560
        %v2693 = vmul.f32 %v2661, %v2513
        %v2694 = vmul.f32 %v2662, %v2562
        %v2695 = vmul.f32 %v2663, %v2516
        %v2696 = vmul.f32 %v2664, %v2565
        %v2697 = vmul.f32 %v2665, %v2518
        %v2698 = vmul.f32 %v2666, %v2567
        %v2699 = vmul.f32 %v2667, %v2521
        %v2700 = vmul.f32 %v2668, %v2570
        %v2701 = vmul.f32 %v2669, %v2523
        %v2702 = vmul.f32 %v2670, %v2572
        %v2703 = vmul.f32 %v2671, %v2526
        %v2704 = vmul.f32 %v2672, %v2575
        %v2705 = vmul.f32 %v2673, %v2528
        %v2706 = vmul.f32 %v2674, %v2577
        %v2707 = vadd.f32 %v2491, %v2675
        %v2708 = vadd.f32 %v2540, %v2676
        %v2709 = vadd.f32 %v2493, %v2677
        %v2710 = vadd.f32 %v2542, %v2678
        %v2711 = vadd.f32 %v2496, %v2679
        %v2712 = vadd.f32 %v2545, %v2680
        %v2713 = vadd.f32 %v2498, %v2681
        %v2714 = vadd.f32 %v2547, %v2682
        %v2715 = vadd.f32 %v2501, %v2683
        %v2716 = vadd.f32 %v2550, %v2684
        %v2717 = vadd.f32 %v2503, %v2685
        %v2718 = vadd.f32 %v2552, %v2686
        %v2719 = vadd.f32 %v2506, %v2687
        %v2720 = vadd.f32 %v2555, %v2688
        %v2721 = vadd.f32 %v2508, %v2689
        %v2722 = vadd.f32 %v2557, %v2690
        %v2723 = vadd.f32 %v2511, %v2691
        %v2724 = vadd.f32 %v2560, %v2692
        %v2725 = vadd.f32 %v2513, %v2693
        %v2726 = vadd.f32 %v2562, %v2694
        %v2727 = vadd.f32 %v2516, %v2695
        %v2728 = vadd.f32 %v2565, %v2696
        %v2729 = vadd.f32 %v2518, %v2697
        %v2730 = vadd.f32 %v2567, %v2698
        %v2731 = vadd.f32 %v2521, %v2699
        %v2732 = vadd.f32 %v2570, %v2700
        %v2733 = vadd.f32 %v2523, %v2701
        %v2734 = vadd.f32 %v2572, %v2702
        %v2735 = vadd.f32 %v2526, %v2703
        %v2736 = vadd.f32 %v2575, %v2704
        %v2737 = vadd.f32 %v2528, %v2705
        %v2738 = vadd.f32 %v2577, %v2706
        %v2739 = vmul.f32 %v2707, 0.7978846
        %v2740 = vmul.f32 %v2708, 0.7978846
        %v2741 = vmul.f32 %v2709, 0.7978846
        %v2742 = vmul.f32 %v2710, 0.7978846
        %v2743 = vmul.f32 %v2711, 0.7978846
        %v2744 = vmul.f32 %v2712, 0.7978846
        %v2745 = vmul.f32 %v2713, 0.7978846
        %v2746 = vmul.f32 %v2714, 0.7978846
        %v2747 = vmul.f32 %v2715, 0.7978846
        %v2748 = vmul.f32 %v2716, 0.7978846
        %v2749 = vmul.f32 %v2717, 0.7978846
        %v2750 = vmul.f32 %v2718, 0.7978846
        %v2751 = vmul.f32 %v2719, 0.7978846
        %v2752 = vmul.f32 %v2720, 0.7978846
        %v2753 = vmul.f32 %v2721, 0.7978846
        %v2754 = vmul.f32 %v2722, 0.7978846
        %v2755 = vmul.f32 %v2723, 0.7978846
        %v2756 = vmul.f32 %v2724, 0.7978846
        %v2757 = vmul.f32 %v2725, 0.7978846
        %v2758 = vmul.f32 %v2726, 0.7978846
        %v2759 = vmul.f32 %v2727, 0.7978846
        %v2760 = vmul.f32 %v2728, 0.7978846
        %v2761 = vmul.f32 %v2729, 0.7978846
        %v2762 = vmul.f32 %v2730, 0.7978846
        %v2763 = vmul.f32 %v2731, 0.7978846
        %v2764 = vmul.f32 %v2732, 0.7978846
        %v2765 = vmul.f32 %v2733, 0.7978846
        %v2766 = vmul.f32 %v2734, 0.7978846
        %v2767 = vmul.f32 %v2735, 0.7978846
        %v2768 = vmul.f32 %v2736, 0.7978846
        %v2769 = vmul.f32 %v2737, 0.7978846
        %v2770 = vmul.f32 %v2738, 0.7978846
        %v2771 = vtanh.pop %v2739
        %v2772 = vtanh.pop %v2740
        %v2773 = vtanh.pop %v2741
        %v2774 = vtanh.pop %v2742
        %v2775 = vtanh.pop %v2743
        %v2776 = vtanh.pop %v2744
        %v2777 = vtanh.pop %v2745
        %v2778 = vtanh.pop %v2746
        %v2779 = vtanh.pop %v2747
        %v2780 = vtanh.pop %v2748
        %v2781 = vtanh.pop %v2749
        %v2782 = vtanh.pop %v2750
        %v2783 = vtanh.pop %v2751
        %v2784 = vtanh.pop %v2752
        %v2785 = vtanh.pop %v2753
        %v2786 = vtanh.pop %v2754
        %v2787 = vtanh.pop %v2755
        %v2788 = vtanh.pop %v2756
        %v2789 = vtanh.pop %v2757
        %v2790 = vtanh.pop %v2758
        %v2791 = vtanh.pop %v2759
        %v2792 = vtanh.pop %v2760
        %v2793 = vtanh.pop %v2761
        %v2794 = vtanh.pop %v2762
        %v2795 = vtanh.pop %v2763
        %v2796 = vtanh.pop %v2764
        %v2797 = vtanh.pop %v2765
        %v2798 = vtanh.pop %v2766
        %v2799 = vtanh.pop %v2767
        %v2800 = vtanh.pop %v2768
        %v2801 = vtanh.pop %v2769
        %v2802 = vtanh.pop %v2770
        %v2803 = vadd.f32 %v2771, 1.0
        %v2804 = vadd.f32 %v2772, 1.0
        %v2805 = vadd.f32 %v2773, 1.0
        %v2806 = vadd.f32 %v2774, 1.0
        %v2807 = vadd.f32 %v2775, 1.0
        %v2808 = vadd.f32 %v2776, 1.0
        %v2809 = vadd.f32 %v2777, 1.0
        %v2810 = vadd.f32 %v2778, 1.0
        %v2811 = vadd.f32 %v2779, 1.0
        %v2812 = vadd.f32 %v2780, 1.0
        %v2813 = vadd.f32 %v2781, 1.0
        %v2814 = vadd.f32 %v2782, 1.0
        %v2815 = vadd.f32 %v2783, 1.0
        %v2816 = vadd.f32 %v2784, 1.0
        %v2817 = vadd.f32 %v2785, 1.0
        %v2818 = vadd.f32 %v2786, 1.0
        %v2819 = vadd.f32 %v2787, 1.0
        %v2820 = vadd.f32 %v2788, 1.0
        %v2821 = vadd.f32 %v2789, 1.0
        %v2822 = vadd.f32 %v2790, 1.0
        %v2823 = vadd.f32 %v2791, 1.0
        %v2824 = vadd.f32 %v2792, 1.0
        %v2825 = vadd.f32 %v2793, 1.0
        %v2826 = vadd.f32 %v2794, 1.0
        %v2827 = vadd.f32 %v2795, 1.0
        %v2828 = vadd.f32 %v2796, 1.0
        %v2829 = vadd.f32 %v2797, 1.0
        %v2830 = vadd.f32 %v2798, 1.0
        %v2831 = vadd.f32 %v2799, 1.0
        %v2832 = vadd.f32 %v2800, 1.0
        %v2833 = vadd.f32 %v2801, 1.0
        %v2834 = vadd.f32 %v2802, 1.0
        %v2835 = vmul.f32 %v2579, %v2803
        %v2836 = vmul.f32 %v2580, %v2804
        %v2837 = vmul.f32 %v2581, %v2805
        %v2838 = vmul.f32 %v2582, %v2806
        %v2839 = vmul.f32 %v2583, %v2807
        %v2840 = vmul.f32 %v2584, %v2808
        %v2841 = vmul.f32 %v2585, %v2809
        %v2842 = vmul.f32 %v2586, %v2810
        %v2843 = vmul.f32 %v2587, %v2811
        %v2844 = vmul.f32 %v2588, %v2812
        %v2845 = vmul.f32 %v2589, %v2813
        %v2846 = vmul.f32 %v2590, %v2814
        %v2847 = vmul.f32 %v2591, %v2815
        %v2848 = vmul.f32 %v2592, %v2816
        %v2849 = vmul.f32 %v2593, %v2817
        %v2850 = vmul.f32 %v2594, %v2818
        %v2851 = vmul.f32 %v2595, %v2819
        %v2852 = vmul.f32 %v2596, %v2820
        %v2853 = vmul.f32 %v2597, %v2821
        %v2854 = vmul.f32 %v2598, %v2822
        %v2855 = vmul.f32 %v2599, %v2823
        %v2856 = vmul.f32 %v2600, %v2824
        %v2857 = vmul.f32 %v2601, %v2825
        %v2858 = vmul.f32 %v2602, %v2826
        %v2859 = vmul.f32 %v2603, %v2827
        %v2860 = vmul.f32 %v2604, %v2828
        %v2861 = vmul.f32 %v2605, %v2829
        %v2862 = vmul.f32 %v2606, %v2830
        %v2863 = vmul.f32 %v2607, %v2831
        %v2864 = vmul.f32 %v2608, %v2832
        %v2865 = vmul.f32 %v2609, %v2833
        %v2866 = vmul.f32 %v2610, %v2834
        %v2867 = vpack.c.bf16 %v2837, %v2835
        %v2868 = vpack.c.bf16 %v2838, %v2836
        %v2869 = vpack.c.bf16 %v2841, %v2839
        %v2870 = vpack.c.bf16 %v2842, %v2840
        %v2871 = vpack.c.bf16 %v2845, %v2843
        %v2872 = vpack.c.bf16 %v2846, %v2844
        %v2873 = vpack.c.bf16 %v2849, %v2847
        %v2874 = vpack.c.bf16 %v2850, %v2848
        %v2875 = vpack.c.bf16 %v2853, %v2851
        %v2876 = vpack.c.bf16 %v2854, %v2852
        %v2877 = vpack.c.bf16 %v2857, %v2855
        %v2878 = vpack.c.bf16 %v2858, %v2856
        %v2879 = vpack.c.bf16 %v2861, %v2859
        %v2880 = vpack.c.bf16 %v2862, %v2860
        %v2881 = vpack.c.bf16 %v2865, %v2863
        %v2882 = vpack.c.bf16 %v2866, %v2864
        %v2884 = vperm.slane %v802, 0
        %v2918 = vunpack.c.l.b16 %v770
        %v2919 = vunpack.c.l.b16 %v771
        %v2920 = vunpack.c.l.b16 %v772
        %v2921 = vunpack.c.l.b16 %v773
        %v2922 = vunpack.c.l.b16 %v774
        %v2923 = vunpack.c.l.b16 %v775
        %v2924 = vunpack.c.l.b16 %v776
        %v2925 = vunpack.c.l.b16 %v777
        %v2926 = vunpack.c.l.b16 %v778
        %v2927 = vunpack.c.l.b16 %v779
        %v2928 = vunpack.c.l.b16 %v780
        %v2929 = vunpack.c.l.b16 %v781
        %v2930 = vunpack.c.l.b16 %v782
        %v2931 = vunpack.c.l.b16 %v783
        %v2932 = vunpack.c.l.b16 %v784
        %v2933 = vunpack.c.l.b16 %v785
        %v2934 = vunpack.c.l.b16 %v786
        %v2935 = vunpack.c.l.b16 %v787
        %v2936 = vunpack.c.l.b16 %v788
        %v2937 = vunpack.c.l.b16 %v789
        %v2938 = vunpack.c.l.b16 %v790
        %v2939 = vunpack.c.l.b16 %v791
        %v2940 = vunpack.c.l.b16 %v792
        %v2941 = vunpack.c.l.b16 %v793
        %v2942 = vunpack.c.l.b16 %v794
        %v2943 = vunpack.c.l.b16 %v795
        %v2944 = vunpack.c.l.b16 %v796
        %v2945 = vunpack.c.l.b16 %v797
        %v2946 = vunpack.c.l.b16 %v798
        %v2947 = vunpack.c.l.b16 %v799
        %v2948 = vunpack.c.l.b16 %v800
        %v2949 = vunpack.c.l.b16 %v801
        %v2950 = vpack.c.b16 %v2919, %v2918
        %v2951 = vpack.c.b16 %v2921, %v2920
        %v2952 = vpack.c.b16 %v2923, %v2922
        %v2953 = vpack.c.b16 %v2925, %v2924
        %v2954 = vpack.c.b16 %v2927, %v2926
        %v2955 = vpack.c.b16 %v2929, %v2928
        %v2956 = vpack.c.b16 %v2931, %v2930
        %v2957 = vpack.c.b16 %v2933, %v2932
        %v2958 = vpack.c.b16 %v2935, %v2934
        %v2959 = vpack.c.b16 %v2937, %v2936
        %v2960 = vpack.c.b16 %v2939, %v2938
        %v2961 = vpack.c.b16 %v2941, %v2940
        %v2962 = vpack.c.b16 %v2943, %v2942
        %v2963 = vpack.c.b16 %v2945, %v2944
        %v2964 = vpack.c.b16 %v2947, %v2946
        %v2965 = vpack.c.b16 %v2949, %v2948
        %2982 = vmatpush.bf16.msra.mxu0 %v2957
        %2983 = vmatpush.bf16.msra.mxu0 %v2956
        %2984 = vmatpush.bf16.msra.mxu0 %v2955
        %2985 = vmatpush.bf16.msra.mxu0 %v2954
        %2986 = vmatpush.bf16.msra.mxu0 %v2953
        %2987 = vmatpush.bf16.msra.mxu0 %v2952
        %2988 = vmatpush.bf16.msra.mxu0 %v2951
        %2989 = vmatpush.bf16.msra.mxu0 %v2950
        %2990 = vmatmul.bf16.gmra.mxu0 %v2867
        %v2991 = vpop.f32.mrf.mxu0
        %v2992 = vadd.f32 %v2884, %v2991
        %v2993 = vpop.f32.mrf.mxu0
        %v2994 = vadd.f32 %v2884, %v2993
        %2995 = vmatmul.bf16.gmra.mxu0 %v2869
        %v2996 = vpop.f32.mrf.mxu0
        %v2997 = vadd.f32 %v2884, %v2996
        %v2998 = vpop.f32.mrf.mxu0
        %v2999 = vadd.f32 %v2884, %v2998
        %3000 = vmatmul.bf16.gmra.mxu0 %v2871
        %v3001 = vpop.f32.mrf.mxu0
        %v3002 = vadd.f32 %v2884, %v3001
        %v3003 = vpop.f32.mrf.mxu0
        %v3004 = vadd.f32 %v2884, %v3003
        %3005 = vmatmul.bf16.gmra.mxu0 %v2873
        %v3006 = vpop.f32.mrf.mxu0
        %v3007 = vadd.f32 %v2884, %v3006
        %v3008 = vpop.f32.mrf.mxu0
        %v3009 = vadd.f32 %v2884, %v3008
        %3010 = vmatmul.bf16.gmra.mxu0 %v2875
        %v3011 = vpop.f32.mrf.mxu0
        %v3012 = vadd.f32 %v2884, %v3011
        %v3013 = vpop.f32.mrf.mxu0
        %v3014 = vadd.f32 %v2884, %v3013
        %3015 = vmatmul.bf16.gmra.mxu0 %v2877
        %v3016 = vpop.f32.mrf.mxu0
        %v3017 = vadd.f32 %v2884, %v3016
        %v3018 = vpop.f32.mrf.mxu0
        %v3019 = vadd.f32 %v2884, %v3018
        %3020 = vmatmul.bf16.gmra.mxu0 %v2879
        %v3021 = vpop.f32.mrf.mxu0
        %v3022 = vadd.f32 %v2884, %v3021
        %v3023 = vpop.f32.mrf.mxu0
        %v3024 = vadd.f32 %v2884, %v3023
        %3025 = vmatmul.bf16.gmra.mxu0 %v2881
        %v3026 = vpop.f32.mrf.mxu0
        %v3027 = vadd.f32 %v2884, %v3026
        %v3028 = vpop.f32.mrf.mxu0
        %v3029 = vadd.f32 %v2884, %v3028
        %3030 = vdwg.mxu0
        %3031 = vmatpush.bf16.msra.mxu0 %v2965
        %3032 = vmatpush.bf16.msra.mxu0 %v2964
        %3033 = vmatpush.bf16.msra.mxu0 %v2963
        %3034 = vmatpush.bf16.msra.mxu0 %v2962
        %3035 = vmatpush.bf16.msra.mxu0 %v2961
        %3036 = vmatpush.bf16.msra.mxu0 %v2960
        %3037 = vmatpush.bf16.msra.mxu0 %v2959
        %3038 = vmatpush.bf16.msra.mxu0 %v2958
        %3039 = vmatmul.bf16.gmra.mxu0 %v2868
        %v3040 = vpop.f32.mrf.mxu0
        %v3041 = vadd.f32 %v2992, %v3040
        %v3042 = vpop.f32.mrf.mxu0
        %v3043 = vadd.f32 %v2994, %v3042
        %3044 = vmatmul.bf16.gmra.mxu0 %v2870
        %v3045 = vpop.f32.mrf.mxu0
        %v3046 = vadd.f32 %v2997, %v3045
        %v3047 = vpop.f32.mrf.mxu0
        %v3048 = vadd.f32 %v2999, %v3047
        %3049 = vmatmul.bf16.gmra.mxu0 %v2872
        %v3050 = vpop.f32.mrf.mxu0
        %v3051 = vadd.f32 %v3002, %v3050
        %v3052 = vpop.f32.mrf.mxu0
        %v3053 = vadd.f32 %v3004, %v3052
        %3054 = vmatmul.bf16.gmra.mxu0 %v2874
        %v3055 = vpop.f32.mrf.mxu0
        %v3056 = vadd.f32 %v3007, %v3055
        %v3057 = vpop.f32.mrf.mxu0
        %v3058 = vadd.f32 %v3009, %v3057
        %3059 = vmatmul.bf16.gmra.mxu0 %v2876
        %v3060 = vpop.f32.mrf.mxu0
        %v3061 = vadd.f32 %v3012, %v3060
        %v3062 = vpop.f32.mrf.mxu0
        %v3063 = vadd.f32 %v3014, %v3062
        %3064 = vmatmul.bf16.gmra.mxu0 %v2878
        %v3065 = vpop.f32.mrf.mxu0
        %v3066 = vadd.f32 %v3017, %v3065
        %v3067 = vpop.f32.mrf.mxu0
        %v3068 = vadd.f32 %v3019, %v3067
        %3069 = vmatmul.bf16.gmra.mxu0 %v2880
        %v3070 = vpop.f32.mrf.mxu0
        %v3071 = vadd.f32 %v3022, %v3070
        %v3072 = vpop.f32.mrf.mxu0
        %v3073 = vadd.f32 %v3024, %v3072
        %3074 = vmatmul.bf16.gmra.mxu0 %v2882
        %v3075 = vpop.f32.mrf.mxu0
        %v3076 = vadd.f32 %v3027, %v3075
        %v3077 = vpop.f32.mrf.mxu0
        %v3078 = vadd.f32 %v3029, %v3077
        %3079 = vdwg.mxu0
        %v3080 = vadd.f32 %v2372, %v3041
        %v3081 = vadd.f32 %v2373, %v3043
        %v3082 = vadd.f32 %v2374, %v3046
        %v3083 = vadd.f32 %v2375, %v3048
        %v3084 = vadd.f32 %v2376, %v3051
        %v3085 = vadd.f32 %v2377, %v3053
        %v3086 = vadd.f32 %v2378, %v3056
        %v3087 = vadd.f32 %v2379, %v3058
        %v3088 = vadd.f32 %v2380, %v3061
        %v3089 = vadd.f32 %v2381, %v3063
        %v3090 = vadd.f32 %v2382, %v3066
        %v3091 = vadd.f32 %v2383, %v3068
        %v3092 = vadd.f32 %v2384, %v3071
        %v3093 = vadd.f32 %v2385, %v3073
        %v3094 = vadd.f32 %v2386, %v3076
        %v3095 = vadd.f32 %v2387, %v3078
        %3096 = vadd.xlane.f32.xlu0 %v3080
        %v3097 = vpop.xlane.xlu0 %3096
        %3098 = vadd.xlane.f32.xlu0 %v3081
        %v3099 = vpop.xlane.xlu0 %3098
        %3100 = vadd.xlane.f32.xlu0 %v3082
        %v3101 = vpop.xlane.xlu0 %3100
        %3102 = vadd.xlane.f32.xlu0 %v3083
        %v3103 = vpop.xlane.xlu0 %3102
        %3104 = vadd.xlane.f32.xlu0 %v3084
        %v3105 = vpop.xlane.xlu0 %3104
        %3106 = vadd.xlane.f32.xlu0 %v3085
        %v3107 = vpop.xlane.xlu0 %3106
        %3108 = vadd.xlane.f32.xlu0 %v3086
        %v3109 = vpop.xlane.xlu0 %3108
        %3110 = vadd.xlane.f32.xlu0 %v3087
        %v3111 = vpop.xlane.xlu0 %3110
        %3112 = vadd.xlane.f32.xlu0 %v3088
        %v3113 = vpop.xlane.xlu0 %3112
        %3114 = vadd.xlane.f32.xlu0 %v3089
        %v3115 = vpop.xlane.xlu0 %3114
        %3116 = vadd.xlane.f32.xlu0 %v3090
        %v3117 = vpop.xlane.xlu0 %3116
        %3118 = vadd.xlane.f32.xlu0 %v3091
        %v3119 = vpop.xlane.xlu0 %3118
        %3120 = vadd.xlane.f32.xlu0 %v3092
        %v3121 = vpop.xlane.xlu0 %3120
        %3122 = vadd.xlane.f32.xlu0 %v3093
        %v3123 = vpop.xlane.xlu0 %3122
        %3124 = vadd.xlane.f32.xlu0 %v3094
        %v3125 = vpop.xlane.xlu0 %3124
        %3126 = vadd.xlane.f32.xlu0 %v3095
        %v3127 = vpop.xlane.xlu0 %3126
        %v3128 = vmul.f32 %v3097, %v2061
        %v3129 = vmul.f32 %v3099, %v2061
        %v3130 = vmul.f32 %v3101, %v2061
        %v3131 = vmul.f32 %v3103, %v2061
        %v3132 = vmul.f32 %v3105, %v2061
        %v3133 = vmul.f32 %v3107, %v2061
        %v3134 = vmul.f32 %v3109, %v2061
        %v3135 = vmul.f32 %v3111, %v2061
        %v3136 = vmul.f32 %v3113, %v2061
        %v3137 = vmul.f32 %v3115, %v2061
        %v3138 = vmul.f32 %v3117, %v2061
        %v3139 = vmul.f32 %v3119, %v2061
        %v3140 = vmul.f32 %v3121, %v2061
        %v3141 = vmul.f32 %v3123, %v2061
        %v3142 = vmul.f32 %v3125, %v2061
        %v3143 = vmul.f32 %v3127, %v2061
        %v3144 = vsub.f32 %v3080, %v3128
        %v3145 = vsub.f32 %v3081, %v3129
        %v3146 = vsub.f32 %v3082, %v3130
        %v3147 = vsub.f32 %v3083, %v3131
        %v3148 = vsub.f32 %v3084, %v3132
        %v3149 = vsub.f32 %v3085, %v3133
        %v3150 = vsub.f32 %v3086, %v3134
        %v3151 = vsub.f32 %v3087, %v3135
        %v3152 = vsub.f32 %v3088, %v3136
        %v3153 = vsub.f32 %v3089, %v3137
        %v3154 = vsub.f32 %v3090, %v3138
        %v3155 = vsub.f32 %v3091, %v3139
        %v3156 = vsub.f32 %v3092, %v3140
        %v3157 = vsub.f32 %v3093, %v3141
        %v3158 = vsub.f32 %v3094, %v3142
        %v3159 = vsub.f32 %v3095, %v3143
        %v3160 = vmul.f32 %v3144, %v3144
        %v3161 = vmul.f32 %v3145, %v3145
        %v3162 = vmul.f32 %v3146, %v3146
        %v3163 = vmul.f32 %v3147, %v3147
        %v3164 = vmul.f32 %v3148, %v3148
        %v3165 = vmul.f32 %v3149, %v3149
        %v3166 = vmul.f32 %v3150, %v3150
        %v3167 = vmul.f32 %v3151, %v3151
        %v3168 = vmul.f32 %v3152, %v3152
        %v3169 = vmul.f32 %v3153, %v3153
        %v3170 = vmul.f32 %v3154, %v3154
        %v3171 = vmul.f32 %v3155, %v3155
        %v3172 = vmul.f32 %v3156, %v3156
        %v3173 = vmul.f32 %v3157, %v3157
        %v3174 = vmul.f32 %v3158, %v3158
        %v3175 = vmul.f32 %v3159, %v3159
        %3176 = vadd.xlane.f32.xlu0 %v3160
        %v3177 = vpop.xlane.xlu0 %3176
        %3178 = vadd.xlane.f32.xlu0 %v3161
        %v3179 = vpop.xlane.xlu0 %3178
        %3180 = vadd.xlane.f32.xlu0 %v3162
        %v3181 = vpop.xlane.xlu0 %3180
        %3182 = vadd.xlane.f32.xlu0 %v3163
        %v3183 = vpop.xlane.xlu0 %3182
        %3184 = vadd.xlane.f32.xlu0 %v3164
        %v3185 = vpop.xlane.xlu0 %3184
        %3186 = vadd.xlane.f32.xlu0 %v3165
        %v3187 = vpop.xlane.xlu0 %3186
        %3188 = vadd.xlane.f32.xlu0 %v3166
        %v3189 = vpop.xlane.xlu0 %3188
        %3190 = vadd.xlane.f32.xlu0 %v3167
        %v3191 = vpop.xlane.xlu0 %3190
        %3192 = vadd.xlane.f32.xlu0 %v3168
        %v3193 = vpop.xlane.xlu0 %3192
        %3194 = vadd.xlane.f32.xlu0 %v3169
        %v3195 = vpop.xlane.xlu0 %3194
        %3196 = vadd.xlane.f32.xlu0 %v3170
        %v3197 = vpop.xlane.xlu0 %3196
        %3198 = vadd.xlane.f32.xlu0 %v3171
        %v3199 = vpop.xlane.xlu0 %3198
        %3200 = vadd.xlane.f32.xlu0 %v3172
        %v3201 = vpop.xlane.xlu0 %3200
        %3202 = vadd.xlane.f32.xlu0 %v3173
        %v3203 = vpop.xlane.xlu0 %3202
        %3204 = vadd.xlane.f32.xlu0 %v3174
        %v3205 = vpop.xlane.xlu0 %3204
        %3206 = vadd.xlane.f32.xlu0 %v3175
        %v3207 = vpop.xlane.xlu0 %3206
        %v3208 = vmul.f32 %v3177, %v2061
        %v3209 = vmul.f32 %v3179, %v2061
        %v3210 = vmul.f32 %v3181, %v2061
        %v3211 = vmul.f32 %v3183, %v2061
        %v3212 = vmul.f32 %v3185, %v2061
        %v3213 = vmul.f32 %v3187, %v2061
        %v3214 = vmul.f32 %v3189, %v2061
        %v3215 = vmul.f32 %v3191, %v2061
        %v3216 = vmul.f32 %v3193, %v2061
        %v3217 = vmul.f32 %v3195, %v2061
        %v3218 = vmul.f32 %v3197, %v2061
        %v3219 = vmul.f32 %v3199, %v2061
        %v3220 = vmul.f32 %v3201, %v2061
        %v3221 = vmul.f32 %v3203, %v2061
        %v3222 = vmul.f32 %v3205, %v2061
        %v3223 = vmul.f32 %v3207, %v2061
        %v3224 = vadd.f32 %v3208, 1e-12
        %v3225 = vadd.f32 %v3209, 1e-12
        %v3226 = vadd.f32 %v3210, 1e-12
        %v3227 = vadd.f32 %v3211, 1e-12
        %v3228 = vadd.f32 %v3212, 1e-12
        %v3229 = vadd.f32 %v3213, 1e-12
        %v3230 = vadd.f32 %v3214, 1e-12
        %v3231 = vadd.f32 %v3215, 1e-12
        %v3232 = vadd.f32 %v3216, 1e-12
        %v3233 = vadd.f32 %v3217, 1e-12
        %v3234 = vadd.f32 %v3218, 1e-12
        %v3235 = vadd.f32 %v3219, 1e-12
        %v3236 = vadd.f32 %v3220, 1e-12
        %v3237 = vadd.f32 %v3221, 1e-12
        %v3238 = vadd.f32 %v3222, 1e-12
        %v3239 = vadd.f32 %v3223, 1e-12
        %v3240 = vrsqrt.pop %v3224
        %v3241 = vmul.f32 %v3240, %v3224
        %v3242 = vmul.f32 %v3241, %v3240
        %v3243 = vmul.f32 0.5, %v3242
        %v3244 = vsub.f32 1.5, %v3243
        %v3245 = vmul.f32 %v3240, %v3244
        %vm3246 = vweird.f32 %v3224
        %vm3247 = vweird.f32 %v3240
        %vm3248 = vmor %vm3246, %vm3247
        %v3249 = vsel %vm3248, %v3240, %v3245
        %v3250 = vrsqrt.pop %v3225
        %v3251 = vmul.f32 %v3250, %v3225
        %v3252 = vmul.f32 %v3251, %v3250
        %v3253 = vmul.f32 0.5, %v3252
        %v3254 = vsub.f32 1.5, %v3253
        %v3255 = vmul.f32 %v3250, %v3254
        %vm3256 = vweird.f32 %v3225
        %vm3257 = vweird.f32 %v3250
        %vm3258 = vmor %vm3256, %vm3257
        %v3259 = vsel %vm3258, %v3250, %v3255
        %v3260 = vrsqrt.pop %v3226
        %v3261 = vmul.f32 %v3260, %v3226
        %v3262 = vmul.f32 %v3261, %v3260
        %v3263 = vmul.f32 0.5, %v3262
        %v3264 = vsub.f32 1.5, %v3263
        %v3265 = vmul.f32 %v3260, %v3264
        %vm3266 = vweird.f32 %v3226
        %vm3267 = vweird.f32 %v3260
        %vm3268 = vmor %vm3266, %vm3267
        %v3269 = vsel %vm3268, %v3260, %v3265
        %v3270 = vrsqrt.pop %v3227
        %v3271 = vmul.f32 %v3270, %v3227
        %v3272 = vmul.f32 %v3271, %v3270
        %v3273 = vmul.f32 0.5, %v3272
        %v3274 = vsub.f32 1.5, %v3273
        %v3275 = vmul.f32 %v3270, %v3274
        %vm3276 = vweird.f32 %v3227
        %vm3277 = vweird.f32 %v3270
        %vm3278 = vmor %vm3276, %vm3277
        %v3279 = vsel %vm3278, %v3270, %v3275
        %v3280 = vrsqrt.pop %v3228
        %v3281 = vmul.f32 %v3280, %v3228
        %v3282 = vmul.f32 %v3281, %v3280
        %v3283 = vmul.f32 0.5, %v3282
        %v3284 = vsub.f32 1.5, %v3283
        %v3285 = vmul.f32 %v3280, %v3284
        %vm3286 = vweird.f32 %v3228
        %vm3287 = vweird.f32 %v3280
        %vm3288 = vmor %vm3286, %vm3287
        %v3289 = vsel %vm3288, %v3280, %v3285
        %v3290 = vrsqrt.pop %v3229
        %v3291 = vmul.f32 %v3290, %v3229
        %v3292 = vmul.f32 %v3291, %v3290
        %v3293 = vmul.f32 0.5, %v3292
        %v3294 = vsub.f32 1.5, %v3293
        %v3295 = vmul.f32 %v3290, %v3294
        %vm3296 = vweird.f32 %v3229
        %vm3297 = vweird.f32 %v3290
        %vm3298 = vmor %vm3296, %vm3297
        %v3299 = vsel %vm3298, %v3290, %v3295
        %v3300 = vrsqrt.pop %v3230
        %v3301 = vmul.f32 %v3300, %v3230
        %v3302 = vmul.f32 %v3301, %v3300
        %v3303 = vmul.f32 0.5, %v3302
        %v3304 = vsub.f32 1.5, %v3303
        %v3305 = vmul.f32 %v3300, %v3304
        %vm3306 = vweird.f32 %v3230
        %vm3307 = vweird.f32 %v3300
        %vm3308 = vmor %vm3306, %vm3307
        %v3309 = vsel %vm3308, %v3300, %v3305
        %v3310 = vrsqrt.pop %v3231
        %v3311 = vmul.f32 %v3310, %v3231
        %v3312 = vmul.f32 %v3311, %v3310
        %v3313 = vmul.f32 0.5, %v3312
        %v3314 = vsub.f32 1.5, %v3313
        %v3315 = vmul.f32 %v3310, %v3314
        %vm3316 = vweird.f32 %v3231
        %vm3317 = vweird.f32 %v3310
        %vm3318 = vmor %vm3316, %vm3317
        %v3319 = vsel %vm3318, %v3310, %v3315
        %v3320 = vrsqrt.pop %v3232
        %v3321 = vmul.f32 %v3320, %v3232
        %v3322 = vmul.f32 %v3321, %v3320
        %v3323 = vmul.f32 0.5, %v3322
        %v3324 = vsub.f32 1.5, %v3323
        %v3325 = vmul.f32 %v3320, %v3324
        %vm3326 = vweird.f32 %v3232
        %vm3327 = vweird.f32 %v3320
        %vm3328 = vmor %vm3326, %vm3327
        %v3329 = vsel %vm3328, %v3320, %v3325
        %v3330 = vrsqrt.pop %v3233
        %v3331 = vmul.f32 %v3330, %v3233
        %v3332 = vmul.f32 %v3331, %v3330
        %v3333 = vmul.f32 0.5, %v3332
        %v3334 = vsub.f32 1.5, %v3333
        %v3335 = vmul.f32 %v3330, %v3334
        %vm3336 = vweird.f32 %v3233
        %vm3337 = vweird.f32 %v3330
        %vm3338 = vmor %vm3336, %vm3337
        %v3339 = vsel %vm3338, %v3330, %v3335
        %v3340 = vrsqrt.pop %v3234
        %v3341 = vmul.f32 %v3340, %v3234
        %v3342 = vmul.f32 %v3341, %v3340
        %v3343 = vmul.f32 0.5, %v3342
        %v3344 = vsub.f32 1.5, %v3343
        %v3345 = vmul.f32 %v3340, %v3344
        %vm3346 = vweird.f32 %v3234
        %vm3347 = vweird.f32 %v3340
        %vm3348 = vmor %vm3346, %vm3347
        %v3349 = vsel %vm3348, %v3340, %v3345
        %v3350 = vrsqrt.pop %v3235
        %v3351 = vmul.f32 %v3350, %v3235
        %v3352 = vmul.f32 %v3351, %v3350
        %v3353 = vmul.f32 0.5, %v3352
        %v3354 = vsub.f32 1.5, %v3353
        %v3355 = vmul.f32 %v3350, %v3354
        %vm3356 = vweird.f32 %v3235
        %vm3357 = vweird.f32 %v3350
        %vm3358 = vmor %vm3356, %vm3357
        %v3359 = vsel %vm3358, %v3350, %v3355
        %v3360 = vrsqrt.pop %v3236
        %v3361 = vmul.f32 %v3360, %v3236
        %v3362 = vmul.f32 %v3361, %v3360
        %v3363 = vmul.f32 0.5, %v3362
        %v3364 = vsub.f32 1.5, %v3363
        %v3365 = vmul.f32 %v3360, %v3364
        %vm3366 = vweird.f32 %v3236
        %vm3367 = vweird.f32 %v3360
        %vm3368 = vmor %vm3366, %vm3367
        %v3369 = vsel %vm3368, %v3360, %v3365
        %v3370 = vrsqrt.pop %v3237
        %v3371 = vmul.f32 %v3370, %v3237
        %v3372 = vmul.f32 %v3371, %v3370
        %v3373 = vmul.f32 0.5, %v3372
        %v3374 = vsub.f32 1.5, %v3373
        %v3375 = vmul.f32 %v3370, %v3374
        %vm3376 = vweird.f32 %v3237
        %vm3377 = vweird.f32 %v3370
        %vm3378 = vmor %vm3376, %vm3377
        %v3379 = vsel %vm3378, %v3370, %v3375
        %v3380 = vrsqrt.pop %v3238
        %v3381 = vmul.f32 %v3380, %v3238
        %v3382 = vmul.f32 %v3381, %v3380
        %v3383 = vmul.f32 0.5, %v3382
        %v3384 = vsub.f32 1.5, %v3383
        %v3385 = vmul.f32 %v3380, %v3384
        %vm3386 = vweird.f32 %v3238
        %vm3387 = vweird.f32 %v3380
        %vm3388 = vmor %vm3386, %vm3387
        %v3389 = vsel %vm3388, %v3380, %v3385
        %v3390 = vrsqrt.pop %v3239
        %v3391 = vmul.f32 %v3390, %v3239
        %v3392 = vmul.f32 %v3391, %v3390
        %v3393 = vmul.f32 0.5, %v3392
        %v3394 = vsub.f32 1.5, %v3393
        %v3395 = vmul.f32 %v3390, %v3394
        %vm3396 = vweird.f32 %v3239
        %vm3397 = vweird.f32 %v3390
        %vm3398 = vmor %vm3396, %vm3397
        %v3399 = vsel %vm3398, %v3390, %v3395
        %v3400 = vmul.f32 %v3144, %v3249
        %v3401 = vmul.f32 %v3145, %v3259
        %v3402 = vmul.f32 %v3146, %v3269
        %v3403 = vmul.f32 %v3147, %v3279
        %v3404 = vmul.f32 %v3148, %v3289
        %v3405 = vmul.f32 %v3149, %v3299
        %v3406 = vmul.f32 %v3150, %v3309
        %v3407 = vmul.f32 %v3151, %v3319
        %v3408 = vmul.f32 %v3152, %v3329
        %v3409 = vmul.f32 %v3153, %v3339
        %v3410 = vmul.f32 %v3154, %v3349
        %v3411 = vmul.f32 %v3155, %v3359
        %v3412 = vmul.f32 %v3156, %v3369
        %v3413 = vmul.f32 %v3157, %v3379
        %v3414 = vmul.f32 %v3158, %v3389
        %v3415 = vmul.f32 %v3159, %v3399
        %v3417 = vperm.slane %v803, 0
        %v3419 = vmul.f32 %v3400, %v3417
        %v3420 = vmul.f32 %v3401, %v3417
        %v3421 = vmul.f32 %v3402, %v3417
        %v3422 = vmul.f32 %v3403, %v3417
        %v3423 = vmul.f32 %v3404, %v3417
        %v3424 = vmul.f32 %v3405, %v3417
        %v3425 = vmul.f32 %v3406, %v3417
        %v3426 = vmul.f32 %v3407, %v3417
        %v3427 = vmul.f32 %v3408, %v3417
        %v3428 = vmul.f32 %v3409, %v3417
        %v3429 = vmul.f32 %v3410, %v3417
        %v3430 = vmul.f32 %v3411, %v3417
        %v3431 = vmul.f32 %v3412, %v3417
        %v3432 = vmul.f32 %v3413, %v3417
        %v3433 = vmul.f32 %v3414, %v3417
        %v3434 = vmul.f32 %v3415, %v3417
        %v3436 = vperm.slane %v804, 0
        %v3438 = vadd.f32 %v3419, %v3436
        %v3439 = vadd.f32 %v3420, %v3436
        %v3440 = vadd.f32 %v3421, %v3436
        %v3441 = vadd.f32 %v3422, %v3436
        %v3442 = vadd.f32 %v3423, %v3436
        %v3443 = vadd.f32 %v3424, %v3436
        %v3444 = vadd.f32 %v3425, %v3436
        %v3445 = vadd.f32 %v3426, %v3436
        %v3446 = vadd.f32 %v3427, %v3436
        %v3447 = vadd.f32 %v3428, %v3436
        %v3448 = vadd.f32 %v3429, %v3436
        %v3449 = vadd.f32 %v3430, %v3436
        %v3450 = vadd.f32 %v3431, %v3436
        %v3451 = vadd.f32 %v3432, %v3436
        %v3452 = vadd.f32 %v3433, %v3436
        %v3453 = vadd.f32 %v3434, %v3436
        %v3454 = vrcp.pop %v699
        %v3455 = vmul.f32 %v699, %v3454
        %v3456 = vsub.f32 1.0, %v3455
        %v3457 = vmul.f32 %v3454, %v3456
        %v3458 = vadd.f32 %v3454, %v3457
        %vm3459 = vweird.f32 %v699
        %vm3460 = vweird.f32 %v3454
        %vm3461 = vmor %vm3459, %vm3460
        %v3462 = vsel %vm3461, %v3454, %v3458
        %v3463 = vand.u32 2147483647, %v699
        %vm3464 = vcmp.eq.f32.partialorder %v3463, 8.507059e+37
        %v3465 = vand.u32 %v699, 2147483648
        %v3466 = vor.u32 1.1754944e-38, %v3465
        %v3467 = vsel %vm3464, %v3466, %v3462
        %v3468 = vmul.f32 %v699, %v3467
        %v3469 = vrcp.pop %v700
        %v3470 = vmul.f32 %v700, %v3469
        %v3471 = vsub.f32 1.0, %v3470
        %v3472 = vmul.f32 %v3469, %v3471
        %v3473 = vadd.f32 %v3469, %v3472
        %vm3474 = vweird.f32 %v700
        %vm3475 = vweird.f32 %v3469
        %vm3476 = vmor %vm3474, %vm3475
        %v3477 = vsel %vm3476, %v3469, %v3473
        %v3478 = vand.u32 2147483647, %v700
        %vm3479 = vcmp.eq.f32.partialorder %v3478, 8.507059e+37
        %v3480 = vand.u32 %v700, 2147483648
        %v3481 = vor.u32 1.1754944e-38, %v3480
        %v3482 = vsel %vm3479, %v3481, %v3477
        %v3483 = vmul.f32 %v700, %v3482
        %3485 = vset.pattern.permute.xlu0 0
        %3486 = vperm.xlu0 %3485, %v3468
        %v3487 = vpop.permute.xlu0 %3486
        %3489 = vset.pattern.permute.xlu0 0
        %3490 = vperm.xlu0 %3489, %v3483
        %v3491 = vpop.permute.xlu0 %3490
        %v3492 = vrot.slane %v3487, 7
        %v3493 = vrot.slane %v3487, 1
        %v3494 = vrot.slane %v3487, 2
        %v3495 = vrot.slane %v3487, 3
        %v3496 = vrot.slane %v3487, 4
        %v3497 = vrot.slane %v3487, 5
        %v3498 = vrot.slane %v3487, 6
        %v3499 = vrot.slane %v3491, 7
        %v3500 = vrot.slane %v3491, 1
        %v3501 = vrot.slane %v3491, 2
        %v3502 = vrot.slane %v3491, 3
        %v3503 = vrot.slane %v3491, 4
        %v3504 = vrot.slane %v3491, 5
        %v3505 = vrot.slane %v3491, 6
        %v3522 = vmul.f32 %v3438, %v3492
        %v3523 = vmul.f32 %v3439, %v3487
        %v3524 = vmul.f32 %v3440, %v3493
        %v3525 = vmul.f32 %v3441, %v3494
        %v3526 = vmul.f32 %v3442, %v3495
        %v3527 = vmul.f32 %v3443, %v3496
        %v3528 = vmul.f32 %v3444, %v3497
        %v3529 = vmul.f32 %v3445, %v3498
        %v3530 = vmul.f32 %v3446, %v3499
        %v3531 = vmul.f32 %v3447, %v3491
        %v3532 = vmul.f32 %v3448, %v3500
        %v3533 = vmul.f32 %v3449, %v3501
        %v3534 = vmul.f32 %v3450, %v3502
        %v3535 = vmul.f32 %v3451, %v3503
        %v3536 = vmul.f32 %v3452, %v3504
        %v3537 = vmul.f32 %v3453, %v3505
        %v3539 = vperm.slane %v805, 0
        %v3541 = vmul.f32 %v3522, %v3539
        %v3542 = vmul.f32 %v3523, %v3539
        %v3543 = vmul.f32 %v3524, %v3539
        %v3544 = vmul.f32 %v3525, %v3539
        %v3545 = vmul.f32 %v3526, %v3539
        %v3546 = vmul.f32 %v3527, %v3539
        %v3547 = vmul.f32 %v3528, %v3539
        %v3548 = vmul.f32 %v3529, %v3539
        %v3549 = vmul.f32 %v3530, %v3539
        %v3550 = vmul.f32 %v3531, %v3539
        %v3551 = vmul.f32 %v3532, %v3539
        %v3552 = vmul.f32 %v3533, %v3539
        %v3553 = vmul.f32 %v3534, %v3539
        %v3554 = vmul.f32 %v3535, %v3539
        %v3555 = vmul.f32 %v3536, %v3539
        %v3556 = vmul.f32 %v3537, %v3539
        %v3573 = vrot.slane %v3542, 7
        %vm3574 = vcmask 1042434
        %v3575 = vsel %vm3574, %v3573, %v3541
        %v3576 = vrot.slane %v3543, 6
        %vm3577 = vcmask 1043459
        %v3578 = vsel %vm3577, %v3576, %v3575
        %v3579 = vrot.slane %v3544, 5
        %vm3580 = vcmask 1044484
        %v3581 = vsel %vm3580, %v3579, %v3578
        %v3582 = vrot.slane %v3545, 4
        %vm3583 = vcmask 1045509
        %v3584 = vsel %vm3583, %v3582, %v3581
        %v3585 = vrot.slane %v3546, 3
        %vm3586 = vcmask 1046534
        %v3587 = vsel %vm3586, %v3585, %v3584
        %v3588 = vrot.slane %v3547, 2
        %vm3589 = vcmask 1047559
        %v3590 = vsel %vm3589, %v3588, %v3587
        %v3591 = vrot.slane %v3548, 1
        %vm3592 = vcmask 1041409
        %v3593 = vsel %vm3592, %v3549, %v3591
        %v3594 = vrot.slane %v3550, 7
        %v3595 = vsel %vm3574, %v3594, %v3593
        %v3596 = vrot.slane %v3551, 6
        %v3597 = vsel %vm3577, %v3596, %v3595
        %v3598 = vrot.slane %v3552, 5
        %v3599 = vsel %vm3580, %v3598, %v3597
        %v3600 = vrot.slane %v3553, 4
        %v3601 = vsel %vm3583, %v3600, %v3599
        %v3602 = vrot.slane %v3554, 3
        %v3603 = vsel %vm3586, %v3602, %v3601
        %v3604 = vrot.slane %v3555, 2
        %v3605 = vsel %vm3589, %v3604, %v3603
        %v3606 = vrot.slane %v3556, 1
        %vm3610 = vcmask 1047553
        %v3611 = vsel %vm3610, %v3590, 0.0
        %3612 = vadd.xlane.f32.xlu0 %v3611
        %v3613 = vpop.xlane.xlu0 %3612
        %3614 = vadd.xlane.f32.xlu0 %v3605
        %v3615 = vpop.xlane.xlu0 %3614
        %vm3616 = vcmask 1040384
        %v3617 = vsel %vm3616, %v3606, 0.0
        %3618 = vadd.xlane.f32.xlu0 %v3617
        %v3619 = vpop.xlane.xlu0 %3618
        %v3621 = vperm.slane %v806, 0
        %v3623 = vadd.f32 %v3613, %v3621
        %v3624 = vadd.f32 %v3615, %v3621
        %v3625 = vadd.f32 %v3619, %v3621
        %vm3626 = vcmask 7169
        %3627 = vst.msk [vmem:[%s664 - $0x1] sm:$0xfe] %vm3626, %v3623
        %vm3628 = vcmask 7168
        %3629 = vst.msk [vmem:[%s664 + $0x7] sm:$0xff] %vm3628, %v3624
        %vm3630 = vcmask 0
        %3631 = vst.msk [vmem:[%s664 + $0xf] sm:$0x1] %vm3630, %v3625
        %s3632 = smul.u32 2, %s35
        %p3633 = scmp.lt.s32.totalorder %s3632, 3
        %s3634 = scalar_select %p3633, %s3632, 3
        %s3635 = smul.addr %s3634, 8
        %s3636 = scalar_lea.vmem %s17, %s3635
        // Predicated region
        $region105: #{tpu_custom_call.1} parent=87 // pred_check
          %p3637 = pneg %p425
        $region106: #{tpu_custom_call.1} parent=87 // pred_check_branch
          %3639 = sbr.rel (%p3637) target = $region108
        $region107: #{tpu_custom_call.1} parent=87 // pred_region
          %s3640 = smul.u32 2, %s35
        $region108: #{tpu_custom_call.1} parent=87 // pred_fallthru
          _
      $region88: #{tpu_custom_call.1} parent=5 // pred_fallthru
        _
      %p3641 = scmp.le.s32.totalorder 2, %s30
      // Predicated region
      $region109: #{tpu_custom_call.1} parent=5 // pred_check
        %p3642 = pneg %p3641
      $region110: #{tpu_custom_call.1} parent=5 // pred_check_branch
        %3644 = sbr.rel (%p3642) target = $region112
      $region111: #{tpu_custom_call.1} parent=5 // pred_region
        %s3645 = ssub.s32 %s30, 2
        // Predicated region
        $region113: #{tpu_custom_call.1} parent=111 // pred_check
          %p3646 = pneg %p431
        $region114: #{tpu_custom_call.1} parent=111 // pred_check_branch
          %3648 = sbr.rel (%p3646) target = $region116
        $region115: #{tpu_custom_call.1} parent=111 // pred_region
          %s3649 = smul.u32 2, %s36
          %p3650 = scmp.lt.s32.totalorder %s3649, 3
          %s3651 = scalar_select %p3650, %s3649, 3
          %s3652 = smul.addr %s3651, 8
          %s3653 = scalar_lea.vmem %s17, %s3652
        $region116: #{tpu_custom_call.1} parent=111 // pred_fallthru
          _
      $region112: #{tpu_custom_call.1} parent=5 // pred_fallthru
        _
    $region6: #{tpu_custom_call.1} parent=1 // loop_footer
      %s34 = sadd.s32 1, %s30
    $region7: #{tpu_custom_call.1} parent=1 // loop_footer_branch
      %29 = sbr.rel target = $region3
    $region8: #{tpu_custom_call.1} parent=1 // loop_exit
      _
    %3654 = vsyncpa [#allocation4], 1
    %s3655 = scalar_lea.sflag [#allocation4], 1
    %3656 = vsyncpa %s3655, 1
    %3657 = vsyncpa [#allocation6], 1
    %3658 = vsyncpa [#allocation9], 1

</llo_original>
